<compile_context>
chip_gen: v7x
topology: tpu7x:2x2x1
jax: 0.10.0
libtpu: 0.0.40
codegen_flags: <defaults>
</compile_context>

<pallas_src>
import jax
import jax.numpy as jnp
from jax.experimental import pallas as pl
from jax.experimental.pallas import tpu as pltpu

LANE = 128


def _round_up(x, m):
    return (x + m - 1) // m * m


# ----------------------------- Pallas kernel -------------------------------- #

def downsample_kernel(x_ref, top_ref, bot_ref, w_ref, scale_ref, bias_ref,
                      o_ref, xs_ref):
    """Fused conv3x3(pad=1) + folded-BN + ReLU + maxpool2 for one row tile.

    x_ref    : (1, RH, W, Cip)   bf16  main conv rows of this tile
    top_ref  : (1, 1,  W, Cip)   bf16  row above the tile (clamped; zeroed at t==0)
    bot_ref  : (1, 1,  W, Cip)   bf16  row below the tile (clamped; zeroed at t==last)
    w_ref    : (9, Cip, Cop)     bf16  conv weights, index 3*dh + dw
    scale_ref: (1, Cop)          f32   folded BN scale (0 in padded lanes)
    bias_ref : (1, Cop)          f32   folded BN bias  (0 in padded lanes)
    o_ref    : (1, TH, Wo, Cop)  bf16  pooled output rows (TH = RH // 2)
    xs_ref   : (RH+2, W+2, Cip)  bf16  VMEM scratch: zero-padded input tile
    """
    _, RH, W, Cip = x_ref.shape
    _, TH, Wo, Cop = o_ref.shape

    t = pl.program_id(1)
    nt = pl.num_programs(1)
    dt = x_ref.dtype

    # --- assemble the zero-padded tile in the VMEM scratch (no concatenates) ---
    # border columns are never overwritten below -> zero them every step
    zcol = jnp.zeros((RH + 2, 1, Cip), dt)
    xs_ref[:, pl.ds(0, 1), :] = zcol
    xs_ref[:, pl.ds(W + 1, 1), :] = zcol
    # main rows
    xs_ref[pl.ds(1, RH), pl.ds(1, W), :] = x_ref[0]
    # halo rows, zeroed at the image border
    tmask = jnp.where(t > 0, 1.0, 0.0).astype(dt)
    bmask = jnp.where(t < nt - 1, 1.0, 0.0).astype(dt)
    xs_ref[pl.ds(0, 1), pl.ds(1, W), :] = top_ref[0] * tmask
    xs_ref[pl.ds(RH + 1, 1), pl.ds(1, W), :] = bot_ref[0] * bmask

    # --- conv3x3 as 9 accumulating MXU matmuls (K = Cip, N = Cop, 128-aligned) ---
    acc = jnp.dot(xs_ref[pl.ds(0, RH), pl.ds(0, W), :].reshape(RH * W, Cip),
                  w_ref[0], preferred_element_type=jnp.float32)
    for k in range(1, 9):
        dh, dw = k // 3, k % 3
        tap = xs_ref[pl.ds(dh, RH), pl.ds(dw, W), :].reshape(RH * W, Cip)
        acc = acc + jnp.dot(tap, w_ref[k], preferred_element_type=jnp.float32)

    # --- folded BatchNorm affine + ReLU (f32) ---
    y = jnp.maximum(acc * scale_ref[...] + bias_ref[...], 0.0)   # (RH*W, Cop)

    # --- 2x2 max-pool, stride 2 ---
    # row pool: split the leading (non-sublane) axis -> cheap
    y = y.reshape(TH, 2, W, Cop)
    y = jnp.max(y, axis=1)                                       # (TH, W, Cop)
    # width pool: merge column pairs into lanes, max of two 128-aligned slices
    y = y.reshape(TH, Wo, 2 * Cop)
    y = jnp.maximum(y[:, :, :Cop], y[:, :, Cop:])                # (TH, Wo, Cop)

    o_ref[0] = y.astype(o_ref.dtype)


# --------------------------- tile-size selection ----------------------------- #

def _vmem_budget():
    """(per-step working-set budget, vmem_limit_bytes) derived from this chip."""
    try:
        cap = int(pltpu.get_tpu_info().vmem_capacity_bytes)
    except Exception:
        cap = 64 * 1024 * 1024          # conservative (v7x per-TC VMEM)
    budget = cap // 4                   # v5e/v6e: 32 MiB, v7x: 16 MiB
    limit = int(min((3 * cap) // 4, 96 * 1024 * 1024))
    return budget, limit


def _pick_row_tile(H, W, Cip, Cop, max_row_tile=None):
    """Largest even divisor of H whose per-step working set fits the VMEM budget."""
    budget, _ = _vmem_budget()
    fixed = (2 * 9 * Cip * Cop * 2      # double-buffered weights
             + 2 * 2 * Cop * 4          # scale / bias
             + 2 * 2 * W * Cip * 2      # double-buffered halo rows
             + 2 * (W + 2) * Cip * 2)   # scratch halo rows
    per_row = (2 * W * Cip * 2          # double-buffered input rows
               + (W + 2) * Cip * 2      # scratch row
               + 2 * W * Cip * 2        # live tap operands
               + 2 * W * Cop * 4        # f32 accumulator + epilogue temps
               + W * Cop * 2)           # double-buffered output (per conv row)
    avail = max(budget - fixed, 2 * per_row)
    rh_cap = max(2, avail // per_row)
    if max_row_tile is not None:
        rh_cap = min(rh_cap, max_row_tile)
    best = 2
    for rh in range(2, H + 1, 2):
        if H % rh == 0 and rh <= rh_cap:
            best = rh
    return best


# ------------------------------- layer wrapper ------------------------------- #

def downsample_pallas(x_nhwc, w_hwio, scale, bias, *, out_dtype=jnp.bfloat16,
                      max_row_tile=None):
    """One DownSample layer.

    Input : NHWC, channels may already be lane-padded (extra channels == 0).
    Output: NHWC, spatially halved, channels padded to a multiple of 128, bf16.
    """
    N, H, W, Cx = x_nhwc.shape
    Cin, Cout = w_hwio.shape[2], w_hwio.shape[3]
    assert Cx >= Cin
    assert H % 2 == 0 and W % 2 == 0, "MaxPool2d(2) path requires even H and W"
    Ho, Wo = H // 2, W // 2

    Cip = _round_up(Cx, LANE)           # lane-dense input channels
    Cop = _round_up(Cout, LANE)         # lane-dense output channels

    x = x_nhwc.astype(jnp.bfloat16)
    if Cip != Cx:
        x = jnp.pad(x, ((0, 0), (0, 0), (0, 0), (0, Cip - Cx)))

    w_p = jnp.pad(w_hwio.astype(jnp.float32),
                  ((0, 0), (0, 0), (0, Cip - Cin), (0, Cop - Cout)))
    w_p = w_p.reshape(9, Cip, Cop).astype(jnp.bfloat16)           # (3*dh+dw, ci, co)
    scale_p = jnp.pad(scale.astype(jnp.float32), (0, Cop - Cout)).reshape(1, Cop)
    bias_p = jnp.pad(bias.astype(jnp.float32), (0, Cop - Cout)).reshape(1, Cop)

    RH = _pick_row_tile(H, W, Cip, Cop, max_row_tile)   # conv rows per grid step
    TH = RH // 2                                        # pooled rows per grid step
    nt = H // RH

    _, vmem_limit = _vmem_budget()

    flops = 2 * N * H * W * 9 * Cip * Cop
    bytes_accessed = (N * H * W * Cip * 2 + w_p.size * 2
                      + (scale_p.size + bias_p.size) * 4
                      + N * Ho * Wo * Cop * 2)

    return pl.pallas_call(
        downsample_kernel,
        out_shape=jax.ShapeDtypeStruct((N, Ho, Wo, Cop), out_dtype),
        grid_spec=pltpu.PrefetchScalarGridSpec(
            num_scalar_prefetch=0,
            grid=(N, nt),
            in_specs=[
                # main conv rows of this tile
                pl.BlockSpec((1, RH, W, Cip), lambda n, t: (n, t, 0, 0)),
                # 1-row halo above (block row size 1 -> block index == row index)
                pl.BlockSpec((1, 1, W, Cip),
                             lambda n, t: (n, jnp.maximum(t * RH - 1, 0), 0, 0)),
                # 1-row halo below (clamped)
                pl.BlockSpec((1, 1, W, Cip),
                             lambda n, t: (n, jnp.minimum(t * RH + RH, H - 1), 0, 0)),
                pl.BlockSpec((9, Cip, Cop), lambda n, t: (0, 0, 0)),
                pl.BlockSpec((1, Cop), lambda n, t: (0, 0)),
                pl.BlockSpec((1, Cop), lambda n, t: (0, 0)),
            ],
            out_specs=pl.BlockSpec((1, TH, Wo, Cop), lambda n, t: (n, t, 0, 0)),
            scratch_shapes=[pltpu.VMEM((RH + 2, W + 2, Cip), jnp.bfloat16)],
        ),
        compiler_params=pltpu.CompilerParams(
            dimension_semantics=("parallel", "parallel"),
            vmem_limit_bytes=vmem_limit),
        cost_estimate=pl.CostEstimate(flops=flops, transcendentals=0,
                                      bytes_accessed=bytes_accessed),
    )(x, x, x, w_p, scale_p, bias_p)


# ---------------------------- parameter setup ------------------------------- #

def make_layer_params(key, cin, cout):
    """Deterministic synthetic Conv+BN parameters, BN folded into (scale, bias)."""
    kw, kb = jax.random.split(key)
    w = jax.random.normal(kw, (3, 3, cin, cout), jnp.float32) \
        * (2.0 / (9.0 * cin)) ** 0.5                      # HWIO
    conv_b = jax.random.normal(kb, (cout,), jnp.float32) * 0.01
    gamma = jnp.ones((cout,), jnp.float32)
    beta = jnp.zeros((cout,), jnp.float32)
    mean = jnp.zeros((cout,), jnp.float32)
    var = jnp.ones((cout,), jnp.float32)
    eps = 1e-5
    scale = gamma / jnp.sqrt(var + eps)
    bias = (conv_b - mean) * scale + beta
    return w, scale, bias


class EncoderPallas:
    """Mirror of the PyTorch Encoder(in_ch, feature_size, depth, r) forward."""

    def __init__(self, key, in_ch, feature_size=64, depth=2, r=2):
        chans = [in_ch] + [int(feature_size * r ** d) for d in range(depth + 1)]
        keys = jax.random.split(key, depth + 1)
        self.params = [make_layer_params(k, ci, co)
                       for k, ci, co in zip(keys, chans[:-1], chans[1:])]
        self.out_ch = int(feature_size * r ** depth)

    def __call__(self, x_nchw, max_row_tile=None):
        n_layers = len(self.params)
        assert x_nchw.shape[2] % (2 ** n_layers) == 0
        assert x_nchw.shape[3] % (2 ** n_layers) == 0
        x = jnp.transpose(x_nchw, (0, 2, 3, 1))           # NCHW -> NHWC
        for (w, scale, bias) in self.params:
            x = downsample_pallas(x, w, scale, bias, out_dtype=jnp.bfloat16,
                                  max_row_tile=max_row_tile)
        x = x[..., :self.out_ch]                          # drop lane padding
        return jnp.transpose(x, (0, 3, 1, 2)).astype(jnp.float32)   # NHWC -> NCHW


# --------------------------- pure-JAX reference ------------------------------ #

def ref_downsample(x_nhwc, w_hwio, scale, bias):
    x = x_nhwc.astype(jnp.bfloat16)
    w = w_hwio.astype(jnp.bfloat16)
    y = jax.lax.conv_general_dilated(
        x, w, window_strides=(1, 1), padding="SAME",
        dimension_numbers=("NHWC", "HWIO", "NHWC"),
        preferred_element_type=jnp.float32)
    y = y * scale[None, None, None, :] + bias[None, None, None, :]
    y = jnp.maximum(y, 0.0)
    y = jax.lax.reduce_window(y, -jnp.inf, jax.lax.max,
                              (1, 2, 2, 1), (1, 2, 2, 1), "VALID")
    return y.astype(jnp.bfloat16)


def ref_encoder(x_nchw, params):
    x = jnp.transpose(x_nchw, (0, 2, 3, 1))
    for (w, scale, bias) in params:
        x = ref_downsample(x, w, scale, bias)
    return jnp.transpose(x, (0, 3, 1, 2)).astype(jnp.float32)


# --------------------------------- main -------------------------------------- #

if __name__ == "__main__":
    key = jax.random.PRNGKey(0)
    kx, kp = jax.random.split(key)

    # small shapes: batch=2, in_ch=4, spatial=16, feature_size=8, depth=2, r=2
    x = jax.random.normal(kx, (2, 4, 16, 16), jnp.float32)   # NCHW, like PyTorch
    enc = EncoderPallas(kp, in_ch=4, feature_size=8, depth=2, r=2)

    ref = jax.block_until_ready(ref_encoder(x, enc.params))

    # 1) auto-sized row tiles (single tile per image at this toy size)
    out = jax.block_until_ready(enc(x))
    assert out.shape == (2, enc.out_ch, 2, 2), out.shape
    err = float(jnp.max(jnp.abs(out - ref)))
    assert err < 5e-2, err

    # 2) forced small row tiles -> exercises the multi-tile halo path
    out_t = jax.block_until_ready(enc(x, max_row_tile=4))
    err_t = float(jnp.max(jnp.abs(out_t - ref)))
    assert err_t < 5e-2, err_t

    print("KERNEL_OK")
</pallas_src>

<mosaic_0001>
module attributes {stable_mosaic.version = 11 : i64} {
  func.func @downsample_kernel(%arg0: i32, %arg1: i32, %arg2: memref<1x16x16x128xbf16, #tpu.memory_space<vmem>>, %arg3: memref<1x1x16x128xbf16, #tpu.memory_space<vmem>>, %arg4: memref<1x1x16x128xbf16, #tpu.memory_space<vmem>>, %arg5: memref<9x128x128xbf16, #tpu.memory_space<vmem>>, %arg6: memref<1x128xf32, #tpu.memory_space<vmem>>, %arg7: memref<1x128xf32, #tpu.memory_space<vmem>>, %arg8: memref<1x8x8x128xbf16, #tpu.memory_space<vmem>>, %arg9: memref<18x18x128xbf16, #tpu.memory_space<vmem>>) attributes {dimension_semantics = [#tpu.dimension_semantics<parallel>, #tpu.dimension_semantics<parallel>], iteration_bounds = array<i64: 2, 1>, scalar_prefetch = 0 : i64, scratch_operands = 1 : i64, tpu.core_type = #tpu.core_type<tc>, window_params = [{transform_indices = @transform_0, window_bounds = array<i64: 1, 16, 16, 128>}, {transform_indices = @transform_1, window_bounds = array<i64: 1, 1, 16, 128>}, {transform_indices = @transform_2, window_bounds = array<i64: 1, 1, 16, 128>}, {pipeline_mode = #tpu.pipeline_mode<synchronous>, transform_indices = @transform_3, window_bounds = array<i64: 9, 128, 128>}, {pipeline_mode = #tpu.pipeline_mode<synchronous>, transform_indices = @transform_4, window_bounds = array<i64: 1, 128>}, {pipeline_mode = #tpu.pipeline_mode<synchronous>, transform_indices = @transform_5, window_bounds = array<i64: 1, 128>}, {transform_indices = @transform_6, window_bounds = array<i64: 1, 8, 8, 128>}]} {
    %cst = arith.constant 0.000000e+00 : bf16
    %0 = vector.broadcast %cst : bf16 to vector<18x1x128xbf16>
    %c0 = arith.constant 0 : index
    %c0_0 = arith.constant 0 : index
    %c0_1 = arith.constant 0 : index
    %1 = vector.load %arg9[%c0, %c0_0, %c0_1] : memref<18x18x128xbf16, #tpu.memory_space<vmem>>, vector<18x1x128xbf16>
    tpu.vector_store %arg9[%c0, %c0_0, %c0_1], %0 {strides = array<i32>} : memref<18x18x128xbf16, #tpu.memory_space<vmem>>, vector<18x1x128xbf16>,
    %c0_2 = arith.constant 0 : index
    %c17 = arith.constant 17 : index
    %c0_3 = arith.constant 0 : index
    %2 = vector.load %arg9[%c0_2, %c17, %c0_3] : memref<18x18x128xbf16, #tpu.memory_space<vmem>>, vector<18x1x128xbf16>
    tpu.vector_store %arg9[%c0_2, %c17, %c0_3], %0 {strides = array<i32>} : memref<18x18x128xbf16, #tpu.memory_space<vmem>>, vector<18x1x128xbf16>,
    %c0_4 = arith.constant 0 : index
    %c0_5 = arith.constant 0 : index
    %c0_6 = arith.constant 0 : index
    %c0_7 = arith.constant 0 : index
    %3 = vector.load %arg2[%c0_4, %c0_5, %c0_6, %c0_7] : memref<1x16x16x128xbf16, #tpu.memory_space<vmem>>, vector<1x16x16x128xbf16>
    %4 = vector.shape_cast %3 : vector<1x16x16x128xbf16> to vector<16x16x128xbf16>
    %c1 = arith.constant 1 : index
    %c1_8 = arith.constant 1 : index
    %c0_9 = arith.constant 0 : index
    %5 = vector.load %arg9[%c1, %c1_8, %c0_9] : memref<18x18x128xbf16, #tpu.memory_space<vmem>>, vector<16x16x128xbf16>
    tpu.vector_store %arg9[%c1, %c1_8, %c0_9], %4 {strides = array<i32>} : memref<18x18x128xbf16, #tpu.memory_space<vmem>>, vector<16x16x128xbf16>,
    %c0_i32 = arith.constant 0 : i32
    %6 = arith.cmpi sgt, %arg1, %c0_i32 : i32
    %cst_10 = arith.constant 1.000000e+00 : f32
    %cst_11 = arith.constant 0.000000e+00 : f32
    %7 = arith.select %6, %cst_10, %cst_11 : f32
    %8 = arith.truncf %7 : f32 to bf16
    %c0_i32_12 = arith.constant 0 : i32
    %9 = arith.cmpi slt, %arg1, %c0_i32_12 : i32
    %cst_13 = arith.constant 1.000000e+00 : f32
    %cst_14 = arith.constant 0.000000e+00 : f32
    %10 = arith.select %9, %cst_13, %cst_14 : f32
    %11 = arith.truncf %10 : f32 to bf16
    %c0_15 = arith.constant 0 : index
    %c0_16 = arith.constant 0 : index
    %c0_17 = arith.constant 0 : index
    %c0_18 = arith.constant 0 : index
    %12 = vector.load %arg3[%c0_15, %c0_16, %c0_17, %c0_18] : memref<1x1x16x128xbf16, #tpu.memory_space<vmem>>, vector<1x1x16x128xbf16>
    %13 = vector.shape_cast %12 : vector<1x1x16x128xbf16> to vector<1x16x128xbf16>
    %14 = vector.broadcast %8 : bf16 to vector<1x16x128xbf16>
    %15 = arith.mulf %13, %14 : vector<1x16x128xbf16>
    %c0_19 = arith.constant 0 : index
    %c1_20 = arith.constant 1 : index
    %c0_21 = arith.constant 0 : index
    %16 = vector.load %arg9[%c0_19, %c1_20, %c0_21] : memref<18x18x128xbf16, #tpu.memory_space<vmem>>, vector<1x16x128xbf16>
    tpu.vector_store %arg9[%c0_19, %c1_20, %c0_21], %15 {strides = array<i32>} : memref<18x18x128xbf16, #tpu.memory_space<vmem>>, vector<1x16x128xbf16>,
    %c0_22 = arith.constant 0 : index
    %c0_23 = arith.constant 0 : index
    %c0_24 = arith.constant 0 : index
    %c0_25 = arith.constant 0 : index
    %17 = vector.load %arg4[%c0_22, %c0_23, %c0_24, %c0_25] : memref<1x1x16x128xbf16, #tpu.memory_space<vmem>>, vector<1x1x16x128xbf16>
    %18 = vector.shape_cast %17 : vector<1x1x16x128xbf16> to vector<1x16x128xbf16>
    %19 = vector.broadcast %11 : bf16 to vector<1x16x128xbf16>
    %20 = arith.mulf %18, %19 : vector<1x16x128xbf16>
    %c17_26 = arith.constant 17 : index
    %c1_27 = arith.constant 1 : index
    %c0_28 = arith.constant 0 : index
    %21 = vector.load %arg9[%c17_26, %c1_27, %c0_28] : memref<18x18x128xbf16, #tpu.memory_space<vmem>>, vector<1x16x128xbf16>
    tpu.vector_store %arg9[%c17_26, %c1_27, %c0_28], %20 {strides = array<i32>} : memref<18x18x128xbf16, #tpu.memory_space<vmem>>, vector<1x16x128xbf16>,
    %c0_29 = arith.constant 0 : index
    %c0_30 = arith.constant 0 : index
    %c0_31 = arith.constant 0 : index
    %22 = vector.load %arg9[%c0_29, %c0_30, %c0_31] : memref<18x18x128xbf16, #tpu.memory_space<vmem>>, vector<16x16x128xbf16>
    %23 = vector.shape_cast %22 : vector<16x16x128xbf16> to vector<256x128xbf16>
    %c0_32 = arith.constant 0 : index
    %c0_33 = arith.constant 0 : index
    %c0_34 = arith.constant 0 : index
    %24 = vector.load %arg5[%c0_32, %c0_33, %c0_34] : memref<9x128x128xbf16, #tpu.memory_space<vmem>>, vector<1x128x128xbf16>
    %25 = vector.shape_cast %24 : vector<1x128x128xbf16> to vector<128x128xbf16>
    %cst_35 = arith.constant dense<0.000000e+00> : vector<256x128xf32>
    %26 = tpu.matmul %23, %25, %cst_35 {dimension_numbers = #tpu.dot_dimension_numbers<[1], [0], [0], [1], [0, 0, 1, 1], [], []>} : vector<256x128xbf16>, vector<128x128xbf16>, vector<256x128xf32> -> vector<256x128xf32>
    %c0_36 = arith.constant 0 : index
    %c1_37 = arith.constant 1 : index
    %c0_38 = arith.constant 0 : index
    %27 = vector.load %arg9[%c0_36, %c1_37, %c0_38] : memref<18x18x128xbf16, #tpu.memory_space<vmem>>, vector<16x16x128xbf16>
    %28 = vector.shape_cast %27 : vector<16x16x128xbf16> to vector<256x128xbf16>
    %c1_39 = arith.constant 1 : index
    %c0_40 = arith.constant 0 : index
    %c0_41 = arith.constant 0 : index
    %29 = vector.load %arg5[%c1_39, %c0_40, %c0_41] : memref<9x128x128xbf16, #tpu.memory_space<vmem>>, vector<1x128x128xbf16>
    %30 = vector.shape_cast %29 : vector<1x128x128xbf16> to vector<128x128xbf16>
    %cst_42 = arith.constant dense<0.000000e+00> : vector<256x128xf32>
    %31 = tpu.matmul %28, %30, %cst_42 {dimension_numbers = #tpu.dot_dimension_numbers<[1], [0], [0], [1], [0, 0, 1, 1], [], []>} : vector<256x128xbf16>, vector<128x128xbf16>, vector<256x128xf32> -> vector<256x128xf32>
    %32 = arith.addf %26, %31 : vector<256x128xf32>
    %c0_43 = arith.constant 0 : index
    %c2 = arith.constant 2 : index
    %c0_44 = arith.constant 0 : index
    %33 = vector.load %arg9[%c0_43, %c2, %c0_44] : memref<18x18x128xbf16, #tpu.memory_space<vmem>>, vector<16x16x128xbf16>
    %34 = vector.shape_cast %33 : vector<16x16x128xbf16> to vector<256x128xbf16>
    %c2_45 = arith.constant 2 : index
    %c0_46 = arith.constant 0 : index
    %c0_47 = arith.constant 0 : index
    %35 = vector.load %arg5[%c2_45, %c0_46, %c0_47] : memref<9x128x128xbf16, #tpu.memory_space<vmem>>, vector<1x128x128xbf16>
    %36 = vector.shape_cast %35 : vector<1x128x128xbf16> to vector<128x128xbf16>
    %cst_48 = arith.constant dense<0.000000e+00> : vector<256x128xf32>
    %37 = tpu.matmul %34, %36, %cst_48 {dimension_numbers = #tpu.dot_dimension_numbers<[1], [0], [0], [1], [0, 0, 1, 1], [], []>} : vector<256x128xbf16>, vector<128x128xbf16>, vector<256x128xf32> -> vector<256x128xf32>
    %38 = arith.addf %32, %37 : vector<256x128xf32>
    %c1_49 = arith.constant 1 : index
    %c0_50 = arith.constant 0 : index
    %c0_51 = arith.constant 0 : index
    %39 = vector.load %arg9[%c1_49, %c0_50, %c0_51] : memref<18x18x128xbf16, #tpu.memory_space<vmem>>, vector<16x16x128xbf16>
    %40 = vector.shape_cast %39 : vector<16x16x128xbf16> to vector<256x128xbf16>
    %c3 = arith.constant 3 : index
    %c0_52 = arith.constant 0 : index
    %c0_53 = arith.constant 0 : index
    %41 = vector.load %arg5[%c3, %c0_52, %c0_53] : memref<9x128x128xbf16, #tpu.memory_space<vmem>>, vector<1x128x128xbf16>
    %42 = vector.shape_cast %41 : vector<1x128x128xbf16> to vector<128x128xbf16>
    %cst_54 = arith.constant dense<0.000000e+00> : vector<256x128xf32>
    %43 = tpu.matmul %40, %42, %cst_54 {dimension_numbers = #tpu.dot_dimension_numbers<[1], [0], [0], [1], [0, 0, 1, 1], [], []>} : vector<256x128xbf16>, vector<128x128xbf16>, vector<256x128xf32> -> vector<256x128xf32>
    %44 = arith.addf %38, %43 : vector<256x128xf32>
    %c1_55 = arith.constant 1 : index
    %c1_56 = arith.constant 1 : index
    %c0_57 = arith.constant 0 : index
    %45 = vector.load %arg9[%c1_55, %c1_56, %c0_57] : memref<18x18x128xbf16, #tpu.memory_space<vmem>>, vector<16x16x128xbf16>
    %46 = vector.shape_cast %45 : vector<16x16x128xbf16> to vector<256x128xbf16>
    %c4 = arith.constant 4 : index
    %c0_58 = arith.constant 0 : index
    %c0_59 = arith.constant 0 : index
    %47 = vector.load %arg5[%c4, %c0_58, %c0_59] : memref<9x128x128xbf16, #tpu.memory_space<vmem>>, vector<1x128x128xbf16>
    %48 = vector.shape_cast %47 : vector<1x128x128xbf16> to vector<128x128xbf16>
    %cst_60 = arith.constant dense<0.000000e+00> : vector<256x128xf32>
    %49 = tpu.matmul %46, %48, %cst_60 {dimension_numbers = #tpu.dot_dimension_numbers<[1], [0], [0], [1], [0, 0, 1, 1], [], []>} : vector<256x128xbf16>, vector<128x128xbf16>, vector<256x128xf32> -> vector<256x128xf32>
    %50 = arith.addf %44, %49 : vector<256x128xf32>
    %c1_61 = arith.constant 1 : index
    %c2_62 = arith.constant 2 : index
    %c0_63 = arith.constant 0 : index
    %51 = vector.load %arg9[%c1_61, %c2_62, %c0_63] : memref<18x18x128xbf16, #tpu.memory_space<vmem>>, vector<16x16x128xbf16>
    %52 = vector.shape_cast %51 : vector<16x16x128xbf16> to vector<256x128xbf16>
    %c5 = arith.constant 5 : index
    %c0_64 = arith.constant 0 : index
    %c0_65 = arith.constant 0 : index
    %53 = vector.load %arg5[%c5, %c0_64, %c0_65] : memref<9x128x128xbf16, #tpu.memory_space<vmem>>, vector<1x128x128xbf16>
    %54 = vector.shape_cast %53 : vector<1x128x128xbf16> to vector<128x128xbf16>
    %cst_66 = arith.constant dense<0.000000e+00> : vector<256x128xf32>
    %55 = tpu.matmul %52, %54, %cst_66 {dimension_numbers = #tpu.dot_dimension_numbers<[1], [0], [0], [1], [0, 0, 1, 1], [], []>} : vector<256x128xbf16>, vector<128x128xbf16>, vector<256x128xf32> -> vector<256x128xf32>
    %56 = arith.addf %50, %55 : vector<256x128xf32>
    %c2_67 = arith.constant 2 : index
    %c0_68 = arith.constant 0 : index
    %c0_69 = arith.constant 0 : index
    %57 = vector.load %arg9[%c2_67, %c0_68, %c0_69] : memref<18x18x128xbf16, #tpu.memory_space<vmem>>, vector<16x16x128xbf16>
    %58 = vector.shape_cast %57 : vector<16x16x128xbf16> to vector<256x128xbf16>
    %c6 = arith.constant 6 : index
    %c0_70 = arith.constant 0 : index
    %c0_71 = arith.constant 0 : index
    %59 = vector.load %arg5[%c6, %c0_70, %c0_71] : memref<9x128x128xbf16, #tpu.memory_space<vmem>>, vector<1x128x128xbf16>
    %60 = vector.shape_cast %59 : vector<1x128x128xbf16> to vector<128x128xbf16>
    %cst_72 = arith.constant dense<0.000000e+00> : vector<256x128xf32>
    %61 = tpu.matmul %58, %60, %cst_72 {dimension_numbers = #tpu.dot_dimension_numbers<[1], [0], [0], [1], [0, 0, 1, 1], [], []>} : vector<256x128xbf16>, vector<128x128xbf16>, vector<256x128xf32> -> vector<256x128xf32>
    %62 = arith.addf %56, %61 : vector<256x128xf32>
    %c2_73 = arith.constant 2 : index
    %c1_74 = arith.constant 1 : index
    %c0_75 = arith.constant 0 : index
    %63 = vector.load %arg9[%c2_73, %c1_74, %c0_75] : memref<18x18x128xbf16, #tpu.memory_space<vmem>>, vector<16x16x128xbf16>
    %64 = vector.shape_cast %63 : vector<16x16x128xbf16> to vector<256x128xbf16>
    %c7 = arith.constant 7 : index
    %c0_76 = arith.constant 0 : index
    %c0_77 = arith.constant 0 : index
    %65 = vector.load %arg5[%c7, %c0_76, %c0_77] : memref<9x128x128xbf16, #tpu.memory_space<vmem>>, vector<1x128x128xbf16>
    %66 = vector.shape_cast %65 : vector<1x128x128xbf16> to vector<128x128xbf16>
    %cst_78 = arith.constant dense<0.000000e+00> : vector<256x128xf32>
    %67 = tpu.matmul %64, %66, %cst_78 {dimension_numbers = #tpu.dot_dimension_numbers<[1], [0], [0], [1], [0, 0, 1, 1], [], []>} : vector<256x128xbf16>, vector<128x128xbf16>, vector<256x128xf32> -> vector<256x128xf32>
    %68 = arith.addf %62, %67 : vector<256x128xf32>
    %c2_79 = arith.constant 2 : index
    %c2_80 = arith.constant 2 : index
    %c0_81 = arith.constant 0 : index
    %69 = vector.load %arg9[%c2_79, %c2_80, %c0_81] : memref<18x18x128xbf16, #tpu.memory_space<vmem>>, vector<16x16x128xbf16>
    %70 = vector.shape_cast %69 : vector<16x16x128xbf16> to vector<256x128xbf16>
    %c8 = arith.constant 8 : index
    %c0_82 = arith.constant 0 : index
    %c0_83 = arith.constant 0 : index
    %71 = vector.load %arg5[%c8, %c0_82, %c0_83] : memref<9x128x128xbf16, #tpu.memory_space<vmem>>, vector<1x128x128xbf16>
    %72 = vector.shape_cast %71 : vector<1x128x128xbf16> to vector<128x128xbf16>
    %cst_84 = arith.constant dense<0.000000e+00> : vector<256x128xf32>
    %73 = tpu.matmul %70, %72, %cst_84 {dimension_numbers = #tpu.dot_dimension_numbers<[1], [0], [0], [1], [0, 0, 1, 1], [], []>} : vector<256x128xbf16>, vector<128x128xbf16>, vector<256x128xf32> -> vector<256x128xf32>
    %74 = arith.addf %68, %73 : vector<256x128xf32>
    %c0_85 = arith.constant 0 : index
    %c0_86 = arith.constant 0 : index
    %75 = vector.load %arg6[%c0_85, %c0_86] : memref<1x128xf32, #tpu.memory_space<vmem>>, vector<1x128xf32>
    %76 = vector.broadcast %75 : vector<1x128xf32> to vector<256x128xf32>
    %77 = arith.mulf %74, %76 : vector<256x128xf32>
    %c0_87 = arith.constant 0 : index
    %c0_88 = arith.constant 0 : index
    %78 = vector.load %arg7[%c0_87, %c0_88] : memref<1x128xf32, #tpu.memory_space<vmem>>, vector<1x128xf32>
    %79 = vector.broadcast %78 : vector<1x128xf32> to vector<256x128xf32>
    %80 = arith.addf %77, %79 : vector<256x128xf32>
    %cst_89 = arith.constant 0.000000e+00 : f32
    %81 = vector.broadcast %cst_89 : f32 to vector<256x128xf32>
    %82 = arith.maximumf %80, %81 : vector<256x128xf32>
    %83 = vector.shape_cast %82 : vector<256x128xf32> to vector<8x2x16x128xf32>
    %cst_90 = arith.constant dense<0xFF800000> : vector<8x16x128xf32>
    %84 = vector.multi_reduction <maximumf>, %83, %cst_90 [1] : vector<8x2x16x128xf32> to vector<8x16x128xf32>
    %85 = vector.shape_cast %84 : vector<8x16x128xf32> to vector<8x8x256xf32>
    %86 = vector.extract_strided_slice %85 {offsets = [0, 0, 0], sizes = [8, 8, 128], strides = [1, 1, 1]} : vector<8x8x256xf32> to vector<8x8x128xf32>
    %87 = vector.extract_strided_slice %85 {offsets = [0, 0, 128], sizes = [8, 8, 128], strides = [1, 1, 1]} : vector<8x8x256xf32> to vector<8x8x128xf32>
    %88 = arith.maximumf %86, %87 : vector<8x8x128xf32>
    %89 = arith.truncf %88 : vector<8x8x128xf32> to vector<8x8x128xbf16>
    %c0_91 = arith.constant 0 : index
    %c0_92 = arith.constant 0 : index
    %c0_93 = arith.constant 0 : index
    %c0_94 = arith.constant 0 : index
    %90 = vector.load %arg8[%c0_91, %c0_92, %c0_93, %c0_94] : memref<1x8x8x128xbf16, #tpu.memory_space<vmem>>, vector<1x8x8x128xbf16>
    %91 = vector.shape_cast %90 : vector<1x8x8x128xbf16> to vector<8x8x128xbf16>
    %92 = vector.shape_cast %89 : vector<8x8x128xbf16> to vector<1x8x8x128xbf16>
    tpu.vector_store %arg8[%c0_91, %c0_92, %c0_93, %c0_94], %92 {strides = array<i32>} : memref<1x8x8x128xbf16, #tpu.memory_space<vmem>>, vector<1x8x8x128xbf16>,
    return
  }
  func.func @transform_0(%arg0: i32, %arg1: i32) -> (i32, i32, i32, i32) {
    %c0_i32 = arith.constant 0 : i32
    %c0_i32_0 = arith.constant 0 : i32
    %c0_i32_1 = arith.constant 0 : i32
    return %arg0, %arg1, %c0_i32, %c0_i32_0 : i32, i32, i32, i32
  }
  func.func @transform_1(%arg0: i32, %arg1: i32) -> (i32, i32, i32, i32) {
    %c16_i32 = arith.constant 16 : i32
    %0 = arith.muli %arg1, %c16_i32 : i32
    %c1_i32 = arith.constant 1 : i32
    %1 = arith.subi %0, %c1_i32 : i32
    %c0_i32 = arith.constant 0 : i32
    %2 = arith.maxsi %1, %c0_i32 : i32
    %c0_i32_0 = arith.constant 0 : i32
    %c0_i32_1 = arith.constant 0 : i32
    %c0_i32_2 = arith.constant 0 : i32
    return %arg0, %2, %c0_i32_0, %c0_i32_1 : i32, i32, i32, i32
  }
  func.func @transform_2(%arg0: i32, %arg1: i32) -> (i32, i32, i32, i32) {
    %c16_i32 = arith.constant 16 : i32
    %0 = arith.muli %arg1, %c16_i32 : i32
    %c16_i32_0 = arith.constant 16 : i32
    %1 = arith.addi %0, %c16_i32_0 : i32
    %c15_i32 = arith.constant 15 : i32
    %2 = arith.minsi %1, %c15_i32 : i32
    %c0_i32 = arith.constant 0 : i32
    %c0_i32_1 = arith.constant 0 : i32
    %c0_i32_2 = arith.constant 0 : i32
    return %arg0, %2, %c0_i32, %c0_i32_1 : i32, i32, i32, i32
  }
  func.func @transform_3(%arg0: i32, %arg1: i32) -> (i32, i32, i32) {
    %c0_i32 = arith.constant 0 : i32
    %c0_i32_0 = arith.constant 0 : i32
    %c0_i32_1 = arith.constant 0 : i32
    %c0_i32_2 = arith.constant 0 : i32
    return %c0_i32, %c0_i32_0, %c0_i32_1 : i32, i32, i32
  }
  func.func @transform_4(%arg0: i32, %arg1: i32) -> (i32, i32) {
    %c0_i32 = arith.constant 0 : i32
    %c0_i32_0 = arith.constant 0 : i32
    %c0_i32_1 = arith.constant 0 : i32
    return %c0_i32, %c0_i32_0 : i32, i32
  }
  func.func @transform_5(%arg0: i32, %arg1: i32) -> (i32, i32) {
    %c0_i32 = arith.constant 0 : i32
    %c0_i32_0 = arith.constant 0 : i32
    %c0_i32_1 = arith.constant 0 : i32
    return %c0_i32, %c0_i32_0 : i32, i32
  }
  func.func @transform_6(%arg0: i32, %arg1: i32) -> (i32, i32, i32, i32) {
    %c0_i32 = arith.constant 0 : i32
    %c0_i32_0 = arith.constant 0 : i32
    %c0_i32_1 = arith.constant 0 : i32
    return %arg0, %arg1, %c0_i32, %c0_i32_0 : i32, i32, i32, i32
  }
}

</mosaic_0001>

<llo_original>
// kernel: tpu_custom_call.1
$region0: #{tpu_custom_call.1}
  #allocation0 [shape = 'u32[]', space=smem, size = 0x4, offset = 0x4, fixed_abs, tag = 'smem constant byte address 0x4 - core index']
  #allocation1 [shape = 'u32[144,128]{1,0:T(1,128)}', space=vmem, size = 0x12000, scoped, tag = 'internal scratch']
  #allocation2 [shape = 'bf16[18,18,128]{2,1,0:T(8,128)(2,1)}', space=vmem, size = 0x1b000, scoped, tag = 'scratch operand']
  %s0 = inlined_call_operand.hbm [shape: bf16[2,16,16,128], index: 0, kind: input, shape index: {}]
  %s1 = inlined_call_operand.hbm [shape: bf16[2,16,16,128], index: 1, kind: input, shape index: {}]
  %s2 = inlined_call_operand.hbm [shape: bf16[2,16,16,128], index: 2, kind: input, shape index: {}]
  %s3 = inlined_call_operand.hbm [shape: bf16[9,128,128], index: 3, kind: input, shape index: {}]
  %s4 = inlined_call_operand.vmem [shape: f32[1,128], index: 4, kind: input, shape index: {}]
  %s5 = inlined_call_operand.vmem [shape: f32[1,128], index: 5, kind: input, shape index: {}]
  %s6 = inlined_call_operand.hbm [shape: bf16[2,8,8,128], index: 6, kind: output, shape index: {}]
  %s7 = sld [smem:[#allocation0]]
  $region73: #{tpu_custom_call.1} parent=0
    _
  %s9 = ssub.s32 1, %s7
  %s10 = scalar_select 0, %s9, %s7
  $region1: #{tpu_custom_call.1} parent=0
    #allocation3 [shape = 'u8[131072]{0}', space=vmem, size = 0x20000, scoped, tag = 'input window, operand 0']
    #allocation4 [shape = 's32[2]{0}', space=sflag, size = 0x8, scoped, tag = 'scoped memory for tpu_custom_call.1']
    #allocation5 [shape = 's32[2]{0}', space=sflag, size = 0x8, scoped, tag = 'scoped memory for tpu_custom_call.1']
    #allocation6 [shape = 'u8[8192]{0}', space=vmem, size = 0x2000, scoped, tag = 'input window, operand 1']
    #allocation7 [shape = 's32[2]{0}', space=sflag, size = 0x8, scoped, tag = 'scoped memory for tpu_custom_call.1']
    #allocation8 [shape = 'u8[8192]{0}', space=vmem, size = 0x2000, scoped, tag = 'input window, operand 2']
    #allocation9 [shape = 'u8[294912]{0}', space=vmem, size = 0x48000, scoped, tag = 'input window, operand 3, single buffered']
    #allocation10 [shape = 's32[1]{0}', space=sflag, size = 0x4, scoped, tag = 'scoped memory for tpu_custom_call.1']
    #allocation11 [shape = 'u8[32768]{0}', space=vmem, size = 0x8000, scoped, tag = 'output window, operand 0']
    %11 = vsyncpa [#allocation4], 0
    %s12 = scalar_lea.sflag [#allocation4], 1
    %13 = vsyncpa %s12, 0
    %14 = vsyncpa [#allocation7], 0
    %s15 = scalar_lea.sflag [#allocation7], 1
    %16 = vsyncpa %s15, 0
    %17 = vsyncpa [#allocation10], 0
    %18 = vsyncpa [#allocation5], 0
    %s19 = scalar_lea.sflag [#allocation5], 1
    %20 = vsyncpa %s19, 0
    loop: start=0, step=1, limit=4
    $region2: #{tpu_custom_call.1} parent=1 // loop_pre_header
      _
    $region3: #{tpu_custom_call.1} parent=1 // loop_header
      %s22 = sphi 0, %s26
      %p23 = scmp.ge.s32.totalorder %s22, 4
      %s29 = sphi 0, %s41
      %s30 = sphi 0, %s37
      %s31 = sphi 0, %s29
      %s32 = sphi 0, %s30
      %s33 = sphi 0, %s31
      %s34 = sphi 0, %s32
      %s46 = sphi 0, %s48
      %s49 = sphi 0, %s46
      %s50 = sphi 0, %s49
      %s66 = sphi 0, %s50
      %s82 = sphi 0, %s84
      %s85 = sphi 0, %s82
      %s86 = sphi 0, %s85
      %s102 = sphi 0, %s86
      %s118 = sphi 0, %s120
      %s121 = sphi 0, %s118
      %s122 = sphi 0, %s121
      %s138 = sphi 0, %s122
      %s142 = sphi 0, %s142
      %s144 = sphi 0, %s142
      %s145 = sphi 0, %s144
      %s159 = sphi 0, %s145
      %s163 = sphi 0, %s163
      %s165 = sphi 0, %s163
      %s166 = sphi 0, %s165
      %s180 = sphi 0, %s166
      %s184 = sphi 0, %s184
      %s186 = sphi 0, %s184
      %s187 = sphi 0, %s186
      %s201 = sphi 0, %s187
      %s209 = sphi 0, %s211
      %s212 = sphi 0, %s209
      %s213 = sphi 0, %s212
      %s229 = sphi 0, %s213
    $region4: #{tpu_custom_call.1} parent=1 // loop_header_branch
      %25 = sbr.rel (%p23) target = $region8
    $region5: #{tpu_custom_call.1} parent=1 // loop_body
      %s27 = ssub.s32 %s22, 1
      %s28 = ssub.s32 %s22, 2
      %s35 = sadd.s32 1, %s30
      %p36 = scmp.ge.s32.totalorder %s35, 1
      %s37 = scalar_select %p36, 0, %s35
      %s38 = sadd.s32 1, %s29
      %s39 = scalar_select %p36, %s38, %s29
      %p40 = scmp.ge.s32.totalorder %s39, 2
      %s41 = scalar_select %p40, 0, %s39
      %s42 = ssub.s32 %s29, %s41
      %s43 = ssub.s32 %s30, %s37
      %s44 = sor.u32 %s42, %s43
      %p45 = scmp.eq.s32.totalorder %s44, 0
      %s47 = sadd.s32 %s46, 1
      %s48 = scalar_select %p45, %s46, %s47
      %p51 = pneg %p45
      %p52 = scmp.eq.s32.totalorder %s22, 1
      %p53 = por %p51, %p52
      %p54 = scmp.ne.s32.totalorder %s46, %s49
      %p55 = scmp.eq.s32.totalorder %s22, 0
      %p56 = por %p54, %p55
      %p57 = scmp.ne.s32.totalorder %s46, %s49
      %p58 = scmp.eq.s32.totalorder %s27, 1
      %p59 = por %p57, %p58
      %p60 = scmp.ne.s32.totalorder %s49, %s50
      %p61 = scmp.eq.s32.totalorder %s27, 0
      %p62 = por %p60, %p61
      %p63 = scmp.ne.s32.totalorder %s49, %s50
      %p64 = scmp.eq.s32.totalorder %s28, 1
      %p65 = por %p63, %p64
      %p67 = scmp.ne.s32.totalorder %s50, %s66
      %p68 = scmp.eq.s32.totalorder %s28, 0
      %p69 = por %p67, %p68
      %s70 = smul.u32 %s30, 16
      %s71 = ssub.s32 %s70, 1
      %p72 = scmp.gt.s32.totalorder %s71, 0
      %s73 = scalar_select %p72, %s71, 0
      %s74 = smul.u32 %s37, 16
      %s75 = ssub.s32 %s74, 1
      %p76 = scmp.gt.s32.totalorder %s75, 0
      %s77 = scalar_select %p76, %s75, 0
      %s78 = ssub.s32 %s29, %s41
      %s79 = ssub.s32 %s73, %s77
      %s80 = sor.u32 %s78, %s79
      %p81 = scmp.eq.s32.totalorder %s80, 0
      %s83 = sadd.s32 %s82, 1
      %s84 = scalar_select %p81, %s82, %s83
      %p87 = pneg %p81
      %p88 = scmp.eq.s32.totalorder %s22, 1
      %p89 = por %p87, %p88
      %p90 = scmp.ne.s32.totalorder %s82, %s85
      %p91 = scmp.eq.s32.totalorder %s22, 0
      %p92 = por %p90, %p91
      %p93 = scmp.ne.s32.totalorder %s82, %s85
      %p94 = scmp.eq.s32.totalorder %s27, 1
      %p95 = por %p93, %p94
      %p96 = scmp.ne.s32.totalorder %s85, %s86
      %p97 = scmp.eq.s32.totalorder %s27, 0
      %p98 = por %p96, %p97
      %p99 = scmp.ne.s32.totalorder %s85, %s86
      %p100 = scmp.eq.s32.totalorder %s28, 1
      %p101 = por %p99, %p100
      %p103 = scmp.ne.s32.totalorder %s86, %s102
      %p104 = scmp.eq.s32.totalorder %s28, 0
      %p105 = por %p103, %p104
      %s106 = smul.u32 %s30, 16
      %s107 = sadd.s32 %s106, 16
      %p108 = scmp.lt.s32.totalorder %s107, 15
      %s109 = scalar_select %p108, %s107, 15
      %s110 = smul.u32 %s37, 16
      %s111 = sadd.s32 %s110, 16
      %p112 = scmp.lt.s32.totalorder %s111, 15
      %s113 = scalar_select %p112, %s111, 15
      %s114 = ssub.s32 %s29, %s41
      %s115 = ssub.s32 %s109, %s113
      %s116 = sor.u32 %s114, %s115
      %p117 = scmp.eq.s32.totalorder %s116, 0
      %s119 = sadd.s32 %s118, 1
      %s120 = scalar_select %p117, %s118, %s119
      %p123 = pneg %p117
      %p124 = scmp.eq.s32.totalorder %s22, 1
      %p125 = por %p123, %p124
      %p126 = scmp.ne.s32.totalorder %s118, %s121
      %p127 = scmp.eq.s32.totalorder %s22, 0
      %p128 = por %p126, %p127
      %p129 = scmp.ne.s32.totalorder %s118, %s121
      %p130 = scmp.eq.s32.totalorder %s27, 1
      %p131 = por %p129, %p130
      %p132 = scmp.ne.s32.totalorder %s121, %s122
      %p133 = scmp.eq.s32.totalorder %s27, 0
      %p134 = por %p132, %p133
      %p135 = scmp.ne.s32.totalorder %s121, %s122
      %p136 = scmp.eq.s32.totalorder %s28, 1
      %p137 = por %p135, %p136
      %p139 = scmp.ne.s32.totalorder %s122, %s138
      %p140 = scmp.eq.s32.totalorder %s28, 0
      %p141 = por %p139, %p140
      %s143 = sadd.s32 %s142, 1
      %p146 = scmp.eq.s32.totalorder %s22, 1
      %p147 = scmp.ne.s32.totalorder %s142, %s144
      %p148 = scmp.eq.s32.totalorder %s22, 0
      %p149 = por %p147, %p148
      %p150 = scmp.ne.s32.totalorder %s142, %s144
      %p151 = scmp.eq.s32.totalorder %s27, 1
      %p152 = por %p150, %p151
      %p153 = scmp.ne.s32.totalorder %s144, %s145
      %p154 = scmp.eq.s32.totalorder %s27, 0
      %p155 = por %p153, %p154
      %p156 = scmp.ne.s32.totalorder %s144, %s145
      %p157 = scmp.eq.s32.totalorder %s28, 1
      %p158 = por %p156, %p157
      %p160 = scmp.ne.s32.totalorder %s145, %s159
      %p161 = scmp.eq.s32.totalorder %s28, 0
      %p162 = por %p160, %p161
      %s164 = sadd.s32 %s163, 1
      %p167 = scmp.eq.s32.totalorder %s22, 1
      %p168 = scmp.ne.s32.totalorder %s163, %s165
      %p169 = scmp.eq.s32.totalorder %s22, 0
      %p170 = por %p168, %p169
      %p171 = scmp.ne.s32.totalorder %s163, %s165
      %p172 = scmp.eq.s32.totalorder %s27, 1
      %p173 = por %p171, %p172
      %p174 = scmp.ne.s32.totalorder %s165, %s166
      %p175 = scmp.eq.s32.totalorder %s27, 0
      %p176 = por %p174, %p175
      %p177 = scmp.ne.s32.totalorder %s165, %s166
      %p178 = scmp.eq.s32.totalorder %s28, 1
      %p179 = por %p177, %p178
      %p181 = scmp.ne.s32.totalorder %s166, %s180
      %p182 = scmp.eq.s32.totalorder %s28, 0
      %p183 = por %p181, %p182
      %s185 = sadd.s32 %s184, 1
      %p188 = scmp.eq.s32.totalorder %s22, 1
      %p189 = scmp.ne.s32.totalorder %s184, %s186
      %p190 = scmp.eq.s32.totalorder %s22, 0
      %p191 = por %p189, %p190
      %p192 = scmp.ne.s32.totalorder %s184, %s186
      %p193 = scmp.eq.s32.totalorder %s27, 1
      %p194 = por %p192, %p193
      %p195 = scmp.ne.s32.totalorder %s186, %s187
      %p196 = scmp.eq.s32.totalorder %s27, 0
      %p197 = por %p195, %p196
      %p198 = scmp.ne.s32.totalorder %s186, %s187
      %p199 = scmp.eq.s32.totalorder %s28, 1
      %p200 = por %p198, %p199
      %p202 = scmp.ne.s32.totalorder %s187, %s201
      %p203 = scmp.eq.s32.totalorder %s28, 0
      %p204 = por %p202, %p203
      %s205 = ssub.s32 %s29, %s41
      %s206 = ssub.s32 %s30, %s37
      %s207 = sor.u32 %s205, %s206
      %p208 = scmp.eq.s32.totalorder %s207, 0
      %s210 = sadd.s32 %s209, 1
      %s211 = scalar_select %p208, %s209, %s210
      %p214 = pneg %p208
      %p215 = scmp.eq.s32.totalorder %s22, 1
      %p216 = por %p214, %p215
      %p217 = scmp.ne.s32.totalorder %s209, %s212
      %p218 = scmp.eq.s32.totalorder %s22, 0
      %p219 = por %p217, %p218
      %p220 = scmp.ne.s32.totalorder %s209, %s212
      %p221 = scmp.eq.s32.totalorder %s27, 1
      %p222 = por %p220, %p221
      %p223 = scmp.ne.s32.totalorder %s212, %s213
      %p224 = scmp.eq.s32.totalorder %s27, 0
      %p225 = por %p223, %p224
      %p226 = scmp.ne.s32.totalorder %s212, %s213
      %p227 = scmp.eq.s32.totalorder %s28, 1
      %p228 = por %p226, %p227
      %p230 = scmp.ne.s32.totalorder %s213, %s229
      %p231 = scmp.eq.s32.totalorder %s28, 0
      %p232 = por %p230, %p231
      %p233 = scmp.le.s32.totalorder 1, %s22
      %p234 = scmp.lt.s32.totalorder %s22, 3
      %p235 = pnand %p233, %p234
      %p236 = pneg %p235
      // Predicated region
      $region9: #{tpu_custom_call.1} parent=5 // pred_check
        _
      $region10: #{tpu_custom_call.1} parent=5 // pred_check_branch
        %238 = sbr.rel (%p235) target = $region12
      $region11: #{tpu_custom_call.1} parent=5 // pred_region
        %s239 = ssub.s32 %s22, 1
        // Predicated region
        $region13: #{tpu_custom_call.1} parent=11 // pred_check
          %p240 = pneg %p155
        $region14: #{tpu_custom_call.1} parent=11 // pred_check_branch
          %242 = sbr.rel (%p240) target = $region16
        $region15: #{tpu_custom_call.1} parent=11 // pred_region
          %s244 = ssub.s32 9216, 9216
          %245 = vsyncadd [#allocation10], %s244
          %s246 = sshll.u32 [#allocation9], 4
          %s247 = int_to_ptr.vmem [resolvable:$true] %s246
          %252 = dma.hbm_to_vmem [thread:$0]  %s3, 9216, %s247, [#allocation10], 64, 64, 4
        $region16: #{tpu_custom_call.1} parent=11 // pred_fallthru
          _
        // Predicated region
        $region17: #{tpu_custom_call.1} parent=11 // pred_check
          %p253 = pneg %p176
        $region18: #{tpu_custom_call.1} parent=11 // pred_check_branch
          %255 = sbr.rel (%p253) target = $region20
        $region19: #{tpu_custom_call.1} parent=11 // pred_region
          _
        $region20: #{tpu_custom_call.1} parent=11 // pred_fallthru
          _
        // Predicated region
        $region21: #{tpu_custom_call.1} parent=11 // pred_check
          %p256 = pneg %p197
        $region22: #{tpu_custom_call.1} parent=11 // pred_check_branch
          %258 = sbr.rel (%p256) target = $region24
        $region23: #{tpu_custom_call.1} parent=11 // pred_region
          _
        $region24: #{tpu_custom_call.1} parent=11 // pred_fallthru
          _
      $region12: #{tpu_custom_call.1} parent=5 // pred_fallthru
        _
      %p259 = scmp.lt.s32.totalorder %s22, 2
      // Predicated region
      $region25: #{tpu_custom_call.1} parent=5 // pred_check
        %p260 = pneg %p259
      $region26: #{tpu_custom_call.1} parent=5 // pred_check_branch
        %262 = sbr.rel (%p260) target = $region28
      $region27: #{tpu_custom_call.1} parent=5 // pred_region
        // Predicated region
        $region29: #{tpu_custom_call.1} parent=27 // pred_check
          %p263 = pneg %p56
        $region30: #{tpu_custom_call.1} parent=27 // pred_check_branch
          %265 = sbr.rel (%p263) target = $region32
        $region31: #{tpu_custom_call.1} parent=27 // pred_region
          %s266 = sand.u32 %s46, 1
          %s267 = scalar_lea.sflag [#allocation4], %s266
          %s268 = sand.u32 %s46, 1
          %s269 = smul.addr %s268, 128
          %s270 = scalar_lea.vmem [#allocation3], %s269
          %s271 = smul.u32 16, %s30
          %s273 = ssub.s32 2048, 2048
          %274 = vsyncadd %s267, %s273
          %s275 = smul.addr %s271, 2
          %s276 = smul.addr %s29, 32
          %s277 = sadd.s32 %s275, %s276
          %s278 = smul.addr %s277, 64
          %s279 = scalar_lea.hbm %s0, %s278
          %s280 = sshll.u32 %s270, 4
          %s281 = int_to_ptr.vmem [resolvable:$true] %s280
          %286 = dma.hbm_to_vmem [thread:$0]  %s279, 2048, %s281, %s267, 64, 64, 4
        $region32: #{tpu_custom_call.1} parent=27 // pred_fallthru
          _
        // Predicated region
        $region33: #{tpu_custom_call.1} parent=27 // pred_check
          %p287 = pneg %p92
        $region34: #{tpu_custom_call.1} parent=27 // pred_check_branch
          %289 = sbr.rel (%p287) target = $region36
        $region35: #{tpu_custom_call.1} parent=27 // pred_region
          %s290 = sand.u32 %s22, 1
          %s291 = scalar_lea.sflag [#allocation7], %s290
          %s292 = sand.u32 %s82, 1
          %s293 = smul.addr %s292, 8
          %s294 = scalar_lea.vmem [#allocation6], %s293
          %s295 = smul.u32 %s30, 16
          %s296 = ssub.s32 %s295, 1
          %p297 = scmp.gt.s32.totalorder %s296, 0
          %s298 = scalar_select %p297, %s296, 0
          %s300 = ssub.s32 128, 128
          %301 = vsyncadd %s291, %s300
          %s302 = smul.addr %s298, 2
          %s303 = smul.addr %s29, 32
          %s304 = sadd.s32 %s302, %s303
          %s305 = smul.addr %s304, 64
          %s306 = scalar_lea.hbm %s1, %s305
          %s307 = sshll.u32 %s294, 4
          %s308 = int_to_ptr.vmem [resolvable:$true] %s307
          %313 = dma.hbm_to_vmem [thread:$0]  %s306, 128, %s308, %s291, 64, 64, 4
        $region36: #{tpu_custom_call.1} parent=27 // pred_fallthru
          _
        // Predicated region
        $region37: #{tpu_custom_call.1} parent=27 // pred_check
          %p314 = pneg %p128
        $region38: #{tpu_custom_call.1} parent=27 // pred_check_branch
          %316 = sbr.rel (%p314) target = $region40
        $region39: #{tpu_custom_call.1} parent=27 // pred_region
          %s317 = sand.u32 %s22, 1
          %s318 = scalar_lea.sflag [#allocation7], %s317
          %s319 = sand.u32 %s118, 1
          %s320 = smul.addr %s319, 8
          %s321 = scalar_lea.vmem [#allocation8], %s320
          %s322 = smul.u32 %s30, 16
          %s323 = sadd.s32 %s322, 16
          %p324 = scmp.lt.s32.totalorder %s323, 15
          %s325 = scalar_select %p324, %s323, 15
          %s327 = ssub.s32 128, 128
          %328 = vsyncadd %s318, %s327
          %s329 = smul.addr %s325, 2
          %s330 = smul.addr %s29, 32
          %s331 = sadd.s32 %s329, %s330
          %s332 = smul.addr %s331, 64
          %s333 = scalar_lea.hbm %s2, %s332
          %s334 = sshll.u32 %s321, 4
          %s335 = int_to_ptr.vmem [resolvable:$true] %s334
          %340 = dma.hbm_to_vmem [thread:$0]  %s333, 128, %s335, %s318, 64, 64, 4
        $region40: #{tpu_custom_call.1} parent=27 // pred_fallthru
          _
      $region28: #{tpu_custom_call.1} parent=5 // pred_fallthru
        _
      %p341 = scmp.le.s32.totalorder 1, %s22
      %p342 = scmp.lt.s32.totalorder %s22, 3
      %p343 = pnand %p341, %p342
      %p344 = pneg %p343
      // Predicated region
      $region41: #{tpu_custom_call.1} parent=5 // pred_check
        _
      $region42: #{tpu_custom_call.1} parent=5 // pred_check_branch
        %346 = sbr.rel (%p343) target = $region44
      $region43: #{tpu_custom_call.1} parent=5 // pred_region
        %s347 = ssub.s32 %s22, 1
        %s348 = sand.u32 %s49, 1
        %s349 = scalar_lea.sflag [#allocation4], %s348
        %s350 = sand.u32 %s49, 1
        %s351 = smul.addr %s350, 128
        %s352 = scalar_lea.vmem [#allocation3], %s351
        // Predicated region
        $region45: #{tpu_custom_call.1} parent=43 // pred_check
          %p353 = pneg %p62
        $region46: #{tpu_custom_call.1} parent=43 // pred_check_branch
          %355 = sbr.rel (%p353) target = $region48
        $region47: #{tpu_custom_call.1} parent=43 // pred_region
          %356 = dma.done %s349, 2048
        $region48: #{tpu_custom_call.1} parent=43 // pred_fallthru
          _
        %s357 = sand.u32 %s27, 1
        %s358 = scalar_lea.sflag [#allocation7], %s357
        %s359 = sand.u32 %s85, 1
        %s360 = smul.addr %s359, 8
        %s361 = scalar_lea.vmem [#allocation6], %s360
        // Predicated region
        $region49: #{tpu_custom_call.1} parent=43 // pred_check
          %p362 = pneg %p98
        $region50: #{tpu_custom_call.1} parent=43 // pred_check_branch
          %364 = sbr.rel (%p362) target = $region52
        $region51: #{tpu_custom_call.1} parent=43 // pred_region
          %365 = dma.done %s358, 128
        $region52: #{tpu_custom_call.1} parent=43 // pred_fallthru
          _
        %s366 = sand.u32 %s27, 1
        %s367 = scalar_lea.sflag [#allocation7], %s366
        %s368 = sand.u32 %s121, 1
        %s369 = smul.addr %s368, 8
        %s370 = scalar_lea.vmem [#allocation8], %s369
        // Predicated region
        $region53: #{tpu_custom_call.1} parent=43 // pred_check
          %p371 = pneg %p134
        $region54: #{tpu_custom_call.1} parent=43 // pred_check_branch
          %373 = sbr.rel (%p371) target = $region56
        $region55: #{tpu_custom_call.1} parent=43 // pred_region
          %374 = dma.done %s367, 128
        $region56: #{tpu_custom_call.1} parent=43 // pred_fallthru
          _
        // Predicated region
        $region57: #{tpu_custom_call.1} parent=43 // pred_check
          %p375 = pneg %p155
        $region58: #{tpu_custom_call.1} parent=43 // pred_check_branch
          %377 = sbr.rel (%p375) target = $region60
        $region59: #{tpu_custom_call.1} parent=43 // pred_region
          %378 = dma.done [#allocation10], 9216
        $region60: #{tpu_custom_call.1} parent=43 // pred_fallthru
          _
        %s379 = sand.u32 %s49, 1
        %s380 = scalar_lea.sflag [#allocation4], %s379
        %s381 = sand.u32 %s49, 1
        %s382 = smul.addr %s381, 128
        %s383 = scalar_lea.vmem [#allocation3], %s382
        %p384 = pneg %p62
        %p385 = pneg %p59
        %s386 = sand.u32 %s27, 1
        %s387 = scalar_lea.sflag [#allocation7], %s386
        %s388 = sand.u32 %s85, 1
        %s389 = smul.addr %s388, 8
        %s390 = scalar_lea.vmem [#allocation6], %s389
        %p391 = pneg %p98
        %p392 = pneg %p95
        %s393 = sand.u32 %s27, 1
        %s394 = scalar_lea.sflag [#allocation7], %s393
        %s395 = sand.u32 %s121, 1
        %s396 = smul.addr %s395, 8
        %s397 = scalar_lea.vmem [#allocation8], %s396
        %p398 = pneg %p134
        %p399 = pneg %p131
        %p400 = pneg %p155
        %p401 = pneg %p152
        %p402 = pneg %p176
        %p403 = pneg %p173
        %p404 = pneg %p197
        %p405 = pneg %p194
        %p406 = pneg %p225
        %p407 = pneg %p222
        %s408 = sand.u32 %s212, 1
        %s409 = scalar_lea.sflag [#allocation5], %s408
        %s410 = sand.u32 %s212, 1
        %s411 = smul.addr %s410, 32
        %s412 = scalar_lea.vmem [#allocation11], %s411
        %s413 = smul.u32 16, %s32
        %s414 = smul.u32 %s32, 16
        %s415 = ssub.s32 %s414, 1
        %p416 = scmp.gt.s32.totalorder %s415, 0
        %s417 = scalar_select %p416, %s415, 0
        %s418 = smul.u32 %s32, 16
        %s419 = sadd.s32 %s418, 16
        %p420 = scmp.lt.s32.totalorder %s419, 15
        %s421 = scalar_select %p420, %s419, 15
        %s422 = smul.u32 8, %s32
        %vm424 = vcmask 1040384
        %vm425 = vsmask.f32 256
        %vm426 = vmand %vm424, %vm425
        %v427 = vld [vmem:[#allocation2] sm:$0x1]
        %v428 = vsel %vm426, 0, %v427
        %429 = vst [vmem:[#allocation2] sm:$0x1] %v428
        %v430 = vld [vmem:[#allocation2 + $0xc] sm:$0x1]
        %v431 = vsel %vm426, 0, %v430
        %432 = vst [vmem:[#allocation2 + $0xc] sm:$0x1] %v431
        %v433 = vld [vmem:[#allocation2 + $0x18] sm:$0x1]
        %v434 = vsel %vm426, 0, %v433
        %435 = vst [vmem:[#allocation2 + $0x18] sm:$0x1] %v434
        %v436 = vld [vmem:[#allocation2 + $0x24] sm:$0x1]
        %v437 = vsel %vm426, 0, %v436
        %438 = vst [vmem:[#allocation2 + $0x24] sm:$0x1] %v437
        %v439 = vld [vmem:[#allocation2 + $0x30] sm:$0x1]
        %v440 = vsel %vm426, 0, %v439
        %441 = vst [vmem:[#allocation2 + $0x30] sm:$0x1] %v440
        %v442 = vld [vmem:[#allocation2 + $0x3c] sm:$0x1]
        %v443 = vsel %vm426, 0, %v442
        %444 = vst [vmem:[#allocation2 + $0x3c] sm:$0x1] %v443
        %v445 = vld [vmem:[#allocation2 + $0x48] sm:$0x1]
        %v446 = vsel %vm426, 0, %v445
        %447 = vst [vmem:[#allocation2 + $0x48] sm:$0x1] %v446
        %v448 = vld [vmem:[#allocation2 + $0x54] sm:$0x1]
        %v449 = vsel %vm426, 0, %v448
        %450 = vst [vmem:[#allocation2 + $0x54] sm:$0x1] %v449
        %v451 = vld [vmem:[#allocation2 + $0x60] sm:$0x1]
        %v452 = vsel %vm426, 0, %v451
        %453 = vst [vmem:[#allocation2 + $0x60] sm:$0x1] %v452
        %v454 = vld [vmem:[#allocation2 + $0x6c] sm:$0x1]
        %v455 = vsel %vm426, 0, %v454
        %456 = vst [vmem:[#allocation2 + $0x6c] sm:$0x1] %v455
        %v457 = vld [vmem:[#allocation2 + $0x78] sm:$0x1]
        %v458 = vsel %vm426, 0, %v457
        %459 = vst [vmem:[#allocation2 + $0x78] sm:$0x1] %v458
        %v460 = vld [vmem:[#allocation2 + $0x84] sm:$0x1]
        %v461 = vsel %vm426, 0, %v460
        %462 = vst [vmem:[#allocation2 + $0x84] sm:$0x1] %v461
        %v463 = vld [vmem:[#allocation2 + $0x90] sm:$0x1]
        %v464 = vsel %vm426, 0, %v463
        %465 = vst [vmem:[#allocation2 + $0x90] sm:$0x1] %v464
        %v466 = vld [vmem:[#allocation2 + $0x9c] sm:$0x1]
        %v467 = vsel %vm426, 0, %v466
        %468 = vst [vmem:[#allocation2 + $0x9c] sm:$0x1] %v467
        %v469 = vld [vmem:[#allocation2 + $0xa8] sm:$0x1]
        %v470 = vsel %vm426, 0, %v469
        %471 = vst [vmem:[#allocation2 + $0xa8] sm:$0x1] %v470
        %v472 = vld [vmem:[#allocation2 + $0xb4] sm:$0x1]
        %v473 = vsel %vm426, 0, %v472
        %474 = vst [vmem:[#allocation2 + $0xb4] sm:$0x1] %v473
        %v475 = vld [vmem:[#allocation2 + $0xc0] sm:$0x1]
        %v476 = vsel %vm426, 0, %v475
        %477 = vst [vmem:[#allocation2 + $0xc0] sm:$0x1] %v476
        %v478 = vld [vmem:[#allocation2 + $0xcc] sm:$0x1]
        %v479 = vsel %vm426, 0, %v478
        %480 = vst [vmem:[#allocation2 + $0xcc] sm:$0x1] %v479
        %vm481 = vsmask.f32 7938
        %vm482 = vmand %vm424, %vm481
        %v483 = vld [vmem:[#allocation2 + $0x8] sm:$0x1]
        %v484 = vsel %vm482, 0, %v483
        %485 = vst [vmem:[#allocation2 + $0x8] sm:$0x1] %v484
        %v486 = vld [vmem:[#allocation2 + $0x14] sm:$0x1]
        %v487 = vsel %vm482, 0, %v486
        %488 = vst [vmem:[#allocation2 + $0x14] sm:$0x1] %v487
        %v489 = vld [vmem:[#allocation2 + $0x20] sm:$0x1]
        %v490 = vsel %vm482, 0, %v489
        %491 = vst [vmem:[#allocation2 + $0x20] sm:$0x1] %v490
        %v492 = vld [vmem:[#allocation2 + $0x2c] sm:$0x1]
        %v493 = vsel %vm482, 0, %v492
        %494 = vst [vmem:[#allocation2 + $0x2c] sm:$0x1] %v493
        %v495 = vld [vmem:[#allocation2 + $0x38] sm:$0x1]
        %v496 = vsel %vm482, 0, %v495
        %497 = vst [vmem:[#allocation2 + $0x38] sm:$0x1] %v496
        %v498 = vld [vmem:[#allocation2 + $0x44] sm:$0x1]
        %v499 = vsel %vm482, 0, %v498
        %500 = vst [vmem:[#allocation2 + $0x44] sm:$0x1] %v499
        %v501 = vld [vmem:[#allocation2 + $0x50] sm:$0x1]
        %v502 = vsel %vm482, 0, %v501
        %503 = vst [vmem:[#allocation2 + $0x50] sm:$0x1] %v502
        %v504 = vld [vmem:[#allocation2 + $0x5c] sm:$0x1]
        %v505 = vsel %vm482, 0, %v504
        %506 = vst [vmem:[#allocation2 + $0x5c] sm:$0x1] %v505
        %v507 = vld [vmem:[#allocation2 + $0x68] sm:$0x1]
        %v508 = vsel %vm482, 0, %v507
        %509 = vst [vmem:[#allocation2 + $0x68] sm:$0x1] %v508
        %v510 = vld [vmem:[#allocation2 + $0x74] sm:$0x1]
        %v511 = vsel %vm482, 0, %v510
        %512 = vst [vmem:[#allocation2 + $0x74] sm:$0x1] %v511
        %v513 = vld [vmem:[#allocation2 + $0x80] sm:$0x1]
        %v514 = vsel %vm482, 0, %v513
        %515 = vst [vmem:[#allocation2 + $0x80] sm:$0x1] %v514
        %v516 = vld [vmem:[#allocation2 + $0x8c] sm:$0x1]
        %v517 = vsel %vm482, 0, %v516
        %518 = vst [vmem:[#allocation2 + $0x8c] sm:$0x1] %v517
        %v519 = vld [vmem:[#allocation2 + $0x98] sm:$0x1]
        %v520 = vsel %vm482, 0, %v519
        %521 = vst [vmem:[#allocation2 + $0x98] sm:$0x1] %v520
        %v522 = vld [vmem:[#allocation2 + $0xa4] sm:$0x1]
        %v523 = vsel %vm482, 0, %v522
        %524 = vst [vmem:[#allocation2 + $0xa4] sm:$0x1] %v523
        %v525 = vld [vmem:[#allocation2 + $0xb0] sm:$0x1]
        %v526 = vsel %vm482, 0, %v525
        %527 = vst [vmem:[#allocation2 + $0xb0] sm:$0x1] %v526
        %v528 = vld [vmem:[#allocation2 + $0xbc] sm:$0x1]
        %v529 = vsel %vm482, 0, %v528
        %530 = vst [vmem:[#allocation2 + $0xbc] sm:$0x1] %v529
        %v531 = vld [vmem:[#allocation2 + $0xc8] sm:$0x1]
        %v532 = vsel %vm482, 0, %v531
        %533 = vst [vmem:[#allocation2 + $0xc8] sm:$0x1] %v532
        %v534 = vld [vmem:[#allocation2 + $0xd4] sm:$0x1]
        %v535 = vsel %vm482, 0, %v534
        %536 = vst [vmem:[#allocation2 + $0xd4] sm:$0x1] %v535
        %v537 = vld [vmem:[%s352] sm:$0xf]
        %v538 = vld [vmem:[%s352 + $0x4] sm:$0xf]
        %v539 = vld [vmem:[%s352 + $0x8] sm:$0xf]
        %v540 = vld [vmem:[%s352 + $0xc] sm:$0xf]
        %v541 = vld [vmem:[%s352 + $0x10] sm:$0xf]
        %v542 = vld [vmem:[%s352 + $0x14] sm:$0xf]
        %v543 = vld [vmem:[%s352 + $0x18] sm:$0xf]
        %v544 = vld [vmem:[%s352 + $0x1c] sm:$0xf]
        %v545 = vld [vmem:[%s352 + $0x20] sm:$0xf]
        %v546 = vld [vmem:[%s352 + $0x24] sm:$0xf]
        %v547 = vld [vmem:[%s352 + $0x28] sm:$0xf]
        %v548 = vld [vmem:[%s352 + $0x2c] sm:$0xf]
        %v549 = vld [vmem:[%s352 + $0x30] sm:$0xf]
        %v550 = vld [vmem:[%s352 + $0x34] sm:$0xf]
        %v551 = vld [vmem:[%s352 + $0x38] sm:$0xf]
        %v552 = vld [vmem:[%s352 + $0x3c] sm:$0xf]
        %v553 = vld [vmem:[%s352 + $0x40] sm:$0xf]
        %v554 = vld [vmem:[%s352 + $0x44] sm:$0xf]
        %v555 = vld [vmem:[%s352 + $0x48] sm:$0xf]
        %v556 = vld [vmem:[%s352 + $0x4c] sm:$0xf]
        %v557 = vld [vmem:[%s352 + $0x50] sm:$0xf]
        %v558 = vld [vmem:[%s352 + $0x54] sm:$0xf]
        %v559 = vld [vmem:[%s352 + $0x58] sm:$0xf]
        %v560 = vld [vmem:[%s352 + $0x5c] sm:$0xf]
        %v561 = vld [vmem:[%s352 + $0x60] sm:$0xf]
        %v562 = vld [vmem:[%s352 + $0x64] sm:$0xf]
        %v563 = vld [vmem:[%s352 + $0x68] sm:$0xf]
        %v564 = vld [vmem:[%s352 + $0x6c] sm:$0xf]
        %v565 = vld [vmem:[%s352 + $0x70] sm:$0xf]
        %v566 = vld [vmem:[%s352 + $0x74] sm:$0xf]
        %v567 = vld [vmem:[%s352 + $0x78] sm:$0xf]
        %v568 = vld [vmem:[%s352 + $0x7c] sm:$0xf]
        %vm569 = vsmask.f32 4368
        %vm570 = vmor %vm425, %vm569
        %v572 = vshrl.u32 %v537, 16
        %v574 = vrot.slane %v572, 7
        %v575 = vshll.u32 %v537, 16
        %v577 = vor.u32 %v574, %v575
        %v578 = vrot.slane %v574, 4
        %v580 = vshrl.u32 %v538, 16
        %v582 = vrot.slane %v580, 7
        %v583 = vshll.u32 %v538, 16
        %v585 = vor.u32 %v582, %v583
        %v586 = vsel %vm570, %v578, %v585
        %v587 = vrot.slane %v582, 4
        %v589 = vshrl.u32 %v539, 16
        %v591 = vrot.slane %v589, 7
        %v592 = vshll.u32 %v539, 16
        %v594 = vor.u32 %v591, %v592
        %v595 = vrot.slane %v591, 4
        %v597 = vshrl.u32 %v540, 16
        %v599 = vrot.slane %v597, 7
        %v600 = vshll.u32 %v540, 16
        %v602 = vor.u32 %v599, %v600
        %v603 = vsel %vm570, %v595, %v602
        %v604 = vrot.slane %v599, 4
        %v606 = vshrl.u32 %v541, 16
        %v608 = vrot.slane %v606, 7
        %v609 = vshll.u32 %v541, 16
        %v611 = vor.u32 %v608, %v609
        %v612 = vrot.slane %v608, 4
        %v614 = vshrl.u32 %v542, 16
        %v616 = vrot.slane %v614, 7
        %v617 = vshll.u32 %v542, 16
        %v619 = vor.u32 %v616, %v617
        %v620 = vsel %vm570, %v612, %v619
        %v621 = vrot.slane %v616, 4
        %v623 = vshrl.u32 %v543, 16
        %v625 = vrot.slane %v623, 7
        %v626 = vshll.u32 %v543, 16
        %v628 = vor.u32 %v625, %v626
        %v629 = vrot.slane %v625, 4
        %v631 = vshrl.u32 %v544, 16
        %v633 = vrot.slane %v631, 7
        %v634 = vshll.u32 %v544, 16
        %v636 = vor.u32 %v633, %v634
        %v637 = vsel %vm570, %v629, %v636
        %v638 = vrot.slane %v633, 4
        %v640 = vshrl.u32 %v545, 16
        %v642 = vrot.slane %v640, 7
        %v643 = vshll.u32 %v545, 16
        %v645 = vor.u32 %v642, %v643
        %v646 = vrot.slane %v642, 4
        %v648 = vshrl.u32 %v546, 16
        %v650 = vrot.slane %v648, 7
        %v651 = vshll.u32 %v546, 16
        %v653 = vor.u32 %v650, %v651
        %v654 = vsel %vm570, %v646, %v653
        %v655 = vrot.slane %v650, 4
        %v657 = vshrl.u32 %v547, 16
        %v659 = vrot.slane %v657, 7
        %v660 = vshll.u32 %v547, 16
        %v662 = vor.u32 %v659, %v660
        %v663 = vrot.slane %v659, 4
        %v665 = vshrl.u32 %v548, 16
        %v667 = vrot.slane %v665, 7
        %v668 = vshll.u32 %v548, 16
        %v670 = vor.u32 %v667, %v668
        %v671 = vsel %vm570, %v663, %v670
        %v672 = vrot.slane %v667, 4
        %v674 = vshrl.u32 %v549, 16
        %v676 = vrot.slane %v674, 7
        %v677 = vshll.u32 %v549, 16
        %v679 = vor.u32 %v676, %v677
        %v680 = vrot.slane %v676, 4
        %v682 = vshrl.u32 %v550, 16
        %v684 = vrot.slane %v682, 7
        %v685 = vshll.u32 %v550, 16
        %v687 = vor.u32 %v684, %v685
        %v688 = vsel %vm570, %v680, %v687
        %v689 = vrot.slane %v684, 4
        %v691 = vshrl.u32 %v551, 16
        %v693 = vrot.slane %v691, 7
        %v694 = vshll.u32 %v551, 16
        %v696 = vor.u32 %v693, %v694
        %v697 = vrot.slane %v693, 4
        %v699 = vshrl.u32 %v552, 16
        %v701 = vrot.slane %v699, 7
        %v702 = vshll.u32 %v552, 16
        %v704 = vor.u32 %v701, %v702
        %v705 = vsel %vm570, %v697, %v704
        %v706 = vrot.slane %v701, 4
        %v708 = vshrl.u32 %v553, 16
        %v710 = vrot.slane %v708, 7
        %v711 = vshll.u32 %v553, 16
        %v713 = vor.u32 %v710, %v711
        %v714 = vrot.slane %v710, 4
        %v716 = vshrl.u32 %v554, 16
        %v718 = vrot.slane %v716, 7
        %v719 = vshll.u32 %v554, 16
        %v721 = vor.u32 %v718, %v719
        %v722 = vsel %vm570, %v714, %v721
        %v723 = vrot.slane %v718, 4
        %v725 = vshrl.u32 %v555, 16
        %v727 = vrot.slane %v725, 7
        %v728 = vshll.u32 %v555, 16
        %v730 = vor.u32 %v727, %v728
        %v731 = vrot.slane %v727, 4
        %v733 = vshrl.u32 %v556, 16
        %v735 = vrot.slane %v733, 7
        %v736 = vshll.u32 %v556, 16
        %v738 = vor.u32 %v735, %v736
        %v739 = vsel %vm570, %v731, %v738
        %v740 = vrot.slane %v735, 4
        %v742 = vshrl.u32 %v557, 16
        %v744 = vrot.slane %v742, 7
        %v745 = vshll.u32 %v557, 16
        %v747 = vor.u32 %v744, %v745
        %v748 = vrot.slane %v744, 4
        %v750 = vshrl.u32 %v558, 16
        %v752 = vrot.slane %v750, 7
        %v753 = vshll.u32 %v558, 16
        %v755 = vor.u32 %v752, %v753
        %v756 = vsel %vm570, %v748, %v755
        %v757 = vrot.slane %v752, 4
        %v759 = vshrl.u32 %v559, 16
        %v761 = vrot.slane %v759, 7
        %v762 = vshll.u32 %v559, 16
        %v764 = vor.u32 %v761, %v762
        %v765 = vrot.slane %v761, 4
        %v767 = vshrl.u32 %v560, 16
        %v769 = vrot.slane %v767, 7
        %v770 = vshll.u32 %v560, 16
        %v772 = vor.u32 %v769, %v770
        %v773 = vsel %vm570, %v765, %v772
        %v774 = vrot.slane %v769, 4
        %v776 = vshrl.u32 %v561, 16
        %v778 = vrot.slane %v776, 7
        %v779 = vshll.u32 %v561, 16
        %v781 = vor.u32 %v778, %v779
        %v782 = vrot.slane %v778, 4
        %v784 = vshrl.u32 %v562, 16
        %v786 = vrot.slane %v784, 7
        %v787 = vshll.u32 %v562, 16
        %v789 = vor.u32 %v786, %v787
        %v790 = vsel %vm570, %v782, %v789
        %v791 = vrot.slane %v786, 4
        %v793 = vshrl.u32 %v563, 16
        %v795 = vrot.slane %v793, 7
        %v796 = vshll.u32 %v563, 16
        %v798 = vor.u32 %v795, %v796
        %v799 = vrot.slane %v795, 4
        %v801 = vshrl.u32 %v564, 16
        %v803 = vrot.slane %v801, 7
        %v804 = vshll.u32 %v564, 16
        %v806 = vor.u32 %v803, %v804
        %v807 = vsel %vm570, %v799, %v806
        %v808 = vrot.slane %v803, 4
        %v810 = vshrl.u32 %v565, 16
        %v812 = vrot.slane %v810, 7
        %v813 = vshll.u32 %v565, 16
        %v815 = vor.u32 %v812, %v813
        %v816 = vrot.slane %v812, 4
        %v818 = vshrl.u32 %v566, 16
        %v820 = vrot.slane %v818, 7
        %v821 = vshll.u32 %v566, 16
        %v823 = vor.u32 %v820, %v821
        %v824 = vsel %vm570, %v816, %v823
        %v825 = vrot.slane %v820, 4
        %v827 = vshrl.u32 %v567, 16
        %v829 = vrot.slane %v827, 7
        %v830 = vshll.u32 %v567, 16
        %v832 = vor.u32 %v829, %v830
        %v833 = vrot.slane %v829, 4
        %v835 = vshrl.u32 %v568, 16
        %v837 = vrot.slane %v835, 7
        %v838 = vshll.u32 %v568, 16
        %v840 = vor.u32 %v837, %v838
        %v841 = vsel %vm570, %v833, %v840
        %v842 = vrot.slane %v837, 4
        %s891 = scalar_lea.vmem [#allocation2], 12
        %vm892 = vcmask 1043456
        %vm893 = vmand %vm892, %vm481
        %v894 = vld [vmem:[%s891] sm:$0xf]
        %v895 = vsel %vm893, %v577, %v894
        %896 = vst [vmem:[%s891] sm:$0xf] %v895
        %897 = vst [vmem:[%s891 + $0x4] sm:$0xf] %v586
        %v898 = vld [vmem:[%s891 + $0x8] sm:$0x1]
        %v899 = vsel %vm426, %v587, %v898
        %900 = vst [vmem:[%s891 + $0x8] sm:$0x1] %v899
        %v901 = vld [vmem:[%s891 + $0xc] sm:$0xf]
        %v902 = vsel %vm893, %v594, %v901
        %903 = vst [vmem:[%s891 + $0xc] sm:$0xf] %v902
        %904 = vst [vmem:[%s891 + $0x10] sm:$0xf] %v603
        %v905 = vld [vmem:[%s891 + $0x14] sm:$0x1]
        %v906 = vsel %vm426, %v604, %v905
        %907 = vst [vmem:[%s891 + $0x14] sm:$0x1] %v906
        %v908 = vld [vmem:[%s891 + $0x18] sm:$0xf]
        %v909 = vsel %vm893, %v611, %v908
        %910 = vst [vmem:[%s891 + $0x18] sm:$0xf] %v909
        %911 = vst [vmem:[%s891 + $0x1c] sm:$0xf] %v620
        %v912 = vld [vmem:[%s891 + $0x20] sm:$0x1]
        %v913 = vsel %vm426, %v621, %v912
        %914 = vst [vmem:[%s891 + $0x20] sm:$0x1] %v913
        %v915 = vld [vmem:[%s891 + $0x24] sm:$0xf]
        %v916 = vsel %vm893, %v628, %v915
        %917 = vst [vmem:[%s891 + $0x24] sm:$0xf] %v916
        %918 = vst [vmem:[%s891 + $0x28] sm:$0xf] %v637
        %v919 = vld [vmem:[%s891 + $0x2c] sm:$0x1]
        %v920 = vsel %vm426, %v638, %v919
        %921 = vst [vmem:[%s891 + $0x2c] sm:$0x1] %v920
        %v922 = vld [vmem:[%s891 + $0x30] sm:$0xf]
        %v923 = vsel %vm893, %v645, %v922
        %924 = vst [vmem:[%s891 + $0x30] sm:$0xf] %v923
        %925 = vst [vmem:[%s891 + $0x34] sm:$0xf] %v654
        %v926 = vld [vmem:[%s891 + $0x38] sm:$0x1]
        %v927 = vsel %vm426, %v655, %v926
        %928 = vst [vmem:[%s891 + $0x38] sm:$0x1] %v927
        %v929 = vld [vmem:[%s891 + $0x3c] sm:$0xf]
        %v930 = vsel %vm893, %v662, %v929
        %931 = vst [vmem:[%s891 + $0x3c] sm:$0xf] %v930
        %932 = vst [vmem:[%s891 + $0x40] sm:$0xf] %v671
        %v933 = vld [vmem:[%s891 + $0x44] sm:$0x1]
        %v934 = vsel %vm426, %v672, %v933
        %935 = vst [vmem:[%s891 + $0x44] sm:$0x1] %v934
        %v936 = vld [vmem:[%s891 + $0x48] sm:$0xf]
        %v937 = vsel %vm893, %v679, %v936
        %938 = vst [vmem:[%s891 + $0x48] sm:$0xf] %v937
        %939 = vst [vmem:[%s891 + $0x4c] sm:$0xf] %v688
        %v940 = vld [vmem:[%s891 + $0x50] sm:$0x1]
        %v941 = vsel %vm426, %v689, %v940
        %942 = vst [vmem:[%s891 + $0x50] sm:$0x1] %v941
        %v943 = vld [vmem:[%s891 + $0x54] sm:$0xf]
        %v944 = vsel %vm893, %v696, %v943
        %945 = vst [vmem:[%s891 + $0x54] sm:$0xf] %v944
        %946 = vst [vmem:[%s891 + $0x58] sm:$0xf] %v705
        %v947 = vld [vmem:[%s891 + $0x5c] sm:$0x1]
        %v948 = vsel %vm426, %v706, %v947
        %949 = vst [vmem:[%s891 + $0x5c] sm:$0x1] %v948
        %v950 = vld [vmem:[%s891 + $0x60] sm:$0xf]
        %v951 = vsel %vm893, %v713, %v950
        %952 = vst [vmem:[%s891 + $0x60] sm:$0xf] %v951
        %953 = vst [vmem:[%s891 + $0x64] sm:$0xf] %v722
        %v954 = vld [vmem:[%s891 + $0x68] sm:$0x1]
        %v955 = vsel %vm426, %v723, %v954
        %956 = vst [vmem:[%s891 + $0x68] sm:$0x1] %v955
        %v957 = vld [vmem:[%s891 + $0x6c] sm:$0xf]
        %v958 = vsel %vm893, %v730, %v957
        %959 = vst [vmem:[%s891 + $0x6c] sm:$0xf] %v958
        %960 = vst [vmem:[%s891 + $0x70] sm:$0xf] %v739
        %v961 = vld [vmem:[%s891 + $0x74] sm:$0x1]
        %v962 = vsel %vm426, %v740, %v961
        %963 = vst [vmem:[%s891 + $0x74] sm:$0x1] %v962
        %v964 = vld [vmem:[%s891 + $0x78] sm:$0xf]
        %v965 = vsel %vm893, %v747, %v964
        %966 = vst [vmem:[%s891 + $0x78] sm:$0xf] %v965
        %967 = vst [vmem:[%s891 + $0x7c] sm:$0xf] %v756
        %v968 = vld [vmem:[%s891 + $0x80] sm:$0x1]
        %v969 = vsel %vm426, %v757, %v968
        %970 = vst [vmem:[%s891 + $0x80] sm:$0x1] %v969
        %v971 = vld [vmem:[%s891 + $0x84] sm:$0xf]
        %v972 = vsel %vm893, %v764, %v971
        %973 = vst [vmem:[%s891 + $0x84] sm:$0xf] %v972
        %974 = vst [vmem:[%s891 + $0x88] sm:$0xf] %v773
        %v975 = vld [vmem:[%s891 + $0x8c] sm:$0x1]
        %v976 = vsel %vm426, %v774, %v975
        %977 = vst [vmem:[%s891 + $0x8c] sm:$0x1] %v976
        %v978 = vld [vmem:[%s891 + $0x90] sm:$0xf]
        %v979 = vsel %vm893, %v781, %v978
        %980 = vst [vmem:[%s891 + $0x90] sm:$0xf] %v979
        %981 = vst [vmem:[%s891 + $0x94] sm:$0xf] %v790
        %v982 = vld [vmem:[%s891 + $0x98] sm:$0x1]
        %v983 = vsel %vm426, %v791, %v982
        %984 = vst [vmem:[%s891 + $0x98] sm:$0x1] %v983
        %v985 = vld [vmem:[%s891 + $0x9c] sm:$0xf]
        %v986 = vsel %vm893, %v798, %v985
        %987 = vst [vmem:[%s891 + $0x9c] sm:$0xf] %v986
        %988 = vst [vmem:[%s891 + $0xa0] sm:$0xf] %v807
        %v989 = vld [vmem:[%s891 + $0xa4] sm:$0x1]
        %v990 = vsel %vm426, %v808, %v989
        %991 = vst [vmem:[%s891 + $0xa4] sm:$0x1] %v990
        %v992 = vld [vmem:[%s891 + $0xa8] sm:$0xf]
        %v993 = vsel %vm893, %v815, %v992
        %994 = vst [vmem:[%s891 + $0xa8] sm:$0xf] %v993
        %995 = vst [vmem:[%s891 + $0xac] sm:$0xf] %v824
        %v996 = vld [vmem:[%s891 + $0xb0] sm:$0x1]
        %v997 = vsel %vm426, %v825, %v996
        %998 = vst [vmem:[%s891 + $0xb0] sm:$0x1] %v997
        %v999 = vld [vmem:[%s891 + $0xb4] sm:$0xf]
        %v1000 = vsel %vm893, %v832, %v999
        %1001 = vst [vmem:[%s891 + $0xb4] sm:$0xf] %v1000
        %1002 = vst [vmem:[%s891 + $0xb8] sm:$0xf] %v841
        %v1003 = vld [vmem:[%s891 + $0xbc] sm:$0x1]
        %v1004 = vsel %vm426, %v842, %v1003
        %1005 = vst [vmem:[%s891 + $0xbc] sm:$0x1] %v1004
        %p1006 = scmp.gt.s32.totalorder %s32, 0
        %s1007 = scalar_select %p1006, 1.0, 0.0
        %p1009 = scmp.ne.f32.partialorder %s1007, %s1007
        %s1010 = sshrl.u32 %s1007, 16
        %s1011 = sand.u32 %s1010, 1
        %s1012 = sadd.s32 32767, %s1011
        %s1013 = sadd.s32 %s1007, %s1012
        %s1014 = sand.u32 %s1013, 4294901760
        %s1015 = scalar_select %p1009, 2143289344, %s1014
        %s1017 = sshrl.u32 %s1015, 16
        %p1018 = scmp.lt.s32.totalorder %s32, 0
        %s1019 = scalar_select %p1018, 1.0, 0.0
        %p1021 = scmp.ne.f32.partialorder %s1019, %s1019
        %s1022 = sshrl.u32 %s1019, 16
        %s1023 = sand.u32 %s1022, 1
        %s1024 = sadd.s32 32767, %s1023
        %s1025 = sadd.s32 %s1019, %s1024
        %s1026 = sand.u32 %s1025, 4294901760
        %s1027 = scalar_select %p1021, 2143289344, %s1026
        %s1029 = sshrl.u32 %s1027, 16
        %v1030 = vld [vmem:[%s361] sm:$0xf]
        %v1031 = vld [vmem:[%s361 + $0x4] sm:$0xf]
        %s1032 = sshll.u32 %s1017, 16
        %s1033 = sor.u32 %s1017, %s1032
        %v1034 = vstv %s1033
        %v1036 = vmul.bf16 %v1030, %v1034
        %v1037 = vmul.bf16 %v1031, %v1034
        %v1039 = vshrl.u32 %v1036, 16
        %v1041 = vrot.slane %v1039, 7
        %v1042 = vshll.u32 %v1036, 16
        %v1044 = vor.u32 %v1041, %v1042
        %v1045 = vrot.slane %v1041, 4
        %v1047 = vshrl.u32 %v1037, 16
        %v1049 = vrot.slane %v1047, 7
        %v1050 = vshll.u32 %v1037, 16
        %v1052 = vor.u32 %v1049, %v1050
        %v1053 = vsel %vm570, %v1045, %v1052
        %v1054 = vrot.slane %v1049, 4
        %v1058 = vld [vmem:[#allocation2] sm:$0xf]
        %v1059 = vsel %vm893, %v1044, %v1058
        %1060 = vst [vmem:[#allocation2] sm:$0xf] %v1059
        %1061 = vst [vmem:[#allocation2 + $0x4] sm:$0xf] %v1053
        %v1062 = vld [vmem:[#allocation2 + $0x8] sm:$0x1]
        %v1063 = vsel %vm426, %v1054, %v1062
        %1064 = vst [vmem:[#allocation2 + $0x8] sm:$0x1] %v1063
        %v1065 = vld [vmem:[%s370] sm:$0xf]
        %v1066 = vld [vmem:[%s370 + $0x4] sm:$0xf]
        %s1067 = sshll.u32 %s1029, 16
        %s1068 = sor.u32 %s1029, %s1067
        %v1069 = vstv %s1068
        %v1071 = vmul.bf16 %v1065, %v1069
        %v1072 = vmul.bf16 %v1066, %v1069
        %v1074 = vshrl.u32 %v1071, 16
        %v1076 = vrot.slane %v1074, 7
        %v1077 = vshll.u32 %v1071, 16
        %v1079 = vor.u32 %v1076, %v1077
        %v1080 = vrot.slane %v1076, 4
        %v1082 = vshrl.u32 %v1072, 16
        %v1084 = vrot.slane %v1082, 7
        %v1085 = vshll.u32 %v1072, 16
        %v1087 = vor.u32 %v1084, %v1085
        %v1088 = vsel %vm570, %v1080, %v1087
        %v1089 = vrot.slane %v1084, 4
        %s1093 = scalar_lea.vmem [#allocation2], 204
        %v1094 = vld [vmem:[%s1093] sm:$0xf]
        %v1095 = vsel %vm893, %v1079, %v1094
        %1096 = vst [vmem:[%s1093] sm:$0xf] %v1095
        %1097 = vst [vmem:[%s1093 + $0x4] sm:$0xf] %v1088
        %v1098 = vld [vmem:[%s1093 + $0x8] sm:$0x1]
        %v1099 = vsel %vm426, %v1089, %v1098
        %1100 = vst [vmem:[%s1093 + $0x8] sm:$0x1] %v1099
        %v1101 = vld [vmem:[#allocation2] sm:$0xf]
        %v1102 = vld [vmem:[#allocation2 + $0x4] sm:$0xf]
        %v1103 = vld [vmem:[#allocation2 + $0xc] sm:$0xf]
        %v1104 = vld [vmem:[#allocation2 + $0x10] sm:$0xf]
        %v1105 = vld [vmem:[#allocation2 + $0x18] sm:$0xf]
        %v1106 = vld [vmem:[#allocation2 + $0x1c] sm:$0xf]
        %v1107 = vld [vmem:[#allocation2 + $0x24] sm:$0xf]
        %v1108 = vld [vmem:[#allocation2 + $0x28] sm:$0xf]
        %v1109 = vld [vmem:[#allocation2 + $0x30] sm:$0xf]
        %v1110 = vld [vmem:[#allocation2 + $0x34] sm:$0xf]
        %v1111 = vld [vmem:[#allocation2 + $0x3c] sm:$0xf]
        %v1112 = vld [vmem:[#allocation2 + $0x40] sm:$0xf]
        %v1113 = vld [vmem:[#allocation2 + $0x48] sm:$0xf]
        %v1114 = vld [vmem:[#allocation2 + $0x4c] sm:$0xf]
        %v1115 = vld [vmem:[#allocation2 + $0x54] sm:$0xf]
        %v1116 = vld [vmem:[#allocation2 + $0x58] sm:$0xf]
        %v1117 = vld [vmem:[#allocation2 + $0x60] sm:$0xf]
        %v1118 = vld [vmem:[#allocation2 + $0x64] sm:$0xf]
        %v1119 = vld [vmem:[#allocation2 + $0x6c] sm:$0xf]
        %v1120 = vld [vmem:[#allocation2 + $0x70] sm:$0xf]
        %v1121 = vld [vmem:[#allocation2 + $0x78] sm:$0xf]
        %v1122 = vld [vmem:[#allocation2 + $0x7c] sm:$0xf]
        %v1123 = vld [vmem:[#allocation2 + $0x84] sm:$0xf]
        %v1124 = vld [vmem:[#allocation2 + $0x88] sm:$0xf]
        %v1125 = vld [vmem:[#allocation2 + $0x90] sm:$0xf]
        %v1126 = vld [vmem:[#allocation2 + $0x94] sm:$0xf]
        %v1127 = vld [vmem:[#allocation2 + $0x9c] sm:$0xf]
        %v1128 = vld [vmem:[#allocation2 + $0xa0] sm:$0xf]
        %v1129 = vld [vmem:[#allocation2 + $0xa8] sm:$0xf]
        %v1130 = vld [vmem:[#allocation2 + $0xac] sm:$0xf]
        %v1131 = vld [vmem:[#allocation2 + $0xb4] sm:$0xf]
        %v1132 = vld [vmem:[#allocation2 + $0xb8] sm:$0xf]
        %v1133 = vld [vmem:[#allocation9] sm:$0xf]
        %v1134 = vld [vmem:[#allocation9 + $0x4] sm:$0xf]
        %v1135 = vld [vmem:[#allocation9 + $0x8] sm:$0xf]
        %v1136 = vld [vmem:[#allocation9 + $0xc] sm:$0xf]
        %v1137 = vld [vmem:[#allocation9 + $0x10] sm:$0xf]
        %v1138 = vld [vmem:[#allocation9 + $0x14] sm:$0xf]
        %v1139 = vld [vmem:[#allocation9 + $0x18] sm:$0xf]
        %v1140 = vld [vmem:[#allocation9 + $0x1c] sm:$0xf]
        %v1141 = vld [vmem:[#allocation9 + $0x20] sm:$0xf]
        %v1142 = vld [vmem:[#allocation9 + $0x24] sm:$0xf]
        %v1143 = vld [vmem:[#allocation9 + $0x28] sm:$0xf]
        %v1144 = vld [vmem:[#allocation9 + $0x2c] sm:$0xf]
        %v1145 = vld [vmem:[#allocation9 + $0x30] sm:$0xf]
        %v1146 = vld [vmem:[#allocation9 + $0x34] sm:$0xf]
        %v1147 = vld [vmem:[#allocation9 + $0x38] sm:$0xf]
        %v1148 = vld [vmem:[#allocation9 + $0x3c] sm:$0xf]
        %v1149 = vld [vmem:[#allocation2 + $0x8] sm:$0x1]
        %v1150 = vld [vmem:[#allocation2 + $0x14] sm:$0x1]
        %v1151 = vld [vmem:[#allocation2 + $0x20] sm:$0x1]
        %v1152 = vld [vmem:[#allocation2 + $0x2c] sm:$0x1]
        %v1153 = vld [vmem:[#allocation2 + $0x38] sm:$0x1]
        %v1154 = vld [vmem:[#allocation2 + $0x44] sm:$0x1]
        %v1155 = vld [vmem:[#allocation2 + $0x50] sm:$0x1]
        %v1156 = vld [vmem:[#allocation2 + $0x5c] sm:$0x1]
        %v1157 = vld [vmem:[#allocation2 + $0x68] sm:$0x1]
        %v1158 = vld [vmem:[#allocation2 + $0x74] sm:$0x1]
        %v1159 = vld [vmem:[#allocation2 + $0x80] sm:$0x1]
        %v1160 = vld [vmem:[#allocation2 + $0x8c] sm:$0x1]
        %v1161 = vld [vmem:[#allocation2 + $0x98] sm:$0x1]
        %v1162 = vld [vmem:[#allocation2 + $0xa4] sm:$0x1]
        %v1163 = vld [vmem:[#allocation2 + $0xb0] sm:$0x1]
        %v1164 = vld [vmem:[#allocation2 + $0xbc] sm:$0x1]
        %vm1165 = vsmask.f32 3328
        %vm1166 = vsmask.f32 7440
        %vm1167 = vmor %vm1165, %vm1166
        %v1169 = vshrl.u32 %v1101, 16
        %v1171 = vrot.slane %v1169, 4
        %v1172 = vshll.u32 %v1101, 16
        %v1174 = vrot.slane %v1172, 5
        %v1175 = vor.u32 %v1171, %v1174
        %v1176 = vrot.slane %v1175, 4
        %v1178 = vshll.u32 %v1102, 16
        %v1180 = vrot.slane %v1178, 5
        %v1181 = vsel %vm1167, %v1176, %v1180
        %v1182 = vshrl.u32 %v1102, 16
        %v1184 = vrot.slane %v1182, 4
        %v1185 = vor.u32 %v1184, %v1180
        %v1186 = vrot.slane %v1185, 4
        %v1188 = vshll.u32 %v1149, 16
        %v1190 = vrot.slane %v1188, 5
        %v1191 = vsel %vm1167, %v1186, %v1190
        %v1193 = vshrl.u32 %v1103, 16
        %v1195 = vrot.slane %v1193, 4
        %v1196 = vshll.u32 %v1103, 16
        %v1198 = vrot.slane %v1196, 5
        %v1199 = vor.u32 %v1195, %v1198
        %v1200 = vrot.slane %v1199, 4
        %v1202 = vshll.u32 %v1104, 16
        %v1204 = vrot.slane %v1202, 5
        %v1205 = vsel %vm1167, %v1200, %v1204
        %v1206 = vshrl.u32 %v1104, 16
        %v1208 = vrot.slane %v1206, 4
        %v1209 = vor.u32 %v1208, %v1204
        %v1210 = vrot.slane %v1209, 4
        %v1212 = vshll.u32 %v1150, 16
        %v1214 = vrot.slane %v1212, 5
        %v1215 = vsel %vm1167, %v1210, %v1214
        %v1217 = vshrl.u32 %v1105, 16
        %v1219 = vrot.slane %v1217, 4
        %v1220 = vshll.u32 %v1105, 16
        %v1222 = vrot.slane %v1220, 5
        %v1223 = vor.u32 %v1219, %v1222
        %v1224 = vrot.slane %v1223, 4
        %v1226 = vshll.u32 %v1106, 16
        %v1228 = vrot.slane %v1226, 5
        %v1229 = vsel %vm1167, %v1224, %v1228
        %v1230 = vshrl.u32 %v1106, 16
        %v1232 = vrot.slane %v1230, 4
        %v1233 = vor.u32 %v1232, %v1228
        %v1234 = vrot.slane %v1233, 4
        %v1236 = vshll.u32 %v1151, 16
        %v1238 = vrot.slane %v1236, 5
        %v1239 = vsel %vm1167, %v1234, %v1238
        %v1241 = vshrl.u32 %v1107, 16
        %v1243 = vrot.slane %v1241, 4
        %v1244 = vshll.u32 %v1107, 16
        %v1246 = vrot.slane %v1244, 5
        %v1247 = vor.u32 %v1243, %v1246
        %v1248 = vrot.slane %v1247, 4
        %v1250 = vshll.u32 %v1108, 16
        %v1252 = vrot.slane %v1250, 5
        %v1253 = vsel %vm1167, %v1248, %v1252
        %v1254 = vshrl.u32 %v1108, 16
        %v1256 = vrot.slane %v1254, 4
        %v1257 = vor.u32 %v1256, %v1252
        %v1258 = vrot.slane %v1257, 4
        %v1260 = vshll.u32 %v1152, 16
        %v1262 = vrot.slane %v1260, 5
        %v1263 = vsel %vm1167, %v1258, %v1262
        %v1265 = vshrl.u32 %v1109, 16
        %v1267 = vrot.slane %v1265, 4
        %v1268 = vshll.u32 %v1109, 16
        %v1270 = vrot.slane %v1268, 5
        %v1271 = vor.u32 %v1267, %v1270
        %v1272 = vrot.slane %v1271, 4
        %v1274 = vshll.u32 %v1110, 16
        %v1276 = vrot.slane %v1274, 5
        %v1277 = vsel %vm1167, %v1272, %v1276
        %v1278 = vshrl.u32 %v1110, 16
        %v1280 = vrot.slane %v1278, 4
        %v1281 = vor.u32 %v1280, %v1276
        %v1282 = vrot.slane %v1281, 4
        %v1284 = vshll.u32 %v1153, 16
        %v1286 = vrot.slane %v1284, 5
        %v1287 = vsel %vm1167, %v1282, %v1286
        %v1289 = vshrl.u32 %v1111, 16
        %v1291 = vrot.slane %v1289, 4
        %v1292 = vshll.u32 %v1111, 16
        %v1294 = vrot.slane %v1292, 5
        %v1295 = vor.u32 %v1291, %v1294
        %v1296 = vrot.slane %v1295, 4
        %v1298 = vshll.u32 %v1112, 16
        %v1300 = vrot.slane %v1298, 5
        %v1301 = vsel %vm1167, %v1296, %v1300
        %v1302 = vshrl.u32 %v1112, 16
        %v1304 = vrot.slane %v1302, 4
        %v1305 = vor.u32 %v1304, %v1300
        %v1306 = vrot.slane %v1305, 4
        %v1308 = vshll.u32 %v1154, 16
        %v1310 = vrot.slane %v1308, 5
        %v1311 = vsel %vm1167, %v1306, %v1310
        %v1313 = vshrl.u32 %v1113, 16
        %v1315 = vrot.slane %v1313, 4
        %v1316 = vshll.u32 %v1113, 16
        %v1318 = vrot.slane %v1316, 5
        %v1319 = vor.u32 %v1315, %v1318
        %v1320 = vrot.slane %v1319, 4
        %v1322 = vshll.u32 %v1114, 16
        %v1324 = vrot.slane %v1322, 5
        %v1325 = vsel %vm1167, %v1320, %v1324
        %v1326 = vshrl.u32 %v1114, 16
        %v1328 = vrot.slane %v1326, 4
        %v1329 = vor.u32 %v1328, %v1324
        %v1330 = vrot.slane %v1329, 4
        %v1332 = vshll.u32 %v1155, 16
        %v1334 = vrot.slane %v1332, 5
        %v1335 = vsel %vm1167, %v1330, %v1334
        %v1337 = vshrl.u32 %v1115, 16
        %v1339 = vrot.slane %v1337, 4
        %v1340 = vshll.u32 %v1115, 16
        %v1342 = vrot.slane %v1340, 5
        %v1343 = vor.u32 %v1339, %v1342
        %v1344 = vrot.slane %v1343, 4
        %v1346 = vshll.u32 %v1116, 16
        %v1348 = vrot.slane %v1346, 5
        %v1349 = vsel %vm1167, %v1344, %v1348
        %v1350 = vshrl.u32 %v1116, 16
        %v1352 = vrot.slane %v1350, 4
        %v1353 = vor.u32 %v1352, %v1348
        %v1354 = vrot.slane %v1353, 4
        %v1356 = vshll.u32 %v1156, 16
        %v1358 = vrot.slane %v1356, 5
        %v1359 = vsel %vm1167, %v1354, %v1358
        %v1361 = vshrl.u32 %v1117, 16
        %v1363 = vrot.slane %v1361, 4
        %v1364 = vshll.u32 %v1117, 16
        %v1366 = vrot.slane %v1364, 5
        %v1367 = vor.u32 %v1363, %v1366
        %v1368 = vrot.slane %v1367, 4
        %v1370 = vshll.u32 %v1118, 16
        %v1372 = vrot.slane %v1370, 5
        %v1373 = vsel %vm1167, %v1368, %v1372
        %v1374 = vshrl.u32 %v1118, 16
        %v1376 = vrot.slane %v1374, 4
        %v1377 = vor.u32 %v1376, %v1372
        %v1378 = vrot.slane %v1377, 4
        %v1380 = vshll.u32 %v1157, 16
        %v1382 = vrot.slane %v1380, 5
        %v1383 = vsel %vm1167, %v1378, %v1382
        %v1385 = vshrl.u32 %v1119, 16
        %v1387 = vrot.slane %v1385, 4
        %v1388 = vshll.u32 %v1119, 16
        %v1390 = vrot.slane %v1388, 5
        %v1391 = vor.u32 %v1387, %v1390
        %v1392 = vrot.slane %v1391, 4
        %v1394 = vshll.u32 %v1120, 16
        %v1396 = vrot.slane %v1394, 5
        %v1397 = vsel %vm1167, %v1392, %v1396
        %v1398 = vshrl.u32 %v1120, 16
        %v1400 = vrot.slane %v1398, 4
        %v1401 = vor.u32 %v1400, %v1396
        %v1402 = vrot.slane %v1401, 4
        %v1404 = vshll.u32 %v1158, 16
        %v1406 = vrot.slane %v1404, 5
        %v1407 = vsel %vm1167, %v1402, %v1406
        %v1409 = vshrl.u32 %v1121, 16
        %v1411 = vrot.slane %v1409, 4
        %v1412 = vshll.u32 %v1121, 16
        %v1414 = vrot.slane %v1412, 5
        %v1415 = vor.u32 %v1411, %v1414
        %v1416 = vrot.slane %v1415, 4
        %v1418 = vshll.u32 %v1122, 16
        %v1420 = vrot.slane %v1418, 5
        %v1421 = vsel %vm1167, %v1416, %v1420
        %v1422 = vshrl.u32 %v1122, 16
        %v1424 = vrot.slane %v1422, 4
        %v1425 = vor.u32 %v1424, %v1420
        %v1426 = vrot.slane %v1425, 4
        %v1428 = vshll.u32 %v1159, 16
        %v1430 = vrot.slane %v1428, 5
        %v1431 = vsel %vm1167, %v1426, %v1430
        %v1433 = vshrl.u32 %v1123, 16
        %v1435 = vrot.slane %v1433, 4
        %v1436 = vshll.u32 %v1123, 16
        %v1438 = vrot.slane %v1436, 5
        %v1439 = vor.u32 %v1435, %v1438
        %v1440 = vrot.slane %v1439, 4
        %v1442 = vshll.u32 %v1124, 16
        %v1444 = vrot.slane %v1442, 5
        %v1445 = vsel %vm1167, %v1440, %v1444
        %v1446 = vshrl.u32 %v1124, 16
        %v1448 = vrot.slane %v1446, 4
        %v1449 = vor.u32 %v1448, %v1444
        %v1450 = vrot.slane %v1449, 4
        %v1452 = vshll.u32 %v1160, 16
        %v1454 = vrot.slane %v1452, 5
        %v1455 = vsel %vm1167, %v1450, %v1454
        %v1457 = vshrl.u32 %v1125, 16
        %v1459 = vrot.slane %v1457, 4
        %v1460 = vshll.u32 %v1125, 16
        %v1462 = vrot.slane %v1460, 5
        %v1463 = vor.u32 %v1459, %v1462
        %v1464 = vrot.slane %v1463, 4
        %v1466 = vshll.u32 %v1126, 16
        %v1468 = vrot.slane %v1466, 5
        %v1469 = vsel %vm1167, %v1464, %v1468
        %v1470 = vshrl.u32 %v1126, 16
        %v1472 = vrot.slane %v1470, 4
        %v1473 = vor.u32 %v1472, %v1468
        %v1474 = vrot.slane %v1473, 4
        %v1476 = vshll.u32 %v1161, 16
        %v1478 = vrot.slane %v1476, 5
        %v1479 = vsel %vm1167, %v1474, %v1478
        %v1481 = vshrl.u32 %v1127, 16
        %v1483 = vrot.slane %v1481, 4
        %v1484 = vshll.u32 %v1127, 16
        %v1486 = vrot.slane %v1484, 5
        %v1487 = vor.u32 %v1483, %v1486
        %v1488 = vrot.slane %v1487, 4
        %v1490 = vshll.u32 %v1128, 16
        %v1492 = vrot.slane %v1490, 5
        %v1493 = vsel %vm1167, %v1488, %v1492
        %v1494 = vshrl.u32 %v1128, 16
        %v1496 = vrot.slane %v1494, 4
        %v1497 = vor.u32 %v1496, %v1492
        %v1498 = vrot.slane %v1497, 4
        %v1500 = vshll.u32 %v1162, 16
        %v1502 = vrot.slane %v1500, 5
        %v1503 = vsel %vm1167, %v1498, %v1502
        %v1505 = vshrl.u32 %v1129, 16
        %v1507 = vrot.slane %v1505, 4
        %v1508 = vshll.u32 %v1129, 16
        %v1510 = vrot.slane %v1508, 5
        %v1511 = vor.u32 %v1507, %v1510
        %v1512 = vrot.slane %v1511, 4
        %v1514 = vshll.u32 %v1130, 16
        %v1516 = vrot.slane %v1514, 5
        %v1517 = vsel %vm1167, %v1512, %v1516
        %v1518 = vshrl.u32 %v1130, 16
        %v1520 = vrot.slane %v1518, 4
        %v1521 = vor.u32 %v1520, %v1516
        %v1522 = vrot.slane %v1521, 4
        %v1524 = vshll.u32 %v1163, 16
        %v1526 = vrot.slane %v1524, 5
        %v1527 = vsel %vm1167, %v1522, %v1526
        %v1529 = vshrl.u32 %v1131, 16
        %v1531 = vrot.slane %v1529, 4
        %v1532 = vshll.u32 %v1131, 16
        %v1534 = vrot.slane %v1532, 5
        %v1535 = vor.u32 %v1531, %v1534
        %v1536 = vrot.slane %v1535, 4
        %v1538 = vshll.u32 %v1132, 16
        %v1540 = vrot.slane %v1538, 5
        %v1541 = vsel %vm1167, %v1536, %v1540
        %v1542 = vshrl.u32 %v1132, 16
        %v1544 = vrot.slane %v1542, 4
        %v1545 = vor.u32 %v1544, %v1540
        %v1546 = vrot.slane %v1545, 4
        %v1548 = vshll.u32 %v1164, 16
        %v1550 = vrot.slane %v1548, 5
        %v1551 = vsel %vm1167, %v1546, %v1550
        %s1552 = scalar_lea.vmem [#allocation9], 64
        %v1553 = vld [vmem:[%s1552] sm:$0xf]
        %v1554 = vld [vmem:[%s1552 + $0x4] sm:$0xf]
        %v1555 = vld [vmem:[%s1552 + $0x8] sm:$0xf]
        %v1556 = vld [vmem:[%s1552 + $0xc] sm:$0xf]
        %v1557 = vld [vmem:[%s1552 + $0x10] sm:$0xf]
        %v1558 = vld [vmem:[%s1552 + $0x14] sm:$0xf]
        %v1559 = vld [vmem:[%s1552 + $0x18] sm:$0xf]
        %v1560 = vld [vmem:[%s1552 + $0x1c] sm:$0xf]
        %v1561 = vld [vmem:[%s1552 + $0x20] sm:$0xf]
        %v1562 = vld [vmem:[%s1552 + $0x24] sm:$0xf]
        %v1563 = vld [vmem:[%s1552 + $0x28] sm:$0xf]
        %v1564 = vld [vmem:[%s1552 + $0x2c] sm:$0xf]
        %v1565 = vld [vmem:[%s1552 + $0x30] sm:$0xf]
        %v1566 = vld [vmem:[%s1552 + $0x34] sm:$0xf]
        %v1567 = vld [vmem:[%s1552 + $0x38] sm:$0xf]
        %v1568 = vld [vmem:[%s1552 + $0x3c] sm:$0xf]
        %v1569 = vunpack.c.l.b16 %v1181
        %v1570 = vunpack.c.l.b16 %v1191
        %v1571 = vunpack.c.l.b16 %v1205
        %v1572 = vunpack.c.l.b16 %v1215
        %v1573 = vunpack.c.l.b16 %v1229
        %v1574 = vunpack.c.l.b16 %v1239
        %v1575 = vunpack.c.l.b16 %v1253
        %v1576 = vunpack.c.l.b16 %v1263
        %v1577 = vunpack.c.l.b16 %v1277
        %v1578 = vunpack.c.l.b16 %v1287
        %v1579 = vunpack.c.l.b16 %v1301
        %v1580 = vunpack.c.l.b16 %v1311
        %v1581 = vunpack.c.l.b16 %v1325
        %v1582 = vunpack.c.l.b16 %v1335
        %v1583 = vunpack.c.l.b16 %v1349
        %v1584 = vunpack.c.l.b16 %v1359
        %v1585 = vunpack.c.l.b16 %v1373
        %v1586 = vunpack.c.l.b16 %v1383
        %v1587 = vunpack.c.l.b16 %v1397
        %v1588 = vunpack.c.l.b16 %v1407
        %v1589 = vunpack.c.l.b16 %v1421
        %v1590 = vunpack.c.l.b16 %v1431
        %v1591 = vunpack.c.l.b16 %v1445
        %v1592 = vunpack.c.l.b16 %v1455
        %v1593 = vunpack.c.l.b16 %v1469
        %v1594 = vunpack.c.l.b16 %v1479
        %v1595 = vunpack.c.l.b16 %v1493
        %v1596 = vunpack.c.l.b16 %v1503
        %v1597 = vunpack.c.l.b16 %v1517
        %v1598 = vunpack.c.l.b16 %v1527
        %v1599 = vunpack.c.l.b16 %v1541
        %v1600 = vunpack.c.l.b16 %v1551
        %v1601 = vpack.c.b16 %v1570, %v1569
        %v1602 = vpack.c.b16 %v1572, %v1571
        %v1603 = vpack.c.b16 %v1574, %v1573
        %v1604 = vpack.c.b16 %v1576, %v1575
        %v1605 = vpack.c.b16 %v1578, %v1577
        %v1606 = vpack.c.b16 %v1580, %v1579
        %v1607 = vpack.c.b16 %v1582, %v1581
        %v1608 = vpack.c.b16 %v1584, %v1583
        %v1609 = vpack.c.b16 %v1586, %v1585
        %v1610 = vpack.c.b16 %v1588, %v1587
        %v1611 = vpack.c.b16 %v1590, %v1589
        %v1612 = vpack.c.b16 %v1592, %v1591
        %v1613 = vpack.c.b16 %v1594, %v1593
        %v1614 = vpack.c.b16 %v1596, %v1595
        %v1615 = vpack.c.b16 %v1598, %v1597
        %v1616 = vpack.c.b16 %v1600, %v1599
        %v1649 = vunpack.c.l.b16 %v1553
        %v1650 = vunpack.c.l.b16 %v1554
        %v1651 = vunpack.c.l.b16 %v1555
        %v1652 = vunpack.c.l.b16 %v1556
        %v1653 = vunpack.c.l.b16 %v1557
        %v1654 = vunpack.c.l.b16 %v1558
        %v1655 = vunpack.c.l.b16 %v1559
        %v1656 = vunpack.c.l.b16 %v1560
        %v1657 = vunpack.c.l.b16 %v1561
        %v1658 = vunpack.c.l.b16 %v1562
        %v1659 = vunpack.c.l.b16 %v1563
        %v1660 = vunpack.c.l.b16 %v1564
        %v1661 = vunpack.c.l.b16 %v1565
        %v1662 = vunpack.c.l.b16 %v1566
        %v1663 = vunpack.c.l.b16 %v1567
        %v1664 = vunpack.c.l.b16 %v1568
        %v1665 = vpack.c.b16 %v1650, %v1649
        %v1666 = vpack.c.b16 %v1652, %v1651
        %v1667 = vpack.c.b16 %v1654, %v1653
        %v1668 = vpack.c.b16 %v1656, %v1655
        %v1669 = vpack.c.b16 %v1658, %v1657
        %v1670 = vpack.c.b16 %v1660, %v1659
        %v1671 = vpack.c.b16 %v1662, %v1661
        %v1672 = vpack.c.b16 %v1664, %v1663
        %1681 = vmatprep.subr.bf16.mxu0 0
        %1682 = vmatpush1.bf16.msra.mxu0 %v1665
        %1683 = vmatprep.subr.bf16.mxu0 0
        %1684 = vmatpush1.bf16.msra.mxu0 %v1666
        %1685 = vmatprep.subr.bf16.mxu0 0
        %1686 = vmatpush1.bf16.msra.mxu0 %v1667
        %1687 = vmatprep.subr.bf16.mxu0 0
        %1688 = vmatpush1.bf16.msra.mxu0 %v1668
        %1689 = vmatprep.subr.bf16.mxu0 0
        %1690 = vmatpush1.bf16.msra.mxu0 %v1669
        %1691 = vmatprep.subr.bf16.mxu0 0
        %1692 = vmatpush1.bf16.msra.mxu0 %v1670
        %1693 = vmatprep.subr.bf16.mxu0 0
        %1694 = vmatpush1.bf16.msra.mxu0 %v1671
        %1695 = vmatprep.subr.bf16.mxu0 0
        %1696 = vmatpush1.bf16.msra.mxu0 %v1672
        %1697 = vmatprep.subr.bf16.mxu0 0
        %1698 = vmatpush1.bf16.msra.mxu0 0
        %1699 = vmatprep.subr.bf16.mxu0 0
        %1700 = vmatpush1.bf16.msra.mxu0 0
        %1701 = vmatprep.subr.bf16.mxu0 0
        %1702 = vmatpush1.bf16.msra.mxu0 0
        %1703 = vmatprep.subr.bf16.mxu0 0
        %1704 = vmatpush1.bf16.msra.mxu0 0
        %1705 = vmatprep.subr.bf16.mxu0 0
        %1706 = vmatpush1.bf16.msra.mxu0 0
        %1707 = vmatprep.subr.bf16.mxu0 0
        %1708 = vmatpush1.bf16.msra.mxu0 0
        %1709 = vmatprep.subr.bf16.mxu0 0
        %1710 = vmatpush1.bf16.msra.mxu0 0
        %1711 = vmatprep.subr.bf16.mxu0 0
        %1712 = vmatpush1.bf16.msra.mxu0 0
        %1713 = vmatprep.mubr.bf16.mxu0 0
        %1714 = vmatmul.mubr.bf16.gmra.mrb[0].mxu0 %v1601
        %v1715 = vpop.f32.mrb[0].mxu0
        %v1716 = vadd.f32 0.0, %v1715
        %v1717 = vpop.f32.mrb[0].mxu0
        %v1718 = vpop.f32.mrb[0].mxu0
        %v1719 = vadd.f32 0.0, %v1718
        %v1720 = vpop.f32.mrb[0].mxu0
        %1721 = vmatprep.mubr.bf16.mxu0 0
        %1722 = vmatmul.mubr.bf16.gmra.mrb[0].mxu0 %v1602
        %v1723 = vpop.f32.mrb[0].mxu0
        %v1724 = vadd.f32 0.0, %v1723
        %v1725 = vpop.f32.mrb[0].mxu0
        %v1726 = vpop.f32.mrb[0].mxu0
        %v1727 = vadd.f32 0.0, %v1726
        %v1728 = vpop.f32.mrb[0].mxu0
        %1729 = vmatprep.mubr.bf16.mxu0 0
        %1730 = vmatmul.mubr.bf16.gmra.mrb[0].mxu0 %v1603
        %v1731 = vpop.f32.mrb[0].mxu0
        %v1732 = vadd.f32 0.0, %v1731
        %v1733 = vpop.f32.mrb[0].mxu0
        %v1734 = vpop.f32.mrb[0].mxu0
        %v1735 = vadd.f32 0.0, %v1734
        %v1736 = vpop.f32.mrb[0].mxu0
        %1737 = vmatprep.mubr.bf16.mxu0 0
        %1738 = vmatmul.mubr.bf16.gmra.mrb[0].mxu0 %v1604
        %v1739 = vpop.f32.mrb[0].mxu0
        %v1740 = vadd.f32 0.0, %v1739
        %v1741 = vpop.f32.mrb[0].mxu0
        %v1742 = vpop.f32.mrb[0].mxu0
        %v1743 = vadd.f32 0.0, %v1742
        %v1744 = vpop.f32.mrb[0].mxu0
        %1745 = vmatprep.mubr.bf16.mxu0 0
        %1746 = vmatmul.mubr.bf16.gmra.mrb[0].mxu0 %v1605
        %v1747 = vpop.f32.mrb[0].mxu0
        %v1748 = vadd.f32 0.0, %v1747
        %v1749 = vpop.f32.mrb[0].mxu0
        %v1750 = vpop.f32.mrb[0].mxu0
        %v1751 = vadd.f32 0.0, %v1750
        %v1752 = vpop.f32.mrb[0].mxu0
        %1753 = vmatprep.mubr.bf16.mxu0 0
        %1754 = vmatmul.mubr.bf16.gmra.mrb[0].mxu0 %v1606
        %v1755 = vpop.f32.mrb[0].mxu0
        %v1756 = vadd.f32 0.0, %v1755
        %v1757 = vpop.f32.mrb[0].mxu0
        %v1758 = vpop.f32.mrb[0].mxu0
        %v1759 = vadd.f32 0.0, %v1758
        %v1760 = vpop.f32.mrb[0].mxu0
        %1761 = vmatprep.mubr.bf16.mxu0 0
        %1762 = vmatmul.mubr.bf16.gmra.mrb[0].mxu0 %v1607
        %v1763 = vpop.f32.mrb[0].mxu0
        %v1764 = vadd.f32 0.0, %v1763
        %v1765 = vpop.f32.mrb[0].mxu0
        %v1766 = vpop.f32.mrb[0].mxu0
        %v1767 = vadd.f32 0.0, %v1766
        %v1768 = vpop.f32.mrb[0].mxu0
        %1769 = vmatprep.mubr.bf16.mxu0 0
        %1770 = vmatmul.mubr.bf16.gmra.mrb[0].mxu0 %v1608
        %v1771 = vpop.f32.mrb[0].mxu0
        %v1772 = vadd.f32 0.0, %v1771
        %v1773 = vpop.f32.mrb[0].mxu0
        %v1774 = vpop.f32.mrb[0].mxu0
        %v1775 = vadd.f32 0.0, %v1774
        %v1776 = vpop.f32.mrb[0].mxu0
        %1777 = vmatprep.mubr.bf16.mxu0 0
        %1778 = vmatmul.mubr.bf16.gmra.mrb[0].mxu0 %v1609
        %v1779 = vpop.f32.mrb[0].mxu0
        %v1780 = vadd.f32 0.0, %v1779
        %v1781 = vpop.f32.mrb[0].mxu0
        %v1782 = vpop.f32.mrb[0].mxu0
        %v1783 = vadd.f32 0.0, %v1782
        %v1784 = vpop.f32.mrb[0].mxu0
        %1785 = vmatprep.mubr.bf16.mxu0 0
        %1786 = vmatmul.mubr.bf16.gmra.mrb[0].mxu0 %v1610
        %v1787 = vpop.f32.mrb[0].mxu0
        %v1788 = vadd.f32 0.0, %v1787
        %v1789 = vpop.f32.mrb[0].mxu0
        %v1790 = vpop.f32.mrb[0].mxu0
        %v1791 = vadd.f32 0.0, %v1790
        %v1792 = vpop.f32.mrb[0].mxu0
        %1793 = vmatprep.mubr.bf16.mxu0 0
        %1794 = vmatmul.mubr.bf16.gmra.mrb[0].mxu0 %v1611
        %v1795 = vpop.f32.mrb[0].mxu0
        %v1796 = vadd.f32 0.0, %v1795
        %v1797 = vpop.f32.mrb[0].mxu0
        %v1798 = vpop.f32.mrb[0].mxu0
        %v1799 = vadd.f32 0.0, %v1798
        %v1800 = vpop.f32.mrb[0].mxu0
        %1801 = vmatprep.mubr.bf16.mxu0 0
        %1802 = vmatmul.mubr.bf16.gmra.mrb[0].mxu0 %v1612
        %v1803 = vpop.f32.mrb[0].mxu0
        %v1804 = vadd.f32 0.0, %v1803
        %v1805 = vpop.f32.mrb[0].mxu0
        %v1806 = vpop.f32.mrb[0].mxu0
        %v1807 = vadd.f32 0.0, %v1806
        %v1808 = vpop.f32.mrb[0].mxu0
        %1809 = vmatprep.mubr.bf16.mxu0 0
        %1810 = vmatmul.mubr.bf16.gmra.mrb[0].mxu0 %v1613
        %v1811 = vpop.f32.mrb[0].mxu0
        %v1812 = vadd.f32 0.0, %v1811
        %v1813 = vpop.f32.mrb[0].mxu0
        %v1814 = vpop.f32.mrb[0].mxu0
        %v1815 = vadd.f32 0.0, %v1814
        %v1816 = vpop.f32.mrb[0].mxu0
        %1817 = vmatprep.mubr.bf16.mxu0 0
        %1818 = vmatmul.mubr.bf16.gmra.mrb[0].mxu0 %v1614
        %v1819 = vpop.f32.mrb[0].mxu0
        %v1820 = vadd.f32 0.0, %v1819
        %v1821 = vpop.f32.mrb[0].mxu0
        %v1822 = vpop.f32.mrb[0].mxu0
        %v1823 = vadd.f32 0.0, %v1822
        %v1824 = vpop.f32.mrb[0].mxu0
        %1825 = vmatprep.mubr.bf16.mxu0 0
        %1826 = vmatmul.mubr.bf16.gmra.mrb[0].mxu0 %v1615
        %v1827 = vpop.f32.mrb[0].mxu0
        %v1828 = vadd.f32 0.0, %v1827
        %v1829 = vpop.f32.mrb[0].mxu0
        %v1830 = vpop.f32.mrb[0].mxu0
        %v1831 = vadd.f32 0.0, %v1830
        %v1832 = vpop.f32.mrb[0].mxu0
        %1833 = vmatprep.mubr.bf16.mxu0 0
        %1834 = vmatmul.mubr.bf16.gmra.mrb[0].mxu0 %v1616
        %v1835 = vpop.f32.mrb[0].mxu0
        %v1836 = vadd.f32 0.0, %v1835
        %v1837 = vpop.f32.mrb[0].mxu0
        %v1838 = vpop.f32.mrb[0].mxu0
        %v1839 = vadd.f32 0.0, %v1838
        %v1840 = vpop.f32.mrb[0].mxu0
        %1841 = vdwg.mxu0
        %v1874 = vunpack.c.l.b16 %v1101
        %v1875 = vunpack.c.l.b16 %v1102
        %v1876 = vunpack.c.l.b16 %v1103
        %v1877 = vunpack.c.l.b16 %v1104
        %v1878 = vunpack.c.l.b16 %v1105
        %v1879 = vunpack.c.l.b16 %v1106
        %v1880 = vunpack.c.l.b16 %v1107
        %v1881 = vunpack.c.l.b16 %v1108
        %v1882 = vunpack.c.l.b16 %v1109
        %v1883 = vunpack.c.l.b16 %v1110
        %v1884 = vunpack.c.l.b16 %v1111
        %v1885 = vunpack.c.l.b16 %v1112
        %v1886 = vunpack.c.l.b16 %v1113
        %v1887 = vunpack.c.l.b16 %v1114
        %v1888 = vunpack.c.l.b16 %v1115
        %v1889 = vunpack.c.l.b16 %v1116
        %v1890 = vunpack.c.l.b16 %v1117
        %v1891 = vunpack.c.l.b16 %v1118
        %v1892 = vunpack.c.l.b16 %v1119
        %v1893 = vunpack.c.l.b16 %v1120
        %v1894 = vunpack.c.l.b16 %v1121
        %v1895 = vunpack.c.l.b16 %v1122
        %v1896 = vunpack.c.l.b16 %v1123
        %v1897 = vunpack.c.l.b16 %v1124
        %v1898 = vunpack.c.l.b16 %v1125
        %v1899 = vunpack.c.l.b16 %v1126
        %v1900 = vunpack.c.l.b16 %v1127
        %v1901 = vunpack.c.l.b16 %v1128
        %v1902 = vunpack.c.l.b16 %v1129
        %v1903 = vunpack.c.l.b16 %v1130
        %v1904 = vunpack.c.l.b16 %v1131
        %v1905 = vunpack.c.l.b16 %v1132
        %v1906 = vpack.c.b16 %v1875, %v1874
        %v1907 = vpack.c.b16 %v1877, %v1876
        %v1908 = vpack.c.b16 %v1879, %v1878
        %v1909 = vpack.c.b16 %v1881, %v1880
        %v1910 = vpack.c.b16 %v1883, %v1882
        %v1911 = vpack.c.b16 %v1885, %v1884
        %v1912 = vpack.c.b16 %v1887, %v1886
        %v1913 = vpack.c.b16 %v1889, %v1888
        %v1914 = vpack.c.b16 %v1891, %v1890
        %v1915 = vpack.c.b16 %v1893, %v1892
        %v1916 = vpack.c.b16 %v1895, %v1894
        %v1917 = vpack.c.b16 %v1897, %v1896
        %v1918 = vpack.c.b16 %v1899, %v1898
        %v1919 = vpack.c.b16 %v1901, %v1900
        %v1920 = vpack.c.b16 %v1903, %v1902
        %v1921 = vpack.c.b16 %v1905, %v1904
        %v1954 = vunpack.c.l.b16 %v1133
        %v1955 = vunpack.c.l.b16 %v1134
        %v1956 = vunpack.c.l.b16 %v1135
        %v1957 = vunpack.c.l.b16 %v1136
        %v1958 = vunpack.c.l.b16 %v1137
        %v1959 = vunpack.c.l.b16 %v1138
        %v1960 = vunpack.c.l.b16 %v1139
        %v1961 = vunpack.c.l.b16 %v1140
        %v1962 = vunpack.c.l.b16 %v1141
        %v1963 = vunpack.c.l.b16 %v1142
        %v1964 = vunpack.c.l.b16 %v1143
        %v1965 = vunpack.c.l.b16 %v1144
        %v1966 = vunpack.c.l.b16 %v1145
        %v1967 = vunpack.c.l.b16 %v1146
        %v1968 = vunpack.c.l.b16 %v1147
        %v1969 = vunpack.c.l.b16 %v1148
        %v1970 = vpack.c.b16 %v1955, %v1954
        %v1971 = vpack.c.b16 %v1957, %v1956
        %v1972 = vpack.c.b16 %v1959, %v1958
        %v1973 = vpack.c.b16 %v1961, %v1960
        %v1974 = vpack.c.b16 %v1963, %v1962
        %v1975 = vpack.c.b16 %v1965, %v1964
        %v1976 = vpack.c.b16 %v1967, %v1966
        %v1977 = vpack.c.b16 %v1969, %v1968
        %1986 = vmatprep.subr.bf16.mxu0 0
        %1987 = vmatpush1.bf16.msra.mxu0 %v1970
        %1988 = vmatprep.subr.bf16.mxu0 0
        %1989 = vmatpush1.bf16.msra.mxu0 %v1971
        %1990 = vmatprep.subr.bf16.mxu0 0
        %1991 = vmatpush1.bf16.msra.mxu0 %v1972
        %1992 = vmatprep.subr.bf16.mxu0 0
        %1993 = vmatpush1.bf16.msra.mxu0 %v1973
        %1994 = vmatprep.subr.bf16.mxu0 0
        %1995 = vmatpush1.bf16.msra.mxu0 %v1974
        %1996 = vmatprep.subr.bf16.mxu0 0
        %1997 = vmatpush1.bf16.msra.mxu0 %v1975
        %1998 = vmatprep.subr.bf16.mxu0 0
        %1999 = vmatpush1.bf16.msra.mxu0 %v1976
        %2000 = vmatprep.subr.bf16.mxu0 0
        %2001 = vmatpush1.bf16.msra.mxu0 %v1977
        %2002 = vmatprep.subr.bf16.mxu0 0
        %2003 = vmatpush1.bf16.msra.mxu0 0
        %2004 = vmatprep.subr.bf16.mxu0 0
        %2005 = vmatpush1.bf16.msra.mxu0 0
        %2006 = vmatprep.subr.bf16.mxu0 0
        %2007 = vmatpush1.bf16.msra.mxu0 0
        %2008 = vmatprep.subr.bf16.mxu0 0
        %2009 = vmatpush1.bf16.msra.mxu0 0
        %2010 = vmatprep.subr.bf16.mxu0 0
        %2011 = vmatpush1.bf16.msra.mxu0 0
        %2012 = vmatprep.subr.bf16.mxu0 0
        %2013 = vmatpush1.bf16.msra.mxu0 0
        %2014 = vmatprep.subr.bf16.mxu0 0
        %2015 = vmatpush1.bf16.msra.mxu0 0
        %2016 = vmatprep.subr.bf16.mxu0 0
        %2017 = vmatpush1.bf16.msra.mxu0 0
        %2018 = vmatprep.mubr.bf16.mxu0 0
        %2019 = vmatmul.mubr.bf16.gmra.mrb[0].mxu0 %v1906
        %v2020 = vpop.f32.mrb[0].mxu0
        %v2021 = vadd.f32 %v1716, %v2020
        %v2022 = vpop.f32.mrb[0].mxu0
        %v2023 = vpop.f32.mrb[0].mxu0
        %v2024 = vadd.f32 %v1719, %v2023
        %v2025 = vpop.f32.mrb[0].mxu0
        %2026 = vmatprep.mubr.bf16.mxu0 0
        %2027 = vmatmul.mubr.bf16.gmra.mrb[0].mxu0 %v1907
        %v2028 = vpop.f32.mrb[0].mxu0
        %v2029 = vadd.f32 %v1724, %v2028
        %v2030 = vpop.f32.mrb[0].mxu0
        %v2031 = vpop.f32.mrb[0].mxu0
        %v2032 = vadd.f32 %v1727, %v2031
        %v2033 = vpop.f32.mrb[0].mxu0
        %2034 = vmatprep.mubr.bf16.mxu0 0
        %2035 = vmatmul.mubr.bf16.gmra.mrb[0].mxu0 %v1908
        %v2036 = vpop.f32.mrb[0].mxu0
        %v2037 = vadd.f32 %v1732, %v2036
        %v2038 = vpop.f32.mrb[0].mxu0
        %v2039 = vpop.f32.mrb[0].mxu0
        %v2040 = vadd.f32 %v1735, %v2039
        %v2041 = vpop.f32.mrb[0].mxu0
        %2042 = vmatprep.mubr.bf16.mxu0 0
        %2043 = vmatmul.mubr.bf16.gmra.mrb[0].mxu0 %v1909
        %v2044 = vpop.f32.mrb[0].mxu0
        %v2045 = vadd.f32 %v1740, %v2044
        %v2046 = vpop.f32.mrb[0].mxu0
        %v2047 = vpop.f32.mrb[0].mxu0
        %v2048 = vadd.f32 %v1743, %v2047
        %v2049 = vpop.f32.mrb[0].mxu0
        %2050 = vmatprep.mubr.bf16.mxu0 0
        %2051 = vmatmul.mubr.bf16.gmra.mrb[0].mxu0 %v1910
        %v2052 = vpop.f32.mrb[0].mxu0
        %v2053 = vadd.f32 %v1748, %v2052
        %v2054 = vpop.f32.mrb[0].mxu0
        %v2055 = vpop.f32.mrb[0].mxu0
        %v2056 = vadd.f32 %v1751, %v2055
        %v2057 = vpop.f32.mrb[0].mxu0
        %2058 = vmatprep.mubr.bf16.mxu0 0
        %2059 = vmatmul.mubr.bf16.gmra.mrb[0].mxu0 %v1911
        %v2060 = vpop.f32.mrb[0].mxu0
        %v2061 = vadd.f32 %v1756, %v2060
        %v2062 = vpop.f32.mrb[0].mxu0
        %v2063 = vpop.f32.mrb[0].mxu0
        %v2064 = vadd.f32 %v1759, %v2063
        %v2065 = vpop.f32.mrb[0].mxu0
        %2066 = vmatprep.mubr.bf16.mxu0 0
        %2067 = vmatmul.mubr.bf16.gmra.mrb[0].mxu0 %v1912
        %v2068 = vpop.f32.mrb[0].mxu0
        %v2069 = vadd.f32 %v1764, %v2068
        %v2070 = vpop.f32.mrb[0].mxu0
        %v2071 = vpop.f32.mrb[0].mxu0
        %v2072 = vadd.f32 %v1767, %v2071
        %v2073 = vpop.f32.mrb[0].mxu0
        %2074 = vmatprep.mubr.bf16.mxu0 0
        %2075 = vmatmul.mubr.bf16.gmra.mrb[0].mxu0 %v1913
        %v2076 = vpop.f32.mrb[0].mxu0
        %v2077 = vadd.f32 %v1772, %v2076
        %v2078 = vpop.f32.mrb[0].mxu0
        %v2079 = vpop.f32.mrb[0].mxu0
        %v2080 = vadd.f32 %v1775, %v2079
        %v2081 = vpop.f32.mrb[0].mxu0
        %2082 = vmatprep.mubr.bf16.mxu0 0
        %2083 = vmatmul.mubr.bf16.gmra.mrb[0].mxu0 %v1914
        %v2084 = vpop.f32.mrb[0].mxu0
        %v2085 = vadd.f32 %v1780, %v2084
        %v2086 = vpop.f32.mrb[0].mxu0
        %v2087 = vpop.f32.mrb[0].mxu0
        %v2088 = vadd.f32 %v1783, %v2087
        %v2089 = vpop.f32.mrb[0].mxu0
        %2090 = vmatprep.mubr.bf16.mxu0 0
        %2091 = vmatmul.mubr.bf16.gmra.mrb[0].mxu0 %v1915
        %v2092 = vpop.f32.mrb[0].mxu0
        %v2093 = vadd.f32 %v1788, %v2092
        %v2094 = vpop.f32.mrb[0].mxu0
        %v2095 = vpop.f32.mrb[0].mxu0
        %v2096 = vadd.f32 %v1791, %v2095
        %v2097 = vpop.f32.mrb[0].mxu0
        %2098 = vmatprep.mubr.bf16.mxu0 0
        %2099 = vmatmul.mubr.bf16.gmra.mrb[0].mxu0 %v1916
        %v2100 = vpop.f32.mrb[0].mxu0
        %v2101 = vadd.f32 %v1796, %v2100
        %v2102 = vpop.f32.mrb[0].mxu0
        %v2103 = vpop.f32.mrb[0].mxu0
        %v2104 = vadd.f32 %v1799, %v2103
        %v2105 = vpop.f32.mrb[0].mxu0
        %2106 = vmatprep.mubr.bf16.mxu0 0
        %2107 = vmatmul.mubr.bf16.gmra.mrb[0].mxu0 %v1917
        %v2108 = vpop.f32.mrb[0].mxu0
        %v2109 = vadd.f32 %v1804, %v2108
        %v2110 = vpop.f32.mrb[0].mxu0
        %v2111 = vpop.f32.mrb[0].mxu0
        %v2112 = vadd.f32 %v1807, %v2111
        %v2113 = vpop.f32.mrb[0].mxu0
        %2114 = vmatprep.mubr.bf16.mxu0 0
        %2115 = vmatmul.mubr.bf16.gmra.mrb[0].mxu0 %v1918
        %v2116 = vpop.f32.mrb[0].mxu0
        %v2117 = vadd.f32 %v1812, %v2116
        %v2118 = vpop.f32.mrb[0].mxu0
        %v2119 = vpop.f32.mrb[0].mxu0
        %v2120 = vadd.f32 %v1815, %v2119
        %v2121 = vpop.f32.mrb[0].mxu0
        %2122 = vmatprep.mubr.bf16.mxu0 0
        %2123 = vmatmul.mubr.bf16.gmra.mrb[0].mxu0 %v1919
        %v2124 = vpop.f32.mrb[0].mxu0
        %v2125 = vadd.f32 %v1820, %v2124
        %v2126 = vpop.f32.mrb[0].mxu0
        %v2127 = vpop.f32.mrb[0].mxu0
        %v2128 = vadd.f32 %v1823, %v2127
        %v2129 = vpop.f32.mrb[0].mxu0
        %2130 = vmatprep.mubr.bf16.mxu0 0
        %2131 = vmatmul.mubr.bf16.gmra.mrb[0].mxu0 %v1920
        %v2132 = vpop.f32.mrb[0].mxu0
        %v2133 = vadd.f32 %v1828, %v2132
        %v2134 = vpop.f32.mrb[0].mxu0
        %v2135 = vpop.f32.mrb[0].mxu0
        %v2136 = vadd.f32 %v1831, %v2135
        %v2137 = vpop.f32.mrb[0].mxu0
        %2138 = vmatprep.mubr.bf16.mxu0 0
        %2139 = vmatmul.mubr.bf16.gmra.mrb[0].mxu0 %v1921
        %v2140 = vpop.f32.mrb[0].mxu0
        %v2141 = vadd.f32 %v1836, %v2140
        %v2142 = vpop.f32.mrb[0].mxu0
        %v2143 = vpop.f32.mrb[0].mxu0
        %v2144 = vadd.f32 %v1839, %v2143
        %v2145 = vpop.f32.mrb[0].mxu0
        %2146 = vdwg.mxu0
        %v2147 = vld [vmem:[#allocation2] sm:$0xe]
        %v2148 = vld [vmem:[#allocation2 + $0xc] sm:$0xe]
        %v2149 = vld [vmem:[#allocation2 + $0x18] sm:$0xe]
        %v2150 = vld [vmem:[#allocation2 + $0x24] sm:$0xe]
        %v2151 = vld [vmem:[#allocation2 + $0x30] sm:$0xe]
        %v2152 = vld [vmem:[#allocation2 + $0x3c] sm:$0xe]
        %v2153 = vld [vmem:[#allocation2 + $0x48] sm:$0xe]
        %v2154 = vld [vmem:[#allocation2 + $0x54] sm:$0xe]
        %v2155 = vld [vmem:[#allocation2 + $0x60] sm:$0xe]
        %v2156 = vld [vmem:[#allocation2 + $0x6c] sm:$0xe]
        %v2157 = vld [vmem:[#allocation2 + $0x78] sm:$0xe]
        %v2158 = vld [vmem:[#allocation2 + $0x84] sm:$0xe]
        %v2159 = vld [vmem:[#allocation2 + $0x90] sm:$0xe]
        %v2160 = vld [vmem:[#allocation2 + $0x9c] sm:$0xe]
        %v2161 = vld [vmem:[#allocation2 + $0xa8] sm:$0xe]
        %v2162 = vld [vmem:[#allocation2 + $0xb4] sm:$0xe]
        %vm2195 = vcmask 1042432
        %vm2196 = vcmask 1046532
        %vm2197 = vmor %vm2195, %vm2196
        %v2198 = vrot.slane %v2147, 5
        %v2199 = vrot.slane %v2198, 4
        %v2200 = vrot.slane %v1102, 5
        %v2201 = vsel %vm2197, %v2199, %v2200
        %v2202 = vrot.slane %v2200, 4
        %v2203 = vrot.slane %v1149, 5
        %v2204 = vsel %vm2197, %v2202, %v2203
        %v2205 = vrot.slane %v2148, 5
        %v2206 = vrot.slane %v2205, 4
        %v2207 = vrot.slane %v1104, 5
        %v2208 = vsel %vm2197, %v2206, %v2207
        %v2209 = vrot.slane %v2207, 4
        %v2210 = vrot.slane %v1150, 5
        %v2211 = vsel %vm2197, %v2209, %v2210
        %v2212 = vrot.slane %v2149, 5
        %v2213 = vrot.slane %v2212, 4
        %v2214 = vrot.slane %v1106, 5
        %v2215 = vsel %vm2197, %v2213, %v2214
        %v2216 = vrot.slane %v2214, 4
        %v2217 = vrot.slane %v1151, 5
        %v2218 = vsel %vm2197, %v2216, %v2217
        %v2219 = vrot.slane %v2150, 5
        %v2220 = vrot.slane %v2219, 4
        %v2221 = vrot.slane %v1108, 5
        %v2222 = vsel %vm2197, %v2220, %v2221
        %v2223 = vrot.slane %v2221, 4
        %v2224 = vrot.slane %v1152, 5
        %v2225 = vsel %vm2197, %v2223, %v2224
        %v2226 = vrot.slane %v2151, 5
        %v2227 = vrot.slane %v2226, 4
        %v2228 = vrot.slane %v1110, 5
        %v2229 = vsel %vm2197, %v2227, %v2228
        %v2230 = vrot.slane %v2228, 4
        %v2231 = vrot.slane %v1153, 5
        %v2232 = vsel %vm2197, %v2230, %v2231
        %v2233 = vrot.slane %v2152, 5
        %v2234 = vrot.slane %v2233, 4
        %v2235 = vrot.slane %v1112, 5
        %v2236 = vsel %vm2197, %v2234, %v2235
        %v2237 = vrot.slane %v2235, 4
        %v2238 = vrot.slane %v1154, 5
        %v2239 = vsel %vm2197, %v2237, %v2238
        %v2240 = vrot.slane %v2153, 5
        %v2241 = vrot.slane %v2240, 4
        %v2242 = vrot.slane %v1114, 5
        %v2243 = vsel %vm2197, %v2241, %v2242
        %v2244 = vrot.slane %v2242, 4
        %v2245 = vrot.slane %v1155, 5
        %v2246 = vsel %vm2197, %v2244, %v2245
        %v2247 = vrot.slane %v2154, 5
        %v2248 = vrot.slane %v2247, 4
        %v2249 = vrot.slane %v1116, 5
        %v2250 = vsel %vm2197, %v2248, %v2249
        %v2251 = vrot.slane %v2249, 4
        %v2252 = vrot.slane %v1156, 5
        %v2253 = vsel %vm2197, %v2251, %v2252
        %v2254 = vrot.slane %v2155, 5
        %v2255 = vrot.slane %v2254, 4
        %v2256 = vrot.slane %v1118, 5
        %v2257 = vsel %vm2197, %v2255, %v2256
        %v2258 = vrot.slane %v2256, 4
        %v2259 = vrot.slane %v1157, 5
        %v2260 = vsel %vm2197, %v2258, %v2259
        %v2261 = vrot.slane %v2156, 5
        %v2262 = vrot.slane %v2261, 4
        %v2263 = vrot.slane %v1120, 5
        %v2264 = vsel %vm2197, %v2262, %v2263
        %v2265 = vrot.slane %v2263, 4
        %v2266 = vrot.slane %v1158, 5
        %v2267 = vsel %vm2197, %v2265, %v2266
        %v2268 = vrot.slane %v2157, 5
        %v2269 = vrot.slane %v2268, 4
        %v2270 = vrot.slane %v1122, 5
        %v2271 = vsel %vm2197, %v2269, %v2270
        %v2272 = vrot.slane %v2270, 4
        %v2273 = vrot.slane %v1159, 5
        %v2274 = vsel %vm2197, %v2272, %v2273
        %v2275 = vrot.slane %v2158, 5
        %v2276 = vrot.slane %v2275, 4
        %v2277 = vrot.slane %v1124, 5
        %v2278 = vsel %vm2197, %v2276, %v2277
        %v2279 = vrot.slane %v2277, 4
        %v2280 = vrot.slane %v1160, 5
        %v2281 = vsel %vm2197, %v2279, %v2280
        %v2282 = vrot.slane %v2159, 5
        %v2283 = vrot.slane %v2282, 4
        %v2284 = vrot.slane %v1126, 5
        %v2285 = vsel %vm2197, %v2283, %v2284
        %v2286 = vrot.slane %v2284, 4
        %v2287 = vrot.slane %v1161, 5
        %v2288 = vsel %vm2197, %v2286, %v2287
        %v2289 = vrot.slane %v2160, 5
        %v2290 = vrot.slane %v2289, 4
        %v2291 = vrot.slane %v1128, 5
        %v2292 = vsel %vm2197, %v2290, %v2291
        %v2293 = vrot.slane %v2291, 4
        %v2294 = vrot.slane %v1162, 5
        %v2295 = vsel %vm2197, %v2293, %v2294
        %v2296 = vrot.slane %v2161, 5
        %v2297 = vrot.slane %v2296, 4
        %v2298 = vrot.slane %v1130, 5
        %v2299 = vsel %vm2197, %v2297, %v2298
        %v2300 = vrot.slane %v2298, 4
        %v2301 = vrot.slane %v1163, 5
        %v2302 = vsel %vm2197, %v2300, %v2301
        %v2303 = vrot.slane %v2162, 5
        %v2304 = vrot.slane %v2303, 4
        %v2305 = vrot.slane %v1132, 5
        %v2306 = vsel %vm2197, %v2304, %v2305
        %v2307 = vrot.slane %v2305, 4
        %v2308 = vrot.slane %v1164, 5
        %v2309 = vsel %vm2197, %v2307, %v2308
        %s2310 = scalar_lea.vmem [#allocation9], 128
        %v2311 = vld [vmem:[%s2310] sm:$0xf]
        %v2312 = vld [vmem:[%s2310 + $0x4] sm:$0xf]
        %v2313 = vld [vmem:[%s2310 + $0x8] sm:$0xf]
        %v2314 = vld [vmem:[%s2310 + $0xc] sm:$0xf]
        %v2315 = vld [vmem:[%s2310 + $0x10] sm:$0xf]
        %v2316 = vld [vmem:[%s2310 + $0x14] sm:$0xf]
        %v2317 = vld [vmem:[%s2310 + $0x18] sm:$0xf]
        %v2318 = vld [vmem:[%s2310 + $0x1c] sm:$0xf]
        %v2319 = vld [vmem:[%s2310 + $0x20] sm:$0xf]
        %v2320 = vld [vmem:[%s2310 + $0x24] sm:$0xf]
        %v2321 = vld [vmem:[%s2310 + $0x28] sm:$0xf]
        %v2322 = vld [vmem:[%s2310 + $0x2c] sm:$0xf]
        %v2323 = vld [vmem:[%s2310 + $0x30] sm:$0xf]
        %v2324 = vld [vmem:[%s2310 + $0x34] sm:$0xf]
        %v2325 = vld [vmem:[%s2310 + $0x38] sm:$0xf]
        %v2326 = vld [vmem:[%s2310 + $0x3c] sm:$0xf]
        %v2327 = vunpack.c.l.b16 %v2201
        %v2328 = vunpack.c.l.b16 %v2204
        %v2329 = vunpack.c.l.b16 %v2208
        %v2330 = vunpack.c.l.b16 %v2211
        %v2331 = vunpack.c.l.b16 %v2215
        %v2332 = vunpack.c.l.b16 %v2218
        %v2333 = vunpack.c.l.b16 %v2222
        %v2334 = vunpack.c.l.b16 %v2225
        %v2335 = vunpack.c.l.b16 %v2229
        %v2336 = vunpack.c.l.b16 %v2232
        %v2337 = vunpack.c.l.b16 %v2236
        %v2338 = vunpack.c.l.b16 %v2239
        %v2339 = vunpack.c.l.b16 %v2243
        %v2340 = vunpack.c.l.b16 %v2246
        %v2341 = vunpack.c.l.b16 %v2250
        %v2342 = vunpack.c.l.b16 %v2253
        %v2343 = vunpack.c.l.b16 %v2257
        %v2344 = vunpack.c.l.b16 %v2260
        %v2345 = vunpack.c.l.b16 %v2264
        %v2346 = vunpack.c.l.b16 %v2267
        %v2347 = vunpack.c.l.b16 %v2271
        %v2348 = vunpack.c.l.b16 %v2274
        %v2349 = vunpack.c.l.b16 %v2278
        %v2350 = vunpack.c.l.b16 %v2281
        %v2351 = vunpack.c.l.b16 %v2285
        %v2352 = vunpack.c.l.b16 %v2288
        %v2353 = vunpack.c.l.b16 %v2292
        %v2354 = vunpack.c.l.b16 %v2295
        %v2355 = vunpack.c.l.b16 %v2299
        %v2356 = vunpack.c.l.b16 %v2302
        %v2357 = vunpack.c.l.b16 %v2306
        %v2358 = vunpack.c.l.b16 %v2309
        %v2359 = vpack.c.b16 %v2328, %v2327
        %v2360 = vpack.c.b16 %v2330, %v2329
        %v2361 = vpack.c.b16 %v2332, %v2331
        %v2362 = vpack.c.b16 %v2334, %v2333
        %v2363 = vpack.c.b16 %v2336, %v2335
        %v2364 = vpack.c.b16 %v2338, %v2337
        %v2365 = vpack.c.b16 %v2340, %v2339
        %v2366 = vpack.c.b16 %v2342, %v2341
        %v2367 = vpack.c.b16 %v2344, %v2343
        %v2368 = vpack.c.b16 %v2346, %v2345
        %v2369 = vpack.c.b16 %v2348, %v2347
        %v2370 = vpack.c.b16 %v2350, %v2349
        %v2371 = vpack.c.b16 %v2352, %v2351
        %v2372 = vpack.c.b16 %v2354, %v2353
        %v2373 = vpack.c.b16 %v2356, %v2355
        %v2374 = vpack.c.b16 %v2358, %v2357
        %v2407 = vunpack.c.l.b16 %v2311
        %v2408 = vunpack.c.l.b16 %v2312
        %v2409 = vunpack.c.l.b16 %v2313
        %v2410 = vunpack.c.l.b16 %v2314
        %v2411 = vunpack.c.l.b16 %v2315
        %v2412 = vunpack.c.l.b16 %v2316
        %v2413 = vunpack.c.l.b16 %v2317
        %v2414 = vunpack.c.l.b16 %v2318
        %v2415 = vunpack.c.l.b16 %v2319
        %v2416 = vunpack.c.l.b16 %v2320
        %v2417 = vunpack.c.l.b16 %v2321
        %v2418 = vunpack.c.l.b16 %v2322
        %v2419 = vunpack.c.l.b16 %v2323
        %v2420 = vunpack.c.l.b16 %v2324
        %v2421 = vunpack.c.l.b16 %v2325
        %v2422 = vunpack.c.l.b16 %v2326
        %v2423 = vpack.c.b16 %v2408, %v2407
        %v2424 = vpack.c.b16 %v2410, %v2409
        %v2425 = vpack.c.b16 %v2412, %v2411
        %v2426 = vpack.c.b16 %v2414, %v2413
        %v2427 = vpack.c.b16 %v2416, %v2415
        %v2428 = vpack.c.b16 %v2418, %v2417
        %v2429 = vpack.c.b16 %v2420, %v2419
        %v2430 = vpack.c.b16 %v2422, %v2421
        %2439 = vmatprep.subr.bf16.mxu0 0
        %2440 = vmatpush1.bf16.msra.mxu0 %v2423
        %2441 = vmatprep.subr.bf16.mxu0 0
        %2442 = vmatpush1.bf16.msra.mxu0 %v2424
        %2443 = vmatprep.subr.bf16.mxu0 0
        %2444 = vmatpush1.bf16.msra.mxu0 %v2425
        %2445 = vmatprep.subr.bf16.mxu0 0
        %2446 = vmatpush1.bf16.msra.mxu0 %v2426
        %2447 = vmatprep.subr.bf16.mxu0 0
        %2448 = vmatpush1.bf16.msra.mxu0 %v2427
        %2449 = vmatprep.subr.bf16.mxu0 0
        %2450 = vmatpush1.bf16.msra.mxu0 %v2428
        %2451 = vmatprep.subr.bf16.mxu0 0
        %2452 = vmatpush1.bf16.msra.mxu0 %v2429
        %2453 = vmatprep.subr.bf16.mxu0 0
        %2454 = vmatpush1.bf16.msra.mxu0 %v2430
        %2455 = vmatprep.subr.bf16.mxu0 0
        %2456 = vmatpush1.bf16.msra.mxu0 0
        %2457 = vmatprep.subr.bf16.mxu0 0
        %2458 = vmatpush1.bf16.msra.mxu0 0
        %2459 = vmatprep.subr.bf16.mxu0 0
        %2460 = vmatpush1.bf16.msra.mxu0 0
        %2461 = vmatprep.subr.bf16.mxu0 0
        %2462 = vmatpush1.bf16.msra.mxu0 0
        %2463 = vmatprep.subr.bf16.mxu0 0
        %2464 = vmatpush1.bf16.msra.mxu0 0
        %2465 = vmatprep.subr.bf16.mxu0 0
        %2466 = vmatpush1.bf16.msra.mxu0 0
        %2467 = vmatprep.subr.bf16.mxu0 0
        %2468 = vmatpush1.bf16.msra.mxu0 0
        %2469 = vmatprep.subr.bf16.mxu0 0
        %2470 = vmatpush1.bf16.msra.mxu0 0
        %2471 = vmatprep.mubr.bf16.mxu0 0
        %2472 = vmatmul.mubr.bf16.gmra.mrb[0].mxu0 %v2359
        %v2473 = vpop.f32.mrb[0].mxu0
        %v2474 = vadd.f32 0.0, %v2473
        %v2475 = vpop.f32.mrb[0].mxu0
        %v2476 = vpop.f32.mrb[0].mxu0
        %v2477 = vadd.f32 0.0, %v2476
        %v2478 = vpop.f32.mrb[0].mxu0
        %2479 = vmatprep.mubr.bf16.mxu0 0
        %2480 = vmatmul.mubr.bf16.gmra.mrb[0].mxu0 %v2360
        %v2481 = vpop.f32.mrb[0].mxu0
        %v2482 = vadd.f32 0.0, %v2481
        %v2483 = vpop.f32.mrb[0].mxu0
        %v2484 = vpop.f32.mrb[0].mxu0
        %v2485 = vadd.f32 0.0, %v2484
        %v2486 = vpop.f32.mrb[0].mxu0
        %2487 = vmatprep.mubr.bf16.mxu0 0
        %2488 = vmatmul.mubr.bf16.gmra.mrb[0].mxu0 %v2361
        %v2489 = vpop.f32.mrb[0].mxu0
        %v2490 = vadd.f32 0.0, %v2489
        %v2491 = vpop.f32.mrb[0].mxu0
        %v2492 = vpop.f32.mrb[0].mxu0
        %v2493 = vadd.f32 0.0, %v2492
        %v2494 = vpop.f32.mrb[0].mxu0
        %2495 = vmatprep.mubr.bf16.mxu0 0
        %2496 = vmatmul.mubr.bf16.gmra.mrb[0].mxu0 %v2362
        %v2497 = vpop.f32.mrb[0].mxu0
        %v2498 = vadd.f32 0.0, %v2497
        %v2499 = vpop.f32.mrb[0].mxu0
        %v2500 = vpop.f32.mrb[0].mxu0
        %v2501 = vadd.f32 0.0, %v2500
        %v2502 = vpop.f32.mrb[0].mxu0
        %2503 = vmatprep.mubr.bf16.mxu0 0
        %2504 = vmatmul.mubr.bf16.gmra.mrb[0].mxu0 %v2363
        %v2505 = vpop.f32.mrb[0].mxu0
        %v2506 = vadd.f32 0.0, %v2505
        %v2507 = vpop.f32.mrb[0].mxu0
        %v2508 = vpop.f32.mrb[0].mxu0
        %v2509 = vadd.f32 0.0, %v2508
        %v2510 = vpop.f32.mrb[0].mxu0
        %2511 = vmatprep.mubr.bf16.mxu0 0
        %2512 = vmatmul.mubr.bf16.gmra.mrb[0].mxu0 %v2364
        %v2513 = vpop.f32.mrb[0].mxu0
        %v2514 = vadd.f32 0.0, %v2513
        %v2515 = vpop.f32.mrb[0].mxu0
        %v2516 = vpop.f32.mrb[0].mxu0
        %v2517 = vadd.f32 0.0, %v2516
        %v2518 = vpop.f32.mrb[0].mxu0
        %2519 = vmatprep.mubr.bf16.mxu0 0
        %2520 = vmatmul.mubr.bf16.gmra.mrb[0].mxu0 %v2365
        %v2521 = vpop.f32.mrb[0].mxu0
        %v2522 = vadd.f32 0.0, %v2521
        %v2523 = vpop.f32.mrb[0].mxu0
        %v2524 = vpop.f32.mrb[0].mxu0
        %v2525 = vadd.f32 0.0, %v2524
        %v2526 = vpop.f32.mrb[0].mxu0
        %2527 = vmatprep.mubr.bf16.mxu0 0
        %2528 = vmatmul.mubr.bf16.gmra.mrb[0].mxu0 %v2366
        %v2529 = vpop.f32.mrb[0].mxu0
        %v2530 = vadd.f32 0.0, %v2529
        %v2531 = vpop.f32.mrb[0].mxu0
        %v2532 = vpop.f32.mrb[0].mxu0
        %v2533 = vadd.f32 0.0, %v2532
        %v2534 = vpop.f32.mrb[0].mxu0
        %2535 = vmatprep.mubr.bf16.mxu0 0
        %2536 = vmatmul.mubr.bf16.gmra.mrb[0].mxu0 %v2367
        %v2537 = vpop.f32.mrb[0].mxu0
        %v2538 = vadd.f32 0.0, %v2537
        %v2539 = vpop.f32.mrb[0].mxu0
        %v2540 = vpop.f32.mrb[0].mxu0
        %v2541 = vadd.f32 0.0, %v2540
        %v2542 = vpop.f32.mrb[0].mxu0
        %2543 = vmatprep.mubr.bf16.mxu0 0
        %2544 = vmatmul.mubr.bf16.gmra.mrb[0].mxu0 %v2368
        %v2545 = vpop.f32.mrb[0].mxu0
        %v2546 = vadd.f32 0.0, %v2545
        %v2547 = vpop.f32.mrb[0].mxu0
        %v2548 = vpop.f32.mrb[0].mxu0
        %v2549 = vadd.f32 0.0, %v2548
        %v2550 = vpop.f32.mrb[0].mxu0
        %2551 = vmatprep.mubr.bf16.mxu0 0
        %2552 = vmatmul.mubr.bf16.gmra.mrb[0].mxu0 %v2369
        %v2553 = vpop.f32.mrb[0].mxu0
        %v2554 = vadd.f32 0.0, %v2553
        %v2555 = vpop.f32.mrb[0].mxu0
        %v2556 = vpop.f32.mrb[0].mxu0
        %v2557 = vadd.f32 0.0, %v2556
        %v2558 = vpop.f32.mrb[0].mxu0
        %2559 = vmatprep.mubr.bf16.mxu0 0
        %2560 = vmatmul.mubr.bf16.gmra.mrb[0].mxu0 %v2370
        %v2561 = vpop.f32.mrb[0].mxu0
        %v2562 = vadd.f32 0.0, %v2561
        %v2563 = vpop.f32.mrb[0].mxu0
        %v2564 = vpop.f32.mrb[0].mxu0
        %v2565 = vadd.f32 0.0, %v2564
        %v2566 = vpop.f32.mrb[0].mxu0
        %2567 = vmatprep.mubr.bf16.mxu0 0
        %2568 = vmatmul.mubr.bf16.gmra.mrb[0].mxu0 %v2371
        %v2569 = vpop.f32.mrb[0].mxu0
        %v2570 = vadd.f32 0.0, %v2569
        %v2571 = vpop.f32.mrb[0].mxu0
        %v2572 = vpop.f32.mrb[0].mxu0
        %v2573 = vadd.f32 0.0, %v2572
        %v2574 = vpop.f32.mrb[0].mxu0
        %2575 = vmatprep.mubr.bf16.mxu0 0
        %2576 = vmatmul.mubr.bf16.gmra.mrb[0].mxu0 %v2372
        %v2577 = vpop.f32.mrb[0].mxu0
        %v2578 = vadd.f32 0.0, %v2577
        %v2579 = vpop.f32.mrb[0].mxu0
        %v2580 = vpop.f32.mrb[0].mxu0
        %v2581 = vadd.f32 0.0, %v2580
        %v2582 = vpop.f32.mrb[0].mxu0
        %2583 = vmatprep.mubr.bf16.mxu0 0
        %2584 = vmatmul.mubr.bf16.gmra.mrb[0].mxu0 %v2373
        %v2585 = vpop.f32.mrb[0].mxu0
        %v2586 = vadd.f32 0.0, %v2585
        %v2587 = vpop.f32.mrb[0].mxu0
        %v2588 = vpop.f32.mrb[0].mxu0
        %v2589 = vadd.f32 0.0, %v2588
        %v2590 = vpop.f32.mrb[0].mxu0
        %2591 = vmatprep.mubr.bf16.mxu0 0
        %2592 = vmatmul.mubr.bf16.gmra.mrb[0].mxu0 %v2374
        %v2593 = vpop.f32.mrb[0].mxu0
        %v2594 = vadd.f32 0.0, %v2593
        %v2595 = vpop.f32.mrb[0].mxu0
        %v2596 = vpop.f32.mrb[0].mxu0
        %v2597 = vadd.f32 0.0, %v2596
        %v2598 = vpop.f32.mrb[0].mxu0
        %2599 = vdwg.mxu0
        %v2600 = vadd.f32 %v2021, %v2474
        %v2601 = vadd.f32 %v2024, %v2477
        %v2602 = vadd.f32 %v2029, %v2482
        %v2603 = vadd.f32 %v2032, %v2485
        %v2604 = vadd.f32 %v2037, %v2490
        %v2605 = vadd.f32 %v2040, %v2493
        %v2606 = vadd.f32 %v2045, %v2498
        %v2607 = vadd.f32 %v2048, %v2501
        %v2608 = vadd.f32 %v2053, %v2506
        %v2609 = vadd.f32 %v2056, %v2509
        %v2610 = vadd.f32 %v2061, %v2514
        %v2611 = vadd.f32 %v2064, %v2517
        %v2612 = vadd.f32 %v2069, %v2522
        %v2613 = vadd.f32 %v2072, %v2525
        %v2614 = vadd.f32 %v2077, %v2530
        %v2615 = vadd.f32 %v2080, %v2533
        %v2616 = vadd.f32 %v2085, %v2538
        %v2617 = vadd.f32 %v2088, %v2541
        %v2618 = vadd.f32 %v2093, %v2546
        %v2619 = vadd.f32 %v2096, %v2549
        %v2620 = vadd.f32 %v2101, %v2554
        %v2621 = vadd.f32 %v2104, %v2557
        %v2622 = vadd.f32 %v2109, %v2562
        %v2623 = vadd.f32 %v2112, %v2565
        %v2624 = vadd.f32 %v2117, %v2570
        %v2625 = vadd.f32 %v2120, %v2573
        %v2626 = vadd.f32 %v2125, %v2578
        %v2627 = vadd.f32 %v2128, %v2581
        %v2628 = vadd.f32 %v2133, %v2586
        %v2629 = vadd.f32 %v2136, %v2589
        %v2630 = vadd.f32 %v2141, %v2594
        %v2631 = vadd.f32 %v2144, %v2597
        %v2632 = vld [vmem:[%s891] sm:$0xf]
        %v2633 = vld [vmem:[%s891 + $0x4] sm:$0xf]
        %v2634 = vld [vmem:[%s891 + $0xc] sm:$0xf]
        %v2635 = vld [vmem:[%s891 + $0x10] sm:$0xf]
        %v2636 = vld [vmem:[%s891 + $0x18] sm:$0xf]
        %v2637 = vld [vmem:[%s891 + $0x1c] sm:$0xf]
        %v2638 = vld [vmem:[%s891 + $0x24] sm:$0xf]
        %v2639 = vld [vmem:[%s891 + $0x28] sm:$0xf]
        %v2640 = vld [vmem:[%s891 + $0x30] sm:$0xf]
        %v2641 = vld [vmem:[%s891 + $0x34] sm:$0xf]
        %v2642 = vld [vmem:[%s891 + $0x3c] sm:$0xf]
        %v2643 = vld [vmem:[%s891 + $0x40] sm:$0xf]
        %v2644 = vld [vmem:[%s891 + $0x48] sm:$0xf]
        %v2645 = vld [vmem:[%s891 + $0x4c] sm:$0xf]
        %v2646 = vld [vmem:[%s891 + $0x54] sm:$0xf]
        %v2647 = vld [vmem:[%s891 + $0x58] sm:$0xf]
        %v2648 = vld [vmem:[%s891 + $0x60] sm:$0xf]
        %v2649 = vld [vmem:[%s891 + $0x64] sm:$0xf]
        %v2650 = vld [vmem:[%s891 + $0x6c] sm:$0xf]
        %v2651 = vld [vmem:[%s891 + $0x70] sm:$0xf]
        %v2652 = vld [vmem:[%s891 + $0x78] sm:$0xf]
        %v2653 = vld [vmem:[%s891 + $0x7c] sm:$0xf]
        %v2654 = vld [vmem:[%s891 + $0x84] sm:$0xf]
        %v2655 = vld [vmem:[%s891 + $0x88] sm:$0xf]
        %v2656 = vld [vmem:[%s891 + $0x90] sm:$0xf]
        %v2657 = vld [vmem:[%s891 + $0x94] sm:$0xf]
        %v2658 = vld [vmem:[%s891 + $0x9c] sm:$0xf]
        %v2659 = vld [vmem:[%s891 + $0xa0] sm:$0xf]
        %v2660 = vld [vmem:[%s891 + $0xa8] sm:$0xf]
        %v2661 = vld [vmem:[%s891 + $0xac] sm:$0xf]
        %v2662 = vld [vmem:[%s891 + $0xb4] sm:$0xf]
        %v2663 = vld [vmem:[%s891 + $0xb8] sm:$0xf]
        %s2664 = scalar_lea.vmem [#allocation9], 192
        %v2665 = vld [vmem:[%s2664] sm:$0xf]
        %v2666 = vld [vmem:[%s2664 + $0x4] sm:$0xf]
        %v2667 = vld [vmem:[%s2664 + $0x8] sm:$0xf]
        %v2668 = vld [vmem:[%s2664 + $0xc] sm:$0xf]
        %v2669 = vld [vmem:[%s2664 + $0x10] sm:$0xf]
        %v2670 = vld [vmem:[%s2664 + $0x14] sm:$0xf]
        %v2671 = vld [vmem:[%s2664 + $0x18] sm:$0xf]
        %v2672 = vld [vmem:[%s2664 + $0x1c] sm:$0xf]
        %v2673 = vld [vmem:[%s2664 + $0x20] sm:$0xf]
        %v2674 = vld [vmem:[%s2664 + $0x24] sm:$0xf]
        %v2675 = vld [vmem:[%s2664 + $0x28] sm:$0xf]
        %v2676 = vld [vmem:[%s2664 + $0x2c] sm:$0xf]
        %v2677 = vld [vmem:[%s2664 + $0x30] sm:$0xf]
        %v2678 = vld [vmem:[%s2664 + $0x34] sm:$0xf]
        %v2679 = vld [vmem:[%s2664 + $0x38] sm:$0xf]
        %v2680 = vld [vmem:[%s2664 + $0x3c] sm:$0xf]
        %v2713 = vunpack.c.l.b16 %v2632
        %v2714 = vunpack.c.l.b16 %v2633
        %v2715 = vunpack.c.l.b16 %v2634
        %v2716 = vunpack.c.l.b16 %v2635
        %v2717 = vunpack.c.l.b16 %v2636
        %v2718 = vunpack.c.l.b16 %v2637
        %v2719 = vunpack.c.l.b16 %v2638
        %v2720 = vunpack.c.l.b16 %v2639
        %v2721 = vunpack.c.l.b16 %v2640
        %v2722 = vunpack.c.l.b16 %v2641
        %v2723 = vunpack.c.l.b16 %v2642
        %v2724 = vunpack.c.l.b16 %v2643
        %v2725 = vunpack.c.l.b16 %v2644
        %v2726 = vunpack.c.l.b16 %v2645
        %v2727 = vunpack.c.l.b16 %v2646
        %v2728 = vunpack.c.l.b16 %v2647
        %v2729 = vunpack.c.l.b16 %v2648
        %v2730 = vunpack.c.l.b16 %v2649
        %v2731 = vunpack.c.l.b16 %v2650
        %v2732 = vunpack.c.l.b16 %v2651
        %v2733 = vunpack.c.l.b16 %v2652
        %v2734 = vunpack.c.l.b16 %v2653
        %v2735 = vunpack.c.l.b16 %v2654
        %v2736 = vunpack.c.l.b16 %v2655
        %v2737 = vunpack.c.l.b16 %v2656
        %v2738 = vunpack.c.l.b16 %v2657
        %v2739 = vunpack.c.l.b16 %v2658
        %v2740 = vunpack.c.l.b16 %v2659
        %v2741 = vunpack.c.l.b16 %v2660
        %v2742 = vunpack.c.l.b16 %v2661
        %v2743 = vunpack.c.l.b16 %v2662
        %v2744 = vunpack.c.l.b16 %v2663
        %v2745 = vpack.c.b16 %v2714, %v2713
        %v2746 = vpack.c.b16 %v2716, %v2715
        %v2747 = vpack.c.b16 %v2718, %v2717
        %v2748 = vpack.c.b16 %v2720, %v2719
        %v2749 = vpack.c.b16 %v2722, %v2721
        %v2750 = vpack.c.b16 %v2724, %v2723
        %v2751 = vpack.c.b16 %v2726, %v2725
        %v2752 = vpack.c.b16 %v2728, %v2727
        %v2753 = vpack.c.b16 %v2730, %v2729
        %v2754 = vpack.c.b16 %v2732, %v2731
        %v2755 = vpack.c.b16 %v2734, %v2733
        %v2756 = vpack.c.b16 %v2736, %v2735
        %v2757 = vpack.c.b16 %v2738, %v2737
        %v2758 = vpack.c.b16 %v2740, %v2739
        %v2759 = vpack.c.b16 %v2742, %v2741
        %v2760 = vpack.c.b16 %v2744, %v2743
        %v2793 = vunpack.c.l.b16 %v2665
        %v2794 = vunpack.c.l.b16 %v2666
        %v2795 = vunpack.c.l.b16 %v2667
        %v2796 = vunpack.c.l.b16 %v2668
        %v2797 = vunpack.c.l.b16 %v2669
        %v2798 = vunpack.c.l.b16 %v2670
        %v2799 = vunpack.c.l.b16 %v2671
        %v2800 = vunpack.c.l.b16 %v2672
        %v2801 = vunpack.c.l.b16 %v2673
        %v2802 = vunpack.c.l.b16 %v2674
        %v2803 = vunpack.c.l.b16 %v2675
        %v2804 = vunpack.c.l.b16 %v2676
        %v2805 = vunpack.c.l.b16 %v2677
        %v2806 = vunpack.c.l.b16 %v2678
        %v2807 = vunpack.c.l.b16 %v2679
        %v2808 = vunpack.c.l.b16 %v2680
        %v2809 = vpack.c.b16 %v2794, %v2793
        %v2810 = vpack.c.b16 %v2796, %v2795
        %v2811 = vpack.c.b16 %v2798, %v2797
        %v2812 = vpack.c.b16 %v2800, %v2799
        %v2813 = vpack.c.b16 %v2802, %v2801
        %v2814 = vpack.c.b16 %v2804, %v2803
        %v2815 = vpack.c.b16 %v2806, %v2805
        %v2816 = vpack.c.b16 %v2808, %v2807
        %2825 = vmatprep.subr.bf16.mxu0 0
        %2826 = vmatpush1.bf16.msra.mxu0 %v2809
        %2827 = vmatprep.subr.bf16.mxu0 0
        %2828 = vmatpush1.bf16.msra.mxu0 %v2810
        %2829 = vmatprep.subr.bf16.mxu0 0
        %2830 = vmatpush1.bf16.msra.mxu0 %v2811
        %2831 = vmatprep.subr.bf16.mxu0 0
        %2832 = vmatpush1.bf16.msra.mxu0 %v2812
        %2833 = vmatprep.subr.bf16.mxu0 0
        %2834 = vmatpush1.bf16.msra.mxu0 %v2813
        %2835 = vmatprep.subr.bf16.mxu0 0
        %2836 = vmatpush1.bf16.msra.mxu0 %v2814
        %2837 = vmatprep.subr.bf16.mxu0 0
        %2838 = vmatpush1.bf16.msra.mxu0 %v2815
        %2839 = vmatprep.subr.bf16.mxu0 0
        %2840 = vmatpush1.bf16.msra.mxu0 %v2816
        %2841 = vmatprep.subr.bf16.mxu0 0
        %2842 = vmatpush1.bf16.msra.mxu0 0
        %2843 = vmatprep.subr.bf16.mxu0 0
        %2844 = vmatpush1.bf16.msra.mxu0 0
        %2845 = vmatprep.subr.bf16.mxu0 0
        %2846 = vmatpush1.bf16.msra.mxu0 0
        %2847 = vmatprep.subr.bf16.mxu0 0
        %2848 = vmatpush1.bf16.msra.mxu0 0
        %2849 = vmatprep.subr.bf16.mxu0 0
        %2850 = vmatpush1.bf16.msra.mxu0 0
        %2851 = vmatprep.subr.bf16.mxu0 0
        %2852 = vmatpush1.bf16.msra.mxu0 0
        %2853 = vmatprep.subr.bf16.mxu0 0
        %2854 = vmatpush1.bf16.msra.mxu0 0
        %2855 = vmatprep.subr.bf16.mxu0 0
        %2856 = vmatpush1.bf16.msra.mxu0 0
        %2857 = vmatprep.mubr.bf16.mxu0 0
        %2858 = vmatmul.mubr.bf16.gmra.mrb[0].mxu0 %v2745
        %v2859 = vpop.f32.mrb[0].mxu0
        %v2860 = vadd.f32 0.0, %v2859
        %v2861 = vpop.f32.mrb[0].mxu0
        %v2862 = vpop.f32.mrb[0].mxu0
        %v2863 = vadd.f32 0.0, %v2862
        %v2864 = vpop.f32.mrb[0].mxu0
        %2865 = vmatprep.mubr.bf16.mxu0 0
        %2866 = vmatmul.mubr.bf16.gmra.mrb[0].mxu0 %v2746
        %v2867 = vpop.f32.mrb[0].mxu0
        %v2868 = vadd.f32 0.0, %v2867
        %v2869 = vpop.f32.mrb[0].mxu0
        %v2870 = vpop.f32.mrb[0].mxu0
        %v2871 = vadd.f32 0.0, %v2870
        %v2872 = vpop.f32.mrb[0].mxu0
        %2873 = vmatprep.mubr.bf16.mxu0 0
        %2874 = vmatmul.mubr.bf16.gmra.mrb[0].mxu0 %v2747
        %v2875 = vpop.f32.mrb[0].mxu0
        %v2876 = vadd.f32 0.0, %v2875
        %v2877 = vpop.f32.mrb[0].mxu0
        %v2878 = vpop.f32.mrb[0].mxu0
        %v2879 = vadd.f32 0.0, %v2878
        %v2880 = vpop.f32.mrb[0].mxu0
        %2881 = vmatprep.mubr.bf16.mxu0 0
        %2882 = vmatmul.mubr.bf16.gmra.mrb[0].mxu0 %v2748
        %v2883 = vpop.f32.mrb[0].mxu0
        %v2884 = vadd.f32 0.0, %v2883
        %v2885 = vpop.f32.mrb[0].mxu0
        %v2886 = vpop.f32.mrb[0].mxu0
        %v2887 = vadd.f32 0.0, %v2886
        %v2888 = vpop.f32.mrb[0].mxu0
        %2889 = vmatprep.mubr.bf16.mxu0 0
        %2890 = vmatmul.mubr.bf16.gmra.mrb[0].mxu0 %v2749
        %v2891 = vpop.f32.mrb[0].mxu0
        %v2892 = vadd.f32 0.0, %v2891
        %v2893 = vpop.f32.mrb[0].mxu0
        %v2894 = vpop.f32.mrb[0].mxu0
        %v2895 = vadd.f32 0.0, %v2894
        %v2896 = vpop.f32.mrb[0].mxu0
        %2897 = vmatprep.mubr.bf16.mxu0 0
        %2898 = vmatmul.mubr.bf16.gmra.mrb[0].mxu0 %v2750
        %v2899 = vpop.f32.mrb[0].mxu0
        %v2900 = vadd.f32 0.0, %v2899
        %v2901 = vpop.f32.mrb[0].mxu0
        %v2902 = vpop.f32.mrb[0].mxu0
        %v2903 = vadd.f32 0.0, %v2902
        %v2904 = vpop.f32.mrb[0].mxu0
        %2905 = vmatprep.mubr.bf16.mxu0 0
        %2906 = vmatmul.mubr.bf16.gmra.mrb[0].mxu0 %v2751
        %v2907 = vpop.f32.mrb[0].mxu0
        %v2908 = vadd.f32 0.0, %v2907
        %v2909 = vpop.f32.mrb[0].mxu0
        %v2910 = vpop.f32.mrb[0].mxu0
        %v2911 = vadd.f32 0.0, %v2910
        %v2912 = vpop.f32.mrb[0].mxu0
        %2913 = vmatprep.mubr.bf16.mxu0 0
        %2914 = vmatmul.mubr.bf16.gmra.mrb[0].mxu0 %v2752
        %v2915 = vpop.f32.mrb[0].mxu0
        %v2916 = vadd.f32 0.0, %v2915
        %v2917 = vpop.f32.mrb[0].mxu0
        %v2918 = vpop.f32.mrb[0].mxu0
        %v2919 = vadd.f32 0.0, %v2918
        %v2920 = vpop.f32.mrb[0].mxu0
        %2921 = vmatprep.mubr.bf16.mxu0 0
        %2922 = vmatmul.mubr.bf16.gmra.mrb[0].mxu0 %v2753
        %v2923 = vpop.f32.mrb[0].mxu0
        %v2924 = vadd.f32 0.0, %v2923
        %v2925 = vpop.f32.mrb[0].mxu0
        %v2926 = vpop.f32.mrb[0].mxu0
        %v2927 = vadd.f32 0.0, %v2926
        %v2928 = vpop.f32.mrb[0].mxu0
        %2929 = vmatprep.mubr.bf16.mxu0 0
        %2930 = vmatmul.mubr.bf16.gmra.mrb[0].mxu0 %v2754
        %v2931 = vpop.f32.mrb[0].mxu0
        %v2932 = vadd.f32 0.0, %v2931
        %v2933 = vpop.f32.mrb[0].mxu0
        %v2934 = vpop.f32.mrb[0].mxu0
        %v2935 = vadd.f32 0.0, %v2934
        %v2936 = vpop.f32.mrb[0].mxu0
        %2937 = vmatprep.mubr.bf16.mxu0 0
        %2938 = vmatmul.mubr.bf16.gmra.mrb[0].mxu0 %v2755
        %v2939 = vpop.f32.mrb[0].mxu0
        %v2940 = vadd.f32 0.0, %v2939
        %v2941 = vpop.f32.mrb[0].mxu0
        %v2942 = vpop.f32.mrb[0].mxu0
        %v2943 = vadd.f32 0.0, %v2942
        %v2944 = vpop.f32.mrb[0].mxu0
        %2945 = vmatprep.mubr.bf16.mxu0 0
        %2946 = vmatmul.mubr.bf16.gmra.mrb[0].mxu0 %v2756
        %v2947 = vpop.f32.mrb[0].mxu0
        %v2948 = vadd.f32 0.0, %v2947
        %v2949 = vpop.f32.mrb[0].mxu0
        %v2950 = vpop.f32.mrb[0].mxu0
        %v2951 = vadd.f32 0.0, %v2950
        %v2952 = vpop.f32.mrb[0].mxu0
        %2953 = vmatprep.mubr.bf16.mxu0 0
        %2954 = vmatmul.mubr.bf16.gmra.mrb[0].mxu0 %v2757
        %v2955 = vpop.f32.mrb[0].mxu0
        %v2956 = vadd.f32 0.0, %v2955
        %v2957 = vpop.f32.mrb[0].mxu0
        %v2958 = vpop.f32.mrb[0].mxu0
        %v2959 = vadd.f32 0.0, %v2958
        %v2960 = vpop.f32.mrb[0].mxu0
        %2961 = vmatprep.mubr.bf16.mxu0 0
        %2962 = vmatmul.mubr.bf16.gmra.mrb[0].mxu0 %v2758
        %v2963 = vpop.f32.mrb[0].mxu0
        %v2964 = vadd.f32 0.0, %v2963
        %v2965 = vpop.f32.mrb[0].mxu0
        %v2966 = vpop.f32.mrb[0].mxu0
        %v2967 = vadd.f32 0.0, %v2966
        %v2968 = vpop.f32.mrb[0].mxu0
        %2969 = vmatprep.mubr.bf16.mxu0 0
        %2970 = vmatmul.mubr.bf16.gmra.mrb[0].mxu0 %v2759
        %v2971 = vpop.f32.mrb[0].mxu0
        %v2972 = vadd.f32 0.0, %v2971
        %v2973 = vpop.f32.mrb[0].mxu0
        %v2974 = vpop.f32.mrb[0].mxu0
        %v2975 = vadd.f32 0.0, %v2974
        %v2976 = vpop.f32.mrb[0].mxu0
        %2977 = vmatprep.mubr.bf16.mxu0 0
        %2978 = vmatmul.mubr.bf16.gmra.mrb[0].mxu0 %v2760
        %v2979 = vpop.f32.mrb[0].mxu0
        %v2980 = vadd.f32 0.0, %v2979
        %v2981 = vpop.f32.mrb[0].mxu0
        %v2982 = vpop.f32.mrb[0].mxu0
        %v2983 = vadd.f32 0.0, %v2982
        %v2984 = vpop.f32.mrb[0].mxu0
        %2985 = vdwg.mxu0
        %v2986 = vadd.f32 %v2600, %v2860
        %v2987 = vadd.f32 %v2601, %v2863
        %v2988 = vadd.f32 %v2602, %v2868
        %v2989 = vadd.f32 %v2603, %v2871
        %v2990 = vadd.f32 %v2604, %v2876
        %v2991 = vadd.f32 %v2605, %v2879
        %v2992 = vadd.f32 %v2606, %v2884
        %v2993 = vadd.f32 %v2607, %v2887
        %v2994 = vadd.f32 %v2608, %v2892
        %v2995 = vadd.f32 %v2609, %v2895
        %v2996 = vadd.f32 %v2610, %v2900
        %v2997 = vadd.f32 %v2611, %v2903
        %v2998 = vadd.f32 %v2612, %v2908
        %v2999 = vadd.f32 %v2613, %v2911
        %v3000 = vadd.f32 %v2614, %v2916
        %v3001 = vadd.f32 %v2615, %v2919
        %v3002 = vadd.f32 %v2616, %v2924
        %v3003 = vadd.f32 %v2617, %v2927
        %v3004 = vadd.f32 %v2618, %v2932
        %v3005 = vadd.f32 %v2619, %v2935
        %v3006 = vadd.f32 %v2620, %v2940
        %v3007 = vadd.f32 %v2621, %v2943
        %v3008 = vadd.f32 %v2622, %v2948
        %v3009 = vadd.f32 %v2623, %v2951
        %v3010 = vadd.f32 %v2624, %v2956
        %v3011 = vadd.f32 %v2625, %v2959
        %v3012 = vadd.f32 %v2626, %v2964
        %v3013 = vadd.f32 %v2627, %v2967
        %v3014 = vadd.f32 %v2628, %v2972
        %v3015 = vadd.f32 %v2629, %v2975
        %v3016 = vadd.f32 %v2630, %v2980
        %v3017 = vadd.f32 %v2631, %v2983
        %v3018 = vld [vmem:[%s891] sm:$0xf]
        %v3019 = vld [vmem:[%s891 + $0x4] sm:$0xf]
        %v3020 = vld [vmem:[%s891 + $0x8] sm:$0x1]
        %v3021 = vld [vmem:[%s891 + $0xc] sm:$0xf]
        %v3022 = vld [vmem:[%s891 + $0x10] sm:$0xf]
        %v3023 = vld [vmem:[%s891 + $0x14] sm:$0x1]
        %v3024 = vld [vmem:[%s891 + $0x18] sm:$0xf]
        %v3025 = vld [vmem:[%s891 + $0x1c] sm:$0xf]
        %v3026 = vld [vmem:[%s891 + $0x20] sm:$0x1]
        %v3027 = vld [vmem:[%s891 + $0x24] sm:$0xf]
        %v3028 = vld [vmem:[%s891 + $0x28] sm:$0xf]
        %v3029 = vld [vmem:[%s891 + $0x2c] sm:$0x1]
        %v3030 = vld [vmem:[%s891 + $0x30] sm:$0xf]
        %v3031 = vld [vmem:[%s891 + $0x34] sm:$0xf]
        %v3032 = vld [vmem:[%s891 + $0x38] sm:$0x1]
        %v3033 = vld [vmem:[%s891 + $0x3c] sm:$0xf]
        %v3034 = vld [vmem:[%s891 + $0x40] sm:$0xf]
        %v3035 = vld [vmem:[%s891 + $0x44] sm:$0x1]
        %v3036 = vld [vmem:[%s891 + $0x48] sm:$0xf]
        %v3037 = vld [vmem:[%s891 + $0x4c] sm:$0xf]
        %v3038 = vld [vmem:[%s891 + $0x50] sm:$0x1]
        %v3039 = vld [vmem:[%s891 + $0x54] sm:$0xf]
        %v3040 = vld [vmem:[%s891 + $0x58] sm:$0xf]
        %v3041 = vld [vmem:[%s891 + $0x5c] sm:$0x1]
        %v3042 = vld [vmem:[%s891 + $0x60] sm:$0xf]
        %v3043 = vld [vmem:[%s891 + $0x64] sm:$0xf]
        %v3044 = vld [vmem:[%s891 + $0x68] sm:$0x1]
        %v3045 = vld [vmem:[%s891 + $0x6c] sm:$0xf]
        %v3046 = vld [vmem:[%s891 + $0x70] sm:$0xf]
        %v3047 = vld [vmem:[%s891 + $0x74] sm:$0x1]
        %v3048 = vld [vmem:[%s891 + $0x78] sm:$0xf]
        %v3049 = vld [vmem:[%s891 + $0x7c] sm:$0xf]
        %v3050 = vld [vmem:[%s891 + $0x80] sm:$0x1]
        %v3051 = vld [vmem:[%s891 + $0x84] sm:$0xf]
        %v3052 = vld [vmem:[%s891 + $0x88] sm:$0xf]
        %v3053 = vld [vmem:[%s891 + $0x8c] sm:$0x1]
        %v3054 = vld [vmem:[%s891 + $0x90] sm:$0xf]
        %v3055 = vld [vmem:[%s891 + $0x94] sm:$0xf]
        %v3056 = vld [vmem:[%s891 + $0x98] sm:$0x1]
        %v3057 = vld [vmem:[%s891 + $0x9c] sm:$0xf]
        %v3058 = vld [vmem:[%s891 + $0xa0] sm:$0xf]
        %v3059 = vld [vmem:[%s891 + $0xa4] sm:$0x1]
        %v3060 = vld [vmem:[%s891 + $0xa8] sm:$0xf]
        %v3061 = vld [vmem:[%s891 + $0xac] sm:$0xf]
        %v3062 = vld [vmem:[%s891 + $0xb0] sm:$0x1]
        %v3063 = vld [vmem:[%s891 + $0xb4] sm:$0xf]
        %v3064 = vld [vmem:[%s891 + $0xb8] sm:$0xf]
        %v3065 = vld [vmem:[%s891 + $0xbc] sm:$0x1]
        %v3067 = vshrl.u32 %v3018, 16
        %v3069 = vrot.slane %v3067, 4
        %v3070 = vshll.u32 %v3018, 16
        %v3072 = vrot.slane %v3070, 5
        %v3073 = vor.u32 %v3069, %v3072
        %v3074 = vrot.slane %v3073, 4
        %v3076 = vshll.u32 %v3019, 16
        %v3078 = vrot.slane %v3076, 5
        %v3079 = vsel %vm1167, %v3074, %v3078
        %v3080 = vshrl.u32 %v3019, 16
        %v3082 = vrot.slane %v3080, 4
        %v3083 = vor.u32 %v3082, %v3078
        %v3084 = vrot.slane %v3083, 4
        %v3086 = vshll.u32 %v3020, 16
        %v3088 = vrot.slane %v3086, 5
        %v3089 = vsel %vm1167, %v3084, %v3088
        %v3091 = vshrl.u32 %v3021, 16
        %v3093 = vrot.slane %v3091, 4
        %v3094 = vshll.u32 %v3021, 16
        %v3096 = vrot.slane %v3094, 5
        %v3097 = vor.u32 %v3093, %v3096
        %v3098 = vrot.slane %v3097, 4
        %v3100 = vshll.u32 %v3022, 16
        %v3102 = vrot.slane %v3100, 5
        %v3103 = vsel %vm1167, %v3098, %v3102
        %v3104 = vshrl.u32 %v3022, 16
        %v3106 = vrot.slane %v3104, 4
        %v3107 = vor.u32 %v3106, %v3102
        %v3108 = vrot.slane %v3107, 4
        %v3110 = vshll.u32 %v3023, 16
        %v3112 = vrot.slane %v3110, 5
        %v3113 = vsel %vm1167, %v3108, %v3112
        %v3115 = vshrl.u32 %v3024, 16
        %v3117 = vrot.slane %v3115, 4
        %v3118 = vshll.u32 %v3024, 16
        %v3120 = vrot.slane %v3118, 5
        %v3121 = vor.u32 %v3117, %v3120
        %v3122 = vrot.slane %v3121, 4
        %v3124 = vshll.u32 %v3025, 16
        %v3126 = vrot.slane %v3124, 5
        %v3127 = vsel %vm1167, %v3122, %v3126
        %v3128 = vshrl.u32 %v3025, 16
        %v3130 = vrot.slane %v3128, 4
        %v3131 = vor.u32 %v3130, %v3126
        %v3132 = vrot.slane %v3131, 4
        %v3134 = vshll.u32 %v3026, 16
        %v3136 = vrot.slane %v3134, 5
        %v3137 = vsel %vm1167, %v3132, %v3136
        %v3139 = vshrl.u32 %v3027, 16
        %v3141 = vrot.slane %v3139, 4
        %v3142 = vshll.u32 %v3027, 16
        %v3144 = vrot.slane %v3142, 5
        %v3145 = vor.u32 %v3141, %v3144
        %v3146 = vrot.slane %v3145, 4
        %v3148 = vshll.u32 %v3028, 16
        %v3150 = vrot.slane %v3148, 5
        %v3151 = vsel %vm1167, %v3146, %v3150
        %v3152 = vshrl.u32 %v3028, 16
        %v3154 = vrot.slane %v3152, 4
        %v3155 = vor.u32 %v3154, %v3150
        %v3156 = vrot.slane %v3155, 4
        %v3158 = vshll.u32 %v3029, 16
        %v3160 = vrot.slane %v3158, 5
        %v3161 = vsel %vm1167, %v3156, %v3160
        %v3163 = vshrl.u32 %v3030, 16
        %v3165 = vrot.slane %v3163, 4
        %v3166 = vshll.u32 %v3030, 16
        %v3168 = vrot.slane %v3166, 5
        %v3169 = vor.u32 %v3165, %v3168
        %v3170 = vrot.slane %v3169, 4
        %v3172 = vshll.u32 %v3031, 16
        %v3174 = vrot.slane %v3172, 5
        %v3175 = vsel %vm1167, %v3170, %v3174
        %v3176 = vshrl.u32 %v3031, 16
        %v3178 = vrot.slane %v3176, 4
        %v3179 = vor.u32 %v3178, %v3174
        %v3180 = vrot.slane %v3179, 4
        %v3182 = vshll.u32 %v3032, 16
        %v3184 = vrot.slane %v3182, 5
        %v3185 = vsel %vm1167, %v3180, %v3184
        %v3187 = vshrl.u32 %v3033, 16
        %v3189 = vrot.slane %v3187, 4
        %v3190 = vshll.u32 %v3033, 16
        %v3192 = vrot.slane %v3190, 5
        %v3193 = vor.u32 %v3189, %v3192
        %v3194 = vrot.slane %v3193, 4
        %v3196 = vshll.u32 %v3034, 16
        %v3198 = vrot.slane %v3196, 5
        %v3199 = vsel %vm1167, %v3194, %v3198
        %v3200 = vshrl.u32 %v3034, 16
        %v3202 = vrot.slane %v3200, 4
        %v3203 = vor.u32 %v3202, %v3198
        %v3204 = vrot.slane %v3203, 4
        %v3206 = vshll.u32 %v3035, 16
        %v3208 = vrot.slane %v3206, 5
        %v3209 = vsel %vm1167, %v3204, %v3208
        %v3211 = vshrl.u32 %v3036, 16
        %v3213 = vrot.slane %v3211, 4
        %v3214 = vshll.u32 %v3036, 16
        %v3216 = vrot.slane %v3214, 5
        %v3217 = vor.u32 %v3213, %v3216
        %v3218 = vrot.slane %v3217, 4
        %v3220 = vshll.u32 %v3037, 16
        %v3222 = vrot.slane %v3220, 5
        %v3223 = vsel %vm1167, %v3218, %v3222
        %v3224 = vshrl.u32 %v3037, 16
        %v3226 = vrot.slane %v3224, 4
        %v3227 = vor.u32 %v3226, %v3222
        %v3228 = vrot.slane %v3227, 4
        %v3230 = vshll.u32 %v3038, 16
        %v3232 = vrot.slane %v3230, 5
        %v3233 = vsel %vm1167, %v3228, %v3232
        %v3235 = vshrl.u32 %v3039, 16
        %v3237 = vrot.slane %v3235, 4
        %v3238 = vshll.u32 %v3039, 16
        %v3240 = vrot.slane %v3238, 5
        %v3241 = vor.u32 %v3237, %v3240
        %v3242 = vrot.slane %v3241, 4
        %v3244 = vshll.u32 %v3040, 16
        %v3246 = vrot.slane %v3244, 5
        %v3247 = vsel %vm1167, %v3242, %v3246
        %v3248 = vshrl.u32 %v3040, 16
        %v3250 = vrot.slane %v3248, 4
        %v3251 = vor.u32 %v3250, %v3246
        %v3252 = vrot.slane %v3251, 4
        %v3254 = vshll.u32 %v3041, 16
        %v3256 = vrot.slane %v3254, 5
        %v3257 = vsel %vm1167, %v3252, %v3256
        %v3259 = vshrl.u32 %v3042, 16
        %v3261 = vrot.slane %v3259, 4
        %v3262 = vshll.u32 %v3042, 16
        %v3264 = vrot.slane %v3262, 5
        %v3265 = vor.u32 %v3261, %v3264
        %v3266 = vrot.slane %v3265, 4
        %v3268 = vshll.u32 %v3043, 16
        %v3270 = vrot.slane %v3268, 5
        %v3271 = vsel %vm1167, %v3266, %v3270
        %v3272 = vshrl.u32 %v3043, 16
        %v3274 = vrot.slane %v3272, 4
        %v3275 = vor.u32 %v3274, %v3270
        %v3276 = vrot.slane %v3275, 4
        %v3278 = vshll.u32 %v3044, 16
        %v3280 = vrot.slane %v3278, 5
        %v3281 = vsel %vm1167, %v3276, %v3280
        %v3283 = vshrl.u32 %v3045, 16
        %v3285 = vrot.slane %v3283, 4
        %v3286 = vshll.u32 %v3045, 16
        %v3288 = vrot.slane %v3286, 5
        %v3289 = vor.u32 %v3285, %v3288
        %v3290 = vrot.slane %v3289, 4
        %v3292 = vshll.u32 %v3046, 16
        %v3294 = vrot.slane %v3292, 5
        %v3295 = vsel %vm1167, %v3290, %v3294
        %v3296 = vshrl.u32 %v3046, 16
        %v3298 = vrot.slane %v3296, 4
        %v3299 = vor.u32 %v3298, %v3294
        %v3300 = vrot.slane %v3299, 4
        %v3302 = vshll.u32 %v3047, 16
        %v3304 = vrot.slane %v3302, 5
        %v3305 = vsel %vm1167, %v3300, %v3304
        %v3307 = vshrl.u32 %v3048, 16
        %v3309 = vrot.slane %v3307, 4
        %v3310 = vshll.u32 %v3048, 16
        %v3312 = vrot.slane %v3310, 5
        %v3313 = vor.u32 %v3309, %v3312
        %v3314 = vrot.slane %v3313, 4
        %v3316 = vshll.u32 %v3049, 16
        %v3318 = vrot.slane %v3316, 5
        %v3319 = vsel %vm1167, %v3314, %v3318
        %v3320 = vshrl.u32 %v3049, 16
        %v3322 = vrot.slane %v3320, 4
        %v3323 = vor.u32 %v3322, %v3318
        %v3324 = vrot.slane %v3323, 4
        %v3326 = vshll.u32 %v3050, 16
        %v3328 = vrot.slane %v3326, 5
        %v3329 = vsel %vm1167, %v3324, %v3328
        %v3331 = vshrl.u32 %v3051, 16
        %v3333 = vrot.slane %v3331, 4
        %v3334 = vshll.u32 %v3051, 16
        %v3336 = vrot.slane %v3334, 5
        %v3337 = vor.u32 %v3333, %v3336
        %v3338 = vrot.slane %v3337, 4
        %v3340 = vshll.u32 %v3052, 16
        %v3342 = vrot.slane %v3340, 5
        %v3343 = vsel %vm1167, %v3338, %v3342
        %v3344 = vshrl.u32 %v3052, 16
        %v3346 = vrot.slane %v3344, 4
        %v3347 = vor.u32 %v3346, %v3342
        %v3348 = vrot.slane %v3347, 4
        %v3350 = vshll.u32 %v3053, 16
        %v3352 = vrot.slane %v3350, 5
        %v3353 = vsel %vm1167, %v3348, %v3352
        %v3355 = vshrl.u32 %v3054, 16
        %v3357 = vrot.slane %v3355, 4
        %v3358 = vshll.u32 %v3054, 16
        %v3360 = vrot.slane %v3358, 5
        %v3361 = vor.u32 %v3357, %v3360
        %v3362 = vrot.slane %v3361, 4
        %v3364 = vshll.u32 %v3055, 16
        %v3366 = vrot.slane %v3364, 5
        %v3367 = vsel %vm1167, %v3362, %v3366
        %v3368 = vshrl.u32 %v3055, 16
        %v3370 = vrot.slane %v3368, 4
        %v3371 = vor.u32 %v3370, %v3366
        %v3372 = vrot.slane %v3371, 4
        %v3374 = vshll.u32 %v3056, 16
        %v3376 = vrot.slane %v3374, 5
        %v3377 = vsel %vm1167, %v3372, %v3376
        %v3379 = vshrl.u32 %v3057, 16
        %v3381 = vrot.slane %v3379, 4
        %v3382 = vshll.u32 %v3057, 16
        %v3384 = vrot.slane %v3382, 5
        %v3385 = vor.u32 %v3381, %v3384
        %v3386 = vrot.slane %v3385, 4
        %v3388 = vshll.u32 %v3058, 16
        %v3390 = vrot.slane %v3388, 5
        %v3391 = vsel %vm1167, %v3386, %v3390
        %v3392 = vshrl.u32 %v3058, 16
        %v3394 = vrot.slane %v3392, 4
        %v3395 = vor.u32 %v3394, %v3390
        %v3396 = vrot.slane %v3395, 4
        %v3398 = vshll.u32 %v3059, 16
        %v3400 = vrot.slane %v3398, 5
        %v3401 = vsel %vm1167, %v3396, %v3400
        %v3403 = vshrl.u32 %v3060, 16
        %v3405 = vrot.slane %v3403, 4
        %v3406 = vshll.u32 %v3060, 16
        %v3408 = vrot.slane %v3406, 5
        %v3409 = vor.u32 %v3405, %v3408
        %v3410 = vrot.slane %v3409, 4
        %v3412 = vshll.u32 %v3061, 16
        %v3414 = vrot.slane %v3412, 5
        %v3415 = vsel %vm1167, %v3410, %v3414
        %v3416 = vshrl.u32 %v3061, 16
        %v3418 = vrot.slane %v3416, 4
        %v3419 = vor.u32 %v3418, %v3414
        %v3420 = vrot.slane %v3419, 4
        %v3422 = vshll.u32 %v3062, 16
        %v3424 = vrot.slane %v3422, 5
        %v3425 = vsel %vm1167, %v3420, %v3424
        %v3427 = vshrl.u32 %v3063, 16
        %v3429 = vrot.slane %v3427, 4
        %v3430 = vshll.u32 %v3063, 16
        %v3432 = vrot.slane %v3430, 5
        %v3433 = vor.u32 %v3429, %v3432
        %v3434 = vrot.slane %v3433, 4
        %v3436 = vshll.u32 %v3064, 16
        %v3438 = vrot.slane %v3436, 5
        %v3439 = vsel %vm1167, %v3434, %v3438
        %v3440 = vshrl.u32 %v3064, 16
        %v3442 = vrot.slane %v3440, 4
        %v3443 = vor.u32 %v3442, %v3438
        %v3444 = vrot.slane %v3443, 4
        %v3446 = vshll.u32 %v3065, 16
        %v3448 = vrot.slane %v3446, 5
        %v3449 = vsel %vm1167, %v3444, %v3448
        %s3450 = scalar_lea.vmem [#allocation9], 256
        %v3451 = vld [vmem:[%s3450] sm:$0xf]
        %v3452 = vld [vmem:[%s3450 + $0x4] sm:$0xf]
        %v3453 = vld [vmem:[%s3450 + $0x8] sm:$0xf]
        %v3454 = vld [vmem:[%s3450 + $0xc] sm:$0xf]
        %v3455 = vld [vmem:[%s3450 + $0x10] sm:$0xf]
        %v3456 = vld [vmem:[%s3450 + $0x14] sm:$0xf]
        %v3457 = vld [vmem:[%s3450 + $0x18] sm:$0xf]
        %v3458 = vld [vmem:[%s3450 + $0x1c] sm:$0xf]
        %v3459 = vld [vmem:[%s3450 + $0x20] sm:$0xf]
        %v3460 = vld [vmem:[%s3450 + $0x24] sm:$0xf]
        %v3461 = vld [vmem:[%s3450 + $0x28] sm:$0xf]
        %v3462 = vld [vmem:[%s3450 + $0x2c] sm:$0xf]
        %v3463 = vld [vmem:[%s3450 + $0x30] sm:$0xf]
        %v3464 = vld [vmem:[%s3450 + $0x34] sm:$0xf]
        %v3465 = vld [vmem:[%s3450 + $0x38] sm:$0xf]
        %v3466 = vld [vmem:[%s3450 + $0x3c] sm:$0xf]
        %v3467 = vunpack.c.l.b16 %v3079
        %v3468 = vunpack.c.l.b16 %v3089
        %v3469 = vunpack.c.l.b16 %v3103
        %v3470 = vunpack.c.l.b16 %v3113
        %v3471 = vunpack.c.l.b16 %v3127
        %v3472 = vunpack.c.l.b16 %v3137
        %v3473 = vunpack.c.l.b16 %v3151
        %v3474 = vunpack.c.l.b16 %v3161
        %v3475 = vunpack.c.l.b16 %v3175
        %v3476 = vunpack.c.l.b16 %v3185
        %v3477 = vunpack.c.l.b16 %v3199
        %v3478 = vunpack.c.l.b16 %v3209
        %v3479 = vunpack.c.l.b16 %v3223
        %v3480 = vunpack.c.l.b16 %v3233
        %v3481 = vunpack.c.l.b16 %v3247
        %v3482 = vunpack.c.l.b16 %v3257
        %v3483 = vunpack.c.l.b16 %v3271
        %v3484 = vunpack.c.l.b16 %v3281
        %v3485 = vunpack.c.l.b16 %v3295
        %v3486 = vunpack.c.l.b16 %v3305
        %v3487 = vunpack.c.l.b16 %v3319
        %v3488 = vunpack.c.l.b16 %v3329
        %v3489 = vunpack.c.l.b16 %v3343
        %v3490 = vunpack.c.l.b16 %v3353
        %v3491 = vunpack.c.l.b16 %v3367
        %v3492 = vunpack.c.l.b16 %v3377
        %v3493 = vunpack.c.l.b16 %v3391
        %v3494 = vunpack.c.l.b16 %v3401
        %v3495 = vunpack.c.l.b16 %v3415
        %v3496 = vunpack.c.l.b16 %v3425
        %v3497 = vunpack.c.l.b16 %v3439
        %v3498 = vunpack.c.l.b16 %v3449
        %v3499 = vpack.c.b16 %v3468, %v3467
        %v3500 = vpack.c.b16 %v3470, %v3469
        %v3501 = vpack.c.b16 %v3472, %v3471
        %v3502 = vpack.c.b16 %v3474, %v3473
        %v3503 = vpack.c.b16 %v3476, %v3475
        %v3504 = vpack.c.b16 %v3478, %v3477
        %v3505 = vpack.c.b16 %v3480, %v3479
        %v3506 = vpack.c.b16 %v3482, %v3481
        %v3507 = vpack.c.b16 %v3484, %v3483
        %v3508 = vpack.c.b16 %v3486, %v3485
        %v3509 = vpack.c.b16 %v3488, %v3487
        %v3510 = vpack.c.b16 %v3490, %v3489
        %v3511 = vpack.c.b16 %v3492, %v3491
        %v3512 = vpack.c.b16 %v3494, %v3493
        %v3513 = vpack.c.b16 %v3496, %v3495
        %v3514 = vpack.c.b16 %v3498, %v3497
        %v3547 = vunpack.c.l.b16 %v3451
        %v3548 = vunpack.c.l.b16 %v3452
        %v3549 = vunpack.c.l.b16 %v3453
        %v3550 = vunpack.c.l.b16 %v3454
        %v3551 = vunpack.c.l.b16 %v3455
        %v3552 = vunpack.c.l.b16 %v3456
        %v3553 = vunpack.c.l.b16 %v3457
        %v3554 = vunpack.c.l.b16 %v3458
        %v3555 = vunpack.c.l.b16 %v3459
        %v3556 = vunpack.c.l.b16 %v3460
        %v3557 = vunpack.c.l.b16 %v3461
        %v3558 = vunpack.c.l.b16 %v3462
        %v3559 = vunpack.c.l.b16 %v3463
        %v3560 = vunpack.c.l.b16 %v3464
        %v3561 = vunpack.c.l.b16 %v3465
        %v3562 = vunpack.c.l.b16 %v3466
        %v3563 = vpack.c.b16 %v3548, %v3547
        %v3564 = vpack.c.b16 %v3550, %v3549
        %v3565 = vpack.c.b16 %v3552, %v3551
        %v3566 = vpack.c.b16 %v3554, %v3553
        %v3567 = vpack.c.b16 %v3556, %v3555
        %v3568 = vpack.c.b16 %v3558, %v3557
        %v3569 = vpack.c.b16 %v3560, %v3559
        %v3570 = vpack.c.b16 %v3562, %v3561
        %3579 = vmatprep.subr.bf16.mxu0 0
        %3580 = vmatpush1.bf16.msra.mxu0 %v3563
        %3581 = vmatprep.subr.bf16.mxu0 0
        %3582 = vmatpush1.bf16.msra.mxu0 %v3564
        %3583 = vmatprep.subr.bf16.mxu0 0
        %3584 = vmatpush1.bf16.msra.mxu0 %v3565
        %3585 = vmatprep.subr.bf16.mxu0 0
        %3586 = vmatpush1.bf16.msra.mxu0 %v3566
        %3587 = vmatprep.subr.bf16.mxu0 0
        %3588 = vmatpush1.bf16.msra.mxu0 %v3567
        %3589 = vmatprep.subr.bf16.mxu0 0
        %3590 = vmatpush1.bf16.msra.mxu0 %v3568
        %3591 = vmatprep.subr.bf16.mxu0 0
        %3592 = vmatpush1.bf16.msra.mxu0 %v3569
        %3593 = vmatprep.subr.bf16.mxu0 0
        %3594 = vmatpush1.bf16.msra.mxu0 %v3570
        %3595 = vmatprep.subr.bf16.mxu0 0
        %3596 = vmatpush1.bf16.msra.mxu0 0
        %3597 = vmatprep.subr.bf16.mxu0 0
        %3598 = vmatpush1.bf16.msra.mxu0 0
        %3599 = vmatprep.subr.bf16.mxu0 0
        %3600 = vmatpush1.bf16.msra.mxu0 0
        %3601 = vmatprep.subr.bf16.mxu0 0
        %3602 = vmatpush1.bf16.msra.mxu0 0
        %3603 = vmatprep.subr.bf16.mxu0 0
        %3604 = vmatpush1.bf16.msra.mxu0 0
        %3605 = vmatprep.subr.bf16.mxu0 0
        %3606 = vmatpush1.bf16.msra.mxu0 0
        %3607 = vmatprep.subr.bf16.mxu0 0
        %3608 = vmatpush1.bf16.msra.mxu0 0
        %3609 = vmatprep.subr.bf16.mxu0 0
        %3610 = vmatpush1.bf16.msra.mxu0 0
        %3611 = vmatprep.mubr.bf16.mxu0 0
        %3612 = vmatmul.mubr.bf16.gmra.mrb[0].mxu0 %v3499
        %v3613 = vpop.f32.mrb[0].mxu0
        %v3614 = vadd.f32 0.0, %v3613
        %v3615 = vpop.f32.mrb[0].mxu0
        %v3616 = vpop.f32.mrb[0].mxu0
        %v3617 = vadd.f32 0.0, %v3616
        %v3618 = vpop.f32.mrb[0].mxu0
        %3619 = vmatprep.mubr.bf16.mxu0 0
        %3620 = vmatmul.mubr.bf16.gmra.mrb[0].mxu0 %v3500
        %v3621 = vpop.f32.mrb[0].mxu0
        %v3622 = vadd.f32 0.0, %v3621
        %v3623 = vpop.f32.mrb[0].mxu0
        %v3624 = vpop.f32.mrb[0].mxu0
        %v3625 = vadd.f32 0.0, %v3624
        %v3626 = vpop.f32.mrb[0].mxu0
        %3627 = vmatprep.mubr.bf16.mxu0 0
        %3628 = vmatmul.mubr.bf16.gmra.mrb[0].mxu0 %v3501
        %v3629 = vpop.f32.mrb[0].mxu0
        %v3630 = vadd.f32 0.0, %v3629
        %v3631 = vpop.f32.mrb[0].mxu0
        %v3632 = vpop.f32.mrb[0].mxu0
        %v3633 = vadd.f32 0.0, %v3632
        %v3634 = vpop.f32.mrb[0].mxu0
        %3635 = vmatprep.mubr.bf16.mxu0 0
        %3636 = vmatmul.mubr.bf16.gmra.mrb[0].mxu0 %v3502
        %v3637 = vpop.f32.mrb[0].mxu0
        %v3638 = vadd.f32 0.0, %v3637
        %v3639 = vpop.f32.mrb[0].mxu0
        %v3640 = vpop.f32.mrb[0].mxu0
        %v3641 = vadd.f32 0.0, %v3640
        %v3642 = vpop.f32.mrb[0].mxu0
        %3643 = vmatprep.mubr.bf16.mxu0 0
        %3644 = vmatmul.mubr.bf16.gmra.mrb[0].mxu0 %v3503
        %v3645 = vpop.f32.mrb[0].mxu0
        %v3646 = vadd.f32 0.0, %v3645
        %v3647 = vpop.f32.mrb[0].mxu0
        %v3648 = vpop.f32.mrb[0].mxu0
        %v3649 = vadd.f32 0.0, %v3648
        %v3650 = vpop.f32.mrb[0].mxu0
        %3651 = vmatprep.mubr.bf16.mxu0 0
        %3652 = vmatmul.mubr.bf16.gmra.mrb[0].mxu0 %v3504
        %v3653 = vpop.f32.mrb[0].mxu0
        %v3654 = vadd.f32 0.0, %v3653
        %v3655 = vpop.f32.mrb[0].mxu0
        %v3656 = vpop.f32.mrb[0].mxu0
        %v3657 = vadd.f32 0.0, %v3656
        %v3658 = vpop.f32.mrb[0].mxu0
        %3659 = vmatprep.mubr.bf16.mxu0 0
        %3660 = vmatmul.mubr.bf16.gmra.mrb[0].mxu0 %v3505
        %v3661 = vpop.f32.mrb[0].mxu0
        %v3662 = vadd.f32 0.0, %v3661
        %v3663 = vpop.f32.mrb[0].mxu0
        %v3664 = vpop.f32.mrb[0].mxu0
        %v3665 = vadd.f32 0.0, %v3664
        %v3666 = vpop.f32.mrb[0].mxu0
        %3667 = vmatprep.mubr.bf16.mxu0 0
        %3668 = vmatmul.mubr.bf16.gmra.mrb[0].mxu0 %v3506
        %v3669 = vpop.f32.mrb[0].mxu0
        %v3670 = vadd.f32 0.0, %v3669
        %v3671 = vpop.f32.mrb[0].mxu0
        %v3672 = vpop.f32.mrb[0].mxu0
        %v3673 = vadd.f32 0.0, %v3672
        %v3674 = vpop.f32.mrb[0].mxu0
        %3675 = vmatprep.mubr.bf16.mxu0 0
        %3676 = vmatmul.mubr.bf16.gmra.mrb[0].mxu0 %v3507
        %v3677 = vpop.f32.mrb[0].mxu0
        %v3678 = vadd.f32 0.0, %v3677
        %v3679 = vpop.f32.mrb[0].mxu0
        %v3680 = vpop.f32.mrb[0].mxu0
        %v3681 = vadd.f32 0.0, %v3680
        %v3682 = vpop.f32.mrb[0].mxu0
        %3683 = vmatprep.mubr.bf16.mxu0 0
        %3684 = vmatmul.mubr.bf16.gmra.mrb[0].mxu0 %v3508
        %v3685 = vpop.f32.mrb[0].mxu0
        %v3686 = vadd.f32 0.0, %v3685
        %v3687 = vpop.f32.mrb[0].mxu0
        %v3688 = vpop.f32.mrb[0].mxu0
        %v3689 = vadd.f32 0.0, %v3688
        %v3690 = vpop.f32.mrb[0].mxu0
        %3691 = vmatprep.mubr.bf16.mxu0 0
        %3692 = vmatmul.mubr.bf16.gmra.mrb[0].mxu0 %v3509
        %v3693 = vpop.f32.mrb[0].mxu0
        %v3694 = vadd.f32 0.0, %v3693
        %v3695 = vpop.f32.mrb[0].mxu0
        %v3696 = vpop.f32.mrb[0].mxu0
        %v3697 = vadd.f32 0.0, %v3696
        %v3698 = vpop.f32.mrb[0].mxu0
        %3699 = vmatprep.mubr.bf16.mxu0 0
        %3700 = vmatmul.mubr.bf16.gmra.mrb[0].mxu0 %v3510
        %v3701 = vpop.f32.mrb[0].mxu0
        %v3702 = vadd.f32 0.0, %v3701
        %v3703 = vpop.f32.mrb[0].mxu0
        %v3704 = vpop.f32.mrb[0].mxu0
        %v3705 = vadd.f32 0.0, %v3704
        %v3706 = vpop.f32.mrb[0].mxu0
        %3707 = vmatprep.mubr.bf16.mxu0 0
        %3708 = vmatmul.mubr.bf16.gmra.mrb[0].mxu0 %v3511
        %v3709 = vpop.f32.mrb[0].mxu0
        %v3710 = vadd.f32 0.0, %v3709
        %v3711 = vpop.f32.mrb[0].mxu0
        %v3712 = vpop.f32.mrb[0].mxu0
        %v3713 = vadd.f32 0.0, %v3712
        %v3714 = vpop.f32.mrb[0].mxu0
        %3715 = vmatprep.mubr.bf16.mxu0 0
        %3716 = vmatmul.mubr.bf16.gmra.mrb[0].mxu0 %v3512
        %v3717 = vpop.f32.mrb[0].mxu0
        %v3718 = vadd.f32 0.0, %v3717
        %v3719 = vpop.f32.mrb[0].mxu0
        %v3720 = vpop.f32.mrb[0].mxu0
        %v3721 = vadd.f32 0.0, %v3720
        %v3722 = vpop.f32.mrb[0].mxu0
        %3723 = vmatprep.mubr.bf16.mxu0 0
        %3724 = vmatmul.mubr.bf16.gmra.mrb[0].mxu0 %v3513
        %v3725 = vpop.f32.mrb[0].mxu0
        %v3726 = vadd.f32 0.0, %v3725
        %v3727 = vpop.f32.mrb[0].mxu0
        %v3728 = vpop.f32.mrb[0].mxu0
        %v3729 = vadd.f32 0.0, %v3728
        %v3730 = vpop.f32.mrb[0].mxu0
        %3731 = vmatprep.mubr.bf16.mxu0 0
        %3732 = vmatmul.mubr.bf16.gmra.mrb[0].mxu0 %v3514
        %v3733 = vpop.f32.mrb[0].mxu0
        %v3734 = vadd.f32 0.0, %v3733
        %v3735 = vpop.f32.mrb[0].mxu0
        %v3736 = vpop.f32.mrb[0].mxu0
        %v3737 = vadd.f32 0.0, %v3736
        %v3738 = vpop.f32.mrb[0].mxu0
        %3739 = vdwg.mxu0
        %v3740 = vadd.f32 %v2986, %v3614
        %v3741 = vadd.f32 %v2987, %v3617
        %v3742 = vadd.f32 %v2988, %v3622
        %v3743 = vadd.f32 %v2989, %v3625
        %v3744 = vadd.f32 %v2990, %v3630
        %v3745 = vadd.f32 %v2991, %v3633
        %v3746 = vadd.f32 %v2992, %v3638
        %v3747 = vadd.f32 %v2993, %v3641
        %v3748 = vadd.f32 %v2994, %v3646
        %v3749 = vadd.f32 %v2995, %v3649
        %v3750 = vadd.f32 %v2996, %v3654
        %v3751 = vadd.f32 %v2997, %v3657
        %v3752 = vadd.f32 %v2998, %v3662
        %v3753 = vadd.f32 %v2999, %v3665
        %v3754 = vadd.f32 %v3000, %v3670
        %v3755 = vadd.f32 %v3001, %v3673
        %v3756 = vadd.f32 %v3002, %v3678
        %v3757 = vadd.f32 %v3003, %v3681
        %v3758 = vadd.f32 %v3004, %v3686
        %v3759 = vadd.f32 %v3005, %v3689
        %v3760 = vadd.f32 %v3006, %v3694
        %v3761 = vadd.f32 %v3007, %v3697
        %v3762 = vadd.f32 %v3008, %v3702
        %v3763 = vadd.f32 %v3009, %v3705
        %v3764 = vadd.f32 %v3010, %v3710
        %v3765 = vadd.f32 %v3011, %v3713
        %v3766 = vadd.f32 %v3012, %v3718
        %v3767 = vadd.f32 %v3013, %v3721
        %v3768 = vadd.f32 %v3014, %v3726
        %v3769 = vadd.f32 %v3015, %v3729
        %v3770 = vadd.f32 %v3016, %v3734
        %v3771 = vadd.f32 %v3017, %v3737
        %v3772 = vld [vmem:[%s891] sm:$0xe]
        %v3773 = vld [vmem:[%s891 + $0xc] sm:$0xe]
        %v3774 = vld [vmem:[%s891 + $0x18] sm:$0xe]
        %v3775 = vld [vmem:[%s891 + $0x24] sm:$0xe]
        %v3776 = vld [vmem:[%s891 + $0x30] sm:$0xe]
        %v3777 = vld [vmem:[%s891 + $0x3c] sm:$0xe]
        %v3778 = vld [vmem:[%s891 + $0x48] sm:$0xe]
        %v3779 = vld [vmem:[%s891 + $0x54] sm:$0xe]
        %v3780 = vld [vmem:[%s891 + $0x60] sm:$0xe]
        %v3781 = vld [vmem:[%s891 + $0x6c] sm:$0xe]
        %v3782 = vld [vmem:[%s891 + $0x78] sm:$0xe]
        %v3783 = vld [vmem:[%s891 + $0x84] sm:$0xe]
        %v3784 = vld [vmem:[%s891 + $0x90] sm:$0xe]
        %v3785 = vld [vmem:[%s891 + $0x9c] sm:$0xe]
        %v3786 = vld [vmem:[%s891 + $0xa8] sm:$0xe]
        %v3787 = vld [vmem:[%s891 + $0xb4] sm:$0xe]
        %v3836 = vrot.slane %v3772, 5
        %v3837 = vrot.slane %v3836, 4
        %v3838 = vrot.slane %v3019, 5
        %v3839 = vsel %vm2197, %v3837, %v3838
        %v3840 = vrot.slane %v3838, 4
        %v3841 = vrot.slane %v3020, 5
        %v3842 = vsel %vm2197, %v3840, %v3841
        %v3843 = vrot.slane %v3773, 5
        %v3844 = vrot.slane %v3843, 4
        %v3845 = vrot.slane %v3022, 5
        %v3846 = vsel %vm2197, %v3844, %v3845
        %v3847 = vrot.slane %v3845, 4
        %v3848 = vrot.slane %v3023, 5
        %v3849 = vsel %vm2197, %v3847, %v3848
        %v3850 = vrot.slane %v3774, 5
        %v3851 = vrot.slane %v3850, 4
        %v3852 = vrot.slane %v3025, 5
        %v3853 = vsel %vm2197, %v3851, %v3852
        %v3854 = vrot.slane %v3852, 4
        %v3855 = vrot.slane %v3026, 5
        %v3856 = vsel %vm2197, %v3854, %v3855
        %v3857 = vrot.slane %v3775, 5
        %v3858 = vrot.slane %v3857, 4
        %v3859 = vrot.slane %v3028, 5
        %v3860 = vsel %vm2197, %v3858, %v3859
        %v3861 = vrot.slane %v3859, 4
        %v3862 = vrot.slane %v3029, 5
        %v3863 = vsel %vm2197, %v3861, %v3862
        %v3864 = vrot.slane %v3776, 5
        %v3865 = vrot.slane %v3864, 4
        %v3866 = vrot.slane %v3031, 5
        %v3867 = vsel %vm2197, %v3865, %v3866
        %v3868 = vrot.slane %v3866, 4
        %v3869 = vrot.slane %v3032, 5
        %v3870 = vsel %vm2197, %v3868, %v3869
        %v3871 = vrot.slane %v3777, 5
        %v3872 = vrot.slane %v3871, 4
        %v3873 = vrot.slane %v3034, 5
        %v3874 = vsel %vm2197, %v3872, %v3873
        %v3875 = vrot.slane %v3873, 4
        %v3876 = vrot.slane %v3035, 5
        %v3877 = vsel %vm2197, %v3875, %v3876
        %v3878 = vrot.slane %v3778, 5
        %v3879 = vrot.slane %v3878, 4
        %v3880 = vrot.slane %v3037, 5
        %v3881 = vsel %vm2197, %v3879, %v3880
        %v3882 = vrot.slane %v3880, 4
        %v3883 = vrot.slane %v3038, 5
        %v3884 = vsel %vm2197, %v3882, %v3883
        %v3885 = vrot.slane %v3779, 5
        %v3886 = vrot.slane %v3885, 4
        %v3887 = vrot.slane %v3040, 5
        %v3888 = vsel %vm2197, %v3886, %v3887
        %v3889 = vrot.slane %v3887, 4
        %v3890 = vrot.slane %v3041, 5
        %v3891 = vsel %vm2197, %v3889, %v3890
        %v3892 = vrot.slane %v3780, 5
        %v3893 = vrot.slane %v3892, 4
        %v3894 = vrot.slane %v3043, 5
        %v3895 = vsel %vm2197, %v3893, %v3894
        %v3896 = vrot.slane %v3894, 4
        %v3897 = vrot.slane %v3044, 5
        %v3898 = vsel %vm2197, %v3896, %v3897
        %v3899 = vrot.slane %v3781, 5
        %v3900 = vrot.slane %v3899, 4
        %v3901 = vrot.slane %v3046, 5
        %v3902 = vsel %vm2197, %v3900, %v3901
        %v3903 = vrot.slane %v3901, 4
        %v3904 = vrot.slane %v3047, 5
        %v3905 = vsel %vm2197, %v3903, %v3904
        %v3906 = vrot.slane %v3782, 5
        %v3907 = vrot.slane %v3906, 4
        %v3908 = vrot.slane %v3049, 5
        %v3909 = vsel %vm2197, %v3907, %v3908
        %v3910 = vrot.slane %v3908, 4
        %v3911 = vrot.slane %v3050, 5
        %v3912 = vsel %vm2197, %v3910, %v3911
        %v3913 = vrot.slane %v3783, 5
        %v3914 = vrot.slane %v3913, 4
        %v3915 = vrot.slane %v3052, 5
        %v3916 = vsel %vm2197, %v3914, %v3915
        %v3917 = vrot.slane %v3915, 4
        %v3918 = vrot.slane %v3053, 5
        %v3919 = vsel %vm2197, %v3917, %v3918
        %v3920 = vrot.slane %v3784, 5
        %v3921 = vrot.slane %v3920, 4
        %v3922 = vrot.slane %v3055, 5
        %v3923 = vsel %vm2197, %v3921, %v3922
        %v3924 = vrot.slane %v3922, 4
        %v3925 = vrot.slane %v3056, 5
        %v3926 = vsel %vm2197, %v3924, %v3925
        %v3927 = vrot.slane %v3785, 5
        %v3928 = vrot.slane %v3927, 4
        %v3929 = vrot.slane %v3058, 5
        %v3930 = vsel %vm2197, %v3928, %v3929
        %v3931 = vrot.slane %v3929, 4
        %v3932 = vrot.slane %v3059, 5
        %v3933 = vsel %vm2197, %v3931, %v3932
        %v3934 = vrot.slane %v3786, 5
        %v3935 = vrot.slane %v3934, 4
        %v3936 = vrot.slane %v3061, 5
        %v3937 = vsel %vm2197, %v3935, %v3936
        %v3938 = vrot.slane %v3936, 4
        %v3939 = vrot.slane %v3062, 5
        %v3940 = vsel %vm2197, %v3938, %v3939
        %v3941 = vrot.slane %v3787, 5
        %v3942 = vrot.slane %v3941, 4
        %v3943 = vrot.slane %v3064, 5
        %v3944 = vsel %vm2197, %v3942, %v3943
        %v3945 = vrot.slane %v3943, 4
        %v3946 = vrot.slane %v3065, 5
        %v3947 = vsel %vm2197, %v3945, %v3946
        %s3948 = scalar_lea.vmem [#allocation9], 320
        %v3949 = vld [vmem:[%s3948] sm:$0xf]
        %v3950 = vld [vmem:[%s3948 + $0x4] sm:$0xf]
        %v3951 = vld [vmem:[%s3948 + $0x8] sm:$0xf]
        %v3952 = vld [vmem:[%s3948 + $0xc] sm:$0xf]
        %v3953 = vld [vmem:[%s3948 + $0x10] sm:$0xf]
        %v3954 = vld [vmem:[%s3948 + $0x14] sm:$0xf]
        %v3955 = vld [vmem:[%s3948 + $0x18] sm:$0xf]
        %v3956 = vld [vmem:[%s3948 + $0x1c] sm:$0xf]
        %v3957 = vld [vmem:[%s3948 + $0x20] sm:$0xf]
        %v3958 = vld [vmem:[%s3948 + $0x24] sm:$0xf]
        %v3959 = vld [vmem:[%s3948 + $0x28] sm:$0xf]
        %v3960 = vld [vmem:[%s3948 + $0x2c] sm:$0xf]
        %v3961 = vld [vmem:[%s3948 + $0x30] sm:$0xf]
        %v3962 = vld [vmem:[%s3948 + $0x34] sm:$0xf]
        %v3963 = vld [vmem:[%s3948 + $0x38] sm:$0xf]
        %v3964 = vld [vmem:[%s3948 + $0x3c] sm:$0xf]
        %v3965 = vunpack.c.l.b16 %v3839
        %v3966 = vunpack.c.l.b16 %v3842
        %v3967 = vunpack.c.l.b16 %v3846
        %v3968 = vunpack.c.l.b16 %v3849
        %v3969 = vunpack.c.l.b16 %v3853
        %v3970 = vunpack.c.l.b16 %v3856
        %v3971 = vunpack.c.l.b16 %v3860
        %v3972 = vunpack.c.l.b16 %v3863
        %v3973 = vunpack.c.l.b16 %v3867
        %v3974 = vunpack.c.l.b16 %v3870
        %v3975 = vunpack.c.l.b16 %v3874
        %v3976 = vunpack.c.l.b16 %v3877
        %v3977 = vunpack.c.l.b16 %v3881
        %v3978 = vunpack.c.l.b16 %v3884
        %v3979 = vunpack.c.l.b16 %v3888
        %v3980 = vunpack.c.l.b16 %v3891
        %v3981 = vunpack.c.l.b16 %v3895
        %v3982 = vunpack.c.l.b16 %v3898
        %v3983 = vunpack.c.l.b16 %v3902
        %v3984 = vunpack.c.l.b16 %v3905
        %v3985 = vunpack.c.l.b16 %v3909
        %v3986 = vunpack.c.l.b16 %v3912
        %v3987 = vunpack.c.l.b16 %v3916
        %v3988 = vunpack.c.l.b16 %v3919
        %v3989 = vunpack.c.l.b16 %v3923
        %v3990 = vunpack.c.l.b16 %v3926
        %v3991 = vunpack.c.l.b16 %v3930
        %v3992 = vunpack.c.l.b16 %v3933
        %v3993 = vunpack.c.l.b16 %v3937
        %v3994 = vunpack.c.l.b16 %v3940
        %v3995 = vunpack.c.l.b16 %v3944
        %v3996 = vunpack.c.l.b16 %v3947
        %v3997 = vpack.c.b16 %v3966, %v3965
        %v3998 = vpack.c.b16 %v3968, %v3967
        %v3999 = vpack.c.b16 %v3970, %v3969
        %v4000 = vpack.c.b16 %v3972, %v3971
        %v4001 = vpack.c.b16 %v3974, %v3973
        %v4002 = vpack.c.b16 %v3976, %v3975
        %v4003 = vpack.c.b16 %v3978, %v3977
        %v4004 = vpack.c.b16 %v3980, %v3979
        %v4005 = vpack.c.b16 %v3982, %v3981
        %v4006 = vpack.c.b16 %v3984, %v3983
        %v4007 = vpack.c.b16 %v3986, %v3985
        %v4008 = vpack.c.b16 %v3988, %v3987
        %v4009 = vpack.c.b16 %v3990, %v3989
        %v4010 = vpack.c.b16 %v3992, %v3991
        %v4011 = vpack.c.b16 %v3994, %v3993
        %v4012 = vpack.c.b16 %v3996, %v3995
        %v4045 = vunpack.c.l.b16 %v3949
        %v4046 = vunpack.c.l.b16 %v3950
        %v4047 = vunpack.c.l.b16 %v3951
        %v4048 = vunpack.c.l.b16 %v3952
        %v4049 = vunpack.c.l.b16 %v3953
        %v4050 = vunpack.c.l.b16 %v3954
        %v4051 = vunpack.c.l.b16 %v3955
        %v4052 = vunpack.c.l.b16 %v3956
        %v4053 = vunpack.c.l.b16 %v3957
        %v4054 = vunpack.c.l.b16 %v3958
        %v4055 = vunpack.c.l.b16 %v3959
        %v4056 = vunpack.c.l.b16 %v3960
        %v4057 = vunpack.c.l.b16 %v3961
        %v4058 = vunpack.c.l.b16 %v3962
        %v4059 = vunpack.c.l.b16 %v3963
        %v4060 = vunpack.c.l.b16 %v3964
        %v4061 = vpack.c.b16 %v4046, %v4045
        %v4062 = vpack.c.b16 %v4048, %v4047
        %v4063 = vpack.c.b16 %v4050, %v4049
        %v4064 = vpack.c.b16 %v4052, %v4051
        %v4065 = vpack.c.b16 %v4054, %v4053
        %v4066 = vpack.c.b16 %v4056, %v4055
        %v4067 = vpack.c.b16 %v4058, %v4057
        %v4068 = vpack.c.b16 %v4060, %v4059
        %4077 = vmatprep.subr.bf16.mxu0 0
        %4078 = vmatpush1.bf16.msra.mxu0 %v4061
        %4079 = vmatprep.subr.bf16.mxu0 0
        %4080 = vmatpush1.bf16.msra.mxu0 %v4062
        %4081 = vmatprep.subr.bf16.mxu0 0
        %4082 = vmatpush1.bf16.msra.mxu0 %v4063
        %4083 = vmatprep.subr.bf16.mxu0 0
        %4084 = vmatpush1.bf16.msra.mxu0 %v4064
        %4085 = vmatprep.subr.bf16.mxu0 0
        %4086 = vmatpush1.bf16.msra.mxu0 %v4065
        %4087 = vmatprep.subr.bf16.mxu0 0
        %4088 = vmatpush1.bf16.msra.mxu0 %v4066
        %4089 = vmatprep.subr.bf16.mxu0 0
        %4090 = vmatpush1.bf16.msra.mxu0 %v4067
        %4091 = vmatprep.subr.bf16.mxu0 0
        %4092 = vmatpush1.bf16.msra.mxu0 %v4068
        %4093 = vmatprep.subr.bf16.mxu0 0
        %4094 = vmatpush1.bf16.msra.mxu0 0
        %4095 = vmatprep.subr.bf16.mxu0 0
        %4096 = vmatpush1.bf16.msra.mxu0 0
        %4097 = vmatprep.subr.bf16.mxu0 0
        %4098 = vmatpush1.bf16.msra.mxu0 0
        %4099 = vmatprep.subr.bf16.mxu0 0
        %4100 = vmatpush1.bf16.msra.mxu0 0
        %4101 = vmatprep.subr.bf16.mxu0 0
        %4102 = vmatpush1.bf16.msra.mxu0 0
        %4103 = vmatprep.subr.bf16.mxu0 0
        %4104 = vmatpush1.bf16.msra.mxu0 0
        %4105 = vmatprep.subr.bf16.mxu0 0
        %4106 = vmatpush1.bf16.msra.mxu0 0
        %4107 = vmatprep.subr.bf16.mxu0 0
        %4108 = vmatpush1.bf16.msra.mxu0 0
        %4109 = vmatprep.mubr.bf16.mxu0 0
        %4110 = vmatmul.mubr.bf16.gmra.mrb[0].mxu0 %v3997
        %v4111 = vpop.f32.mrb[0].mxu0
        %v4112 = vadd.f32 0.0, %v4111
        %v4113 = vpop.f32.mrb[0].mxu0
        %v4114 = vpop.f32.mrb[0].mxu0
        %v4115 = vadd.f32 0.0, %v4114
        %v4116 = vpop.f32.mrb[0].mxu0
        %4117 = vmatprep.mubr.bf16.mxu0 0
        %4118 = vmatmul.mubr.bf16.gmra.mrb[0].mxu0 %v3998
        %v4119 = vpop.f32.mrb[0].mxu0
        %v4120 = vadd.f32 0.0, %v4119
        %v4121 = vpop.f32.mrb[0].mxu0
        %v4122 = vpop.f32.mrb[0].mxu0
        %v4123 = vadd.f32 0.0, %v4122
        %v4124 = vpop.f32.mrb[0].mxu0
        %4125 = vmatprep.mubr.bf16.mxu0 0
        %4126 = vmatmul.mubr.bf16.gmra.mrb[0].mxu0 %v3999
        %v4127 = vpop.f32.mrb[0].mxu0
        %v4128 = vadd.f32 0.0, %v4127
        %v4129 = vpop.f32.mrb[0].mxu0
        %v4130 = vpop.f32.mrb[0].mxu0
        %v4131 = vadd.f32 0.0, %v4130
        %v4132 = vpop.f32.mrb[0].mxu0
        %4133 = vmatprep.mubr.bf16.mxu0 0
        %4134 = vmatmul.mubr.bf16.gmra.mrb[0].mxu0 %v4000
        %v4135 = vpop.f32.mrb[0].mxu0
        %v4136 = vadd.f32 0.0, %v4135
        %v4137 = vpop.f32.mrb[0].mxu0
        %v4138 = vpop.f32.mrb[0].mxu0
        %v4139 = vadd.f32 0.0, %v4138
        %v4140 = vpop.f32.mrb[0].mxu0
        %4141 = vmatprep.mubr.bf16.mxu0 0
        %4142 = vmatmul.mubr.bf16.gmra.mrb[0].mxu0 %v4001
        %v4143 = vpop.f32.mrb[0].mxu0
        %v4144 = vadd.f32 0.0, %v4143
        %v4145 = vpop.f32.mrb[0].mxu0
        %v4146 = vpop.f32.mrb[0].mxu0
        %v4147 = vadd.f32 0.0, %v4146
        %v4148 = vpop.f32.mrb[0].mxu0
        %4149 = vmatprep.mubr.bf16.mxu0 0
        %4150 = vmatmul.mubr.bf16.gmra.mrb[0].mxu0 %v4002
        %v4151 = vpop.f32.mrb[0].mxu0
        %v4152 = vadd.f32 0.0, %v4151
        %v4153 = vpop.f32.mrb[0].mxu0
        %v4154 = vpop.f32.mrb[0].mxu0
        %v4155 = vadd.f32 0.0, %v4154
        %v4156 = vpop.f32.mrb[0].mxu0
        %4157 = vmatprep.mubr.bf16.mxu0 0
        %4158 = vmatmul.mubr.bf16.gmra.mrb[0].mxu0 %v4003
        %v4159 = vpop.f32.mrb[0].mxu0
        %v4160 = vadd.f32 0.0, %v4159
        %v4161 = vpop.f32.mrb[0].mxu0
        %v4162 = vpop.f32.mrb[0].mxu0
        %v4163 = vadd.f32 0.0, %v4162
        %v4164 = vpop.f32.mrb[0].mxu0
        %4165 = vmatprep.mubr.bf16.mxu0 0
        %4166 = vmatmul.mubr.bf16.gmra.mrb[0].mxu0 %v4004
        %v4167 = vpop.f32.mrb[0].mxu0
        %v4168 = vadd.f32 0.0, %v4167
        %v4169 = vpop.f32.mrb[0].mxu0
        %v4170 = vpop.f32.mrb[0].mxu0
        %v4171 = vadd.f32 0.0, %v4170
        %v4172 = vpop.f32.mrb[0].mxu0
        %4173 = vmatprep.mubr.bf16.mxu0 0
        %4174 = vmatmul.mubr.bf16.gmra.mrb[0].mxu0 %v4005
        %v4175 = vpop.f32.mrb[0].mxu0
        %v4176 = vadd.f32 0.0, %v4175
        %v4177 = vpop.f32.mrb[0].mxu0
        %v4178 = vpop.f32.mrb[0].mxu0
        %v4179 = vadd.f32 0.0, %v4178
        %v4180 = vpop.f32.mrb[0].mxu0
        %4181 = vmatprep.mubr.bf16.mxu0 0
        %4182 = vmatmul.mubr.bf16.gmra.mrb[0].mxu0 %v4006
        %v4183 = vpop.f32.mrb[0].mxu0
        %v4184 = vadd.f32 0.0, %v4183
        %v4185 = vpop.f32.mrb[0].mxu0
        %v4186 = vpop.f32.mrb[0].mxu0
        %v4187 = vadd.f32 0.0, %v4186
        %v4188 = vpop.f32.mrb[0].mxu0
        %4189 = vmatprep.mubr.bf16.mxu0 0
        %4190 = vmatmul.mubr.bf16.gmra.mrb[0].mxu0 %v4007
        %v4191 = vpop.f32.mrb[0].mxu0
        %v4192 = vadd.f32 0.0, %v4191
        %v4193 = vpop.f32.mrb[0].mxu0
        %v4194 = vpop.f32.mrb[0].mxu0
        %v4195 = vadd.f32 0.0, %v4194
        %v4196 = vpop.f32.mrb[0].mxu0
        %4197 = vmatprep.mubr.bf16.mxu0 0
        %4198 = vmatmul.mubr.bf16.gmra.mrb[0].mxu0 %v4008
        %v4199 = vpop.f32.mrb[0].mxu0
        %v4200 = vadd.f32 0.0, %v4199
        %v4201 = vpop.f32.mrb[0].mxu0
        %v4202 = vpop.f32.mrb[0].mxu0
        %v4203 = vadd.f32 0.0, %v4202
        %v4204 = vpop.f32.mrb[0].mxu0
        %4205 = vmatprep.mubr.bf16.mxu0 0
        %4206 = vmatmul.mubr.bf16.gmra.mrb[0].mxu0 %v4009
        %v4207 = vpop.f32.mrb[0].mxu0
        %v4208 = vadd.f32 0.0, %v4207
        %v4209 = vpop.f32.mrb[0].mxu0
        %v4210 = vpop.f32.mrb[0].mxu0
        %v4211 = vadd.f32 0.0, %v4210
        %v4212 = vpop.f32.mrb[0].mxu0
        %4213 = vmatprep.mubr.bf16.mxu0 0
        %4214 = vmatmul.mubr.bf16.gmra.mrb[0].mxu0 %v4010
        %v4215 = vpop.f32.mrb[0].mxu0
        %v4216 = vadd.f32 0.0, %v4215
        %v4217 = vpop.f32.mrb[0].mxu0
        %v4218 = vpop.f32.mrb[0].mxu0
        %v4219 = vadd.f32 0.0, %v4218
        %v4220 = vpop.f32.mrb[0].mxu0
        %4221 = vmatprep.mubr.bf16.mxu0 0
        %4222 = vmatmul.mubr.bf16.gmra.mrb[0].mxu0 %v4011
        %v4223 = vpop.f32.mrb[0].mxu0
        %v4224 = vadd.f32 0.0, %v4223
        %v4225 = vpop.f32.mrb[0].mxu0
        %v4226 = vpop.f32.mrb[0].mxu0
        %v4227 = vadd.f32 0.0, %v4226
        %v4228 = vpop.f32.mrb[0].mxu0
        %4229 = vmatprep.mubr.bf16.mxu0 0
        %4230 = vmatmul.mubr.bf16.gmra.mrb[0].mxu0 %v4012
        %v4231 = vpop.f32.mrb[0].mxu0
        %v4232 = vadd.f32 0.0, %v4231
        %v4233 = vpop.f32.mrb[0].mxu0
        %v4234 = vpop.f32.mrb[0].mxu0
        %v4235 = vadd.f32 0.0, %v4234
        %v4236 = vpop.f32.mrb[0].mxu0
        %4237 = vdwg.mxu0
        %v4238 = vadd.f32 %v3740, %v4112
        %v4239 = vadd.f32 %v3741, %v4115
        %v4240 = vadd.f32 %v3742, %v4120
        %v4241 = vadd.f32 %v3743, %v4123
        %v4242 = vadd.f32 %v3744, %v4128
        %v4243 = vadd.f32 %v3745, %v4131
        %v4244 = vadd.f32 %v3746, %v4136
        %v4245 = vadd.f32 %v3747, %v4139
        %v4246 = vadd.f32 %v3748, %v4144
        %v4247 = vadd.f32 %v3749, %v4147
        %v4248 = vadd.f32 %v3750, %v4152
        %v4249 = vadd.f32 %v3751, %v4155
        %v4250 = vadd.f32 %v3752, %v4160
        %v4251 = vadd.f32 %v3753, %v4163
        %v4252 = vadd.f32 %v3754, %v4168
        %v4253 = vadd.f32 %v3755, %v4171
        %v4254 = vadd.f32 %v3756, %v4176
        %v4255 = vadd.f32 %v3757, %v4179
        %v4256 = vadd.f32 %v3758, %v4184
        %v4257 = vadd.f32 %v3759, %v4187
        %v4258 = vadd.f32 %v3760, %v4192
        %v4259 = vadd.f32 %v3761, %v4195
        %v4260 = vadd.f32 %v3762, %v4200
        %v4261 = vadd.f32 %v3763, %v4203
        %v4262 = vadd.f32 %v3764, %v4208
        %v4263 = vadd.f32 %v3765, %v4211
        %v4264 = vadd.f32 %v3766, %v4216
        %v4265 = vadd.f32 %v3767, %v4219
        %v4266 = vadd.f32 %v3768, %v4224
        %v4267 = vadd.f32 %v3769, %v4227
        %v4268 = vadd.f32 %v3770, %v4232
        %v4269 = vadd.f32 %v3771, %v4235
        %s4270 = scalar_lea.vmem [#allocation2], 24
        %v4271 = vld [vmem:[%s4270] sm:$0xf]
        %v4272 = vld [vmem:[%s4270 + $0x4] sm:$0xf]
        %v4273 = vld [vmem:[%s4270 + $0xc] sm:$0xf]
        %v4274 = vld [vmem:[%s4270 + $0x10] sm:$0xf]
        %v4275 = vld [vmem:[%s4270 + $0x18] sm:$0xf]
        %v4276 = vld [vmem:[%s4270 + $0x1c] sm:$0xf]
        %v4277 = vld [vmem:[%s4270 + $0x24] sm:$0xf]
        %v4278 = vld [vmem:[%s4270 + $0x28] sm:$0xf]
        %v4279 = vld [vmem:[%s4270 + $0x30] sm:$0xf]
        %v4280 = vld [vmem:[%s4270 + $0x34] sm:$0xf]
        %v4281 = vld [vmem:[%s4270 + $0x3c] sm:$0xf]
        %v4282 = vld [vmem:[%s4270 + $0x40] sm:$0xf]
        %v4283 = vld [vmem:[%s4270 + $0x48] sm:$0xf]
        %v4284 = vld [vmem:[%s4270 + $0x4c] sm:$0xf]
        %v4285 = vld [vmem:[%s4270 + $0x54] sm:$0xf]
        %v4286 = vld [vmem:[%s4270 + $0x58] sm:$0xf]
        %v4287 = vld [vmem:[%s4270 + $0x60] sm:$0xf]
        %v4288 = vld [vmem:[%s4270 + $0x64] sm:$0xf]
        %v4289 = vld [vmem:[%s4270 + $0x6c] sm:$0xf]
        %v4290 = vld [vmem:[%s4270 + $0x70] sm:$0xf]
        %v4291 = vld [vmem:[%s4270 + $0x78] sm:$0xf]
        %v4292 = vld [vmem:[%s4270 + $0x7c] sm:$0xf]
        %v4293 = vld [vmem:[%s4270 + $0x84] sm:$0xf]
        %v4294 = vld [vmem:[%s4270 + $0x88] sm:$0xf]
        %v4295 = vld [vmem:[%s4270 + $0x90] sm:$0xf]
        %v4296 = vld [vmem:[%s4270 + $0x94] sm:$0xf]
        %v4297 = vld [vmem:[%s4270 + $0x9c] sm:$0xf]
        %v4298 = vld [vmem:[%s4270 + $0xa0] sm:$0xf]
        %v4299 = vld [vmem:[%s4270 + $0xa8] sm:$0xf]
        %v4300 = vld [vmem:[%s4270 + $0xac] sm:$0xf]
        %v4301 = vld [vmem:[%s4270 + $0xb4] sm:$0xf]
        %v4302 = vld [vmem:[%s4270 + $0xb8] sm:$0xf]
        %s4303 = scalar_lea.vmem [#allocation9], 384
        %v4304 = vld [vmem:[%s4303] sm:$0xf]
        %v4305 = vld [vmem:[%s4303 + $0x4] sm:$0xf]
        %v4306 = vld [vmem:[%s4303 + $0x8] sm:$0xf]
        %v4307 = vld [vmem:[%s4303 + $0xc] sm:$0xf]
        %v4308 = vld [vmem:[%s4303 + $0x10] sm:$0xf]
        %v4309 = vld [vmem:[%s4303 + $0x14] sm:$0xf]
        %v4310 = vld [vmem:[%s4303 + $0x18] sm:$0xf]
        %v4311 = vld [vmem:[%s4303 + $0x1c] sm:$0xf]
        %v4312 = vld [vmem:[%s4303 + $0x20] sm:$0xf]
        %v4313 = vld [vmem:[%s4303 + $0x24] sm:$0xf]
        %v4314 = vld [vmem:[%s4303 + $0x28] sm:$0xf]
        %v4315 = vld [vmem:[%s4303 + $0x2c] sm:$0xf]
        %v4316 = vld [vmem:[%s4303 + $0x30] sm:$0xf]
        %v4317 = vld [vmem:[%s4303 + $0x34] sm:$0xf]
        %v4318 = vld [vmem:[%s4303 + $0x38] sm:$0xf]
        %v4319 = vld [vmem:[%s4303 + $0x3c] sm:$0xf]
        %v4352 = vunpack.c.l.b16 %v4271
        %v4353 = vunpack.c.l.b16 %v4272
        %v4354 = vunpack.c.l.b16 %v4273
        %v4355 = vunpack.c.l.b16 %v4274
        %v4356 = vunpack.c.l.b16 %v4275
        %v4357 = vunpack.c.l.b16 %v4276
        %v4358 = vunpack.c.l.b16 %v4277
        %v4359 = vunpack.c.l.b16 %v4278
        %v4360 = vunpack.c.l.b16 %v4279
        %v4361 = vunpack.c.l.b16 %v4280
        %v4362 = vunpack.c.l.b16 %v4281
        %v4363 = vunpack.c.l.b16 %v4282
        %v4364 = vunpack.c.l.b16 %v4283
        %v4365 = vunpack.c.l.b16 %v4284
        %v4366 = vunpack.c.l.b16 %v4285
        %v4367 = vunpack.c.l.b16 %v4286
        %v4368 = vunpack.c.l.b16 %v4287
        %v4369 = vunpack.c.l.b16 %v4288
        %v4370 = vunpack.c.l.b16 %v4289
        %v4371 = vunpack.c.l.b16 %v4290
        %v4372 = vunpack.c.l.b16 %v4291
        %v4373 = vunpack.c.l.b16 %v4292
        %v4374 = vunpack.c.l.b16 %v4293
        %v4375 = vunpack.c.l.b16 %v4294
        %v4376 = vunpack.c.l.b16 %v4295
        %v4377 = vunpack.c.l.b16 %v4296
        %v4378 = vunpack.c.l.b16 %v4297
        %v4379 = vunpack.c.l.b16 %v4298
        %v4380 = vunpack.c.l.b16 %v4299
        %v4381 = vunpack.c.l.b16 %v4300
        %v4382 = vunpack.c.l.b16 %v4301
        %v4383 = vunpack.c.l.b16 %v4302
        %v4384 = vpack.c.b16 %v4353, %v4352
        %v4385 = vpack.c.b16 %v4355, %v4354
        %v4386 = vpack.c.b16 %v4357, %v4356
        %v4387 = vpack.c.b16 %v4359, %v4358
        %v4388 = vpack.c.b16 %v4361, %v4360
        %v4389 = vpack.c.b16 %v4363, %v4362
        %v4390 = vpack.c.b16 %v4365, %v4364
        %v4391 = vpack.c.b16 %v4367, %v4366
        %v4392 = vpack.c.b16 %v4369, %v4368
        %v4393 = vpack.c.b16 %v4371, %v4370
        %v4394 = vpack.c.b16 %v4373, %v4372
        %v4395 = vpack.c.b16 %v4375, %v4374
        %v4396 = vpack.c.b16 %v4377, %v4376
        %v4397 = vpack.c.b16 %v4379, %v4378
        %v4398 = vpack.c.b16 %v4381, %v4380
        %v4399 = vpack.c.b16 %v4383, %v4382
        %v4432 = vunpack.c.l.b16 %v4304
        %v4433 = vunpack.c.l.b16 %v4305
        %v4434 = vunpack.c.l.b16 %v4306
        %v4435 = vunpack.c.l.b16 %v4307
        %v4436 = vunpack.c.l.b16 %v4308
        %v4437 = vunpack.c.l.b16 %v4309
        %v4438 = vunpack.c.l.b16 %v4310
        %v4439 = vunpack.c.l.b16 %v4311
        %v4440 = vunpack.c.l.b16 %v4312
        %v4441 = vunpack.c.l.b16 %v4313
        %v4442 = vunpack.c.l.b16 %v4314
        %v4443 = vunpack.c.l.b16 %v4315
        %v4444 = vunpack.c.l.b16 %v4316
        %v4445 = vunpack.c.l.b16 %v4317
        %v4446 = vunpack.c.l.b16 %v4318
        %v4447 = vunpack.c.l.b16 %v4319
        %v4448 = vpack.c.b16 %v4433, %v4432
        %v4449 = vpack.c.b16 %v4435, %v4434
        %v4450 = vpack.c.b16 %v4437, %v4436
        %v4451 = vpack.c.b16 %v4439, %v4438
        %v4452 = vpack.c.b16 %v4441, %v4440
        %v4453 = vpack.c.b16 %v4443, %v4442
        %v4454 = vpack.c.b16 %v4445, %v4444
        %v4455 = vpack.c.b16 %v4447, %v4446
        %4464 = vmatprep.subr.bf16.mxu0 0
        %4465 = vmatpush1.bf16.msra.mxu0 %v4448
        %4466 = vmatprep.subr.bf16.mxu0 0
        %4467 = vmatpush1.bf16.msra.mxu0 %v4449
        %4468 = vmatprep.subr.bf16.mxu0 0
        %4469 = vmatpush1.bf16.msra.mxu0 %v4450
        %4470 = vmatprep.subr.bf16.mxu0 0
        %4471 = vmatpush1.bf16.msra.mxu0 %v4451
        %4472 = vmatprep.subr.bf16.mxu0 0
        %4473 = vmatpush1.bf16.msra.mxu0 %v4452
        %4474 = vmatprep.subr.bf16.mxu0 0
        %4475 = vmatpush1.bf16.msra.mxu0 %v4453
        %4476 = vmatprep.subr.bf16.mxu0 0
        %4477 = vmatpush1.bf16.msra.mxu0 %v4454
        %4478 = vmatprep.subr.bf16.mxu0 0
        %4479 = vmatpush1.bf16.msra.mxu0 %v4455
        %4480 = vmatprep.subr.bf16.mxu0 0
        %4481 = vmatpush1.bf16.msra.mxu0 0
        %4482 = vmatprep.subr.bf16.mxu0 0
        %4483 = vmatpush1.bf16.msra.mxu0 0
        %4484 = vmatprep.subr.bf16.mxu0 0
        %4485 = vmatpush1.bf16.msra.mxu0 0
        %4486 = vmatprep.subr.bf16.mxu0 0
        %4487 = vmatpush1.bf16.msra.mxu0 0
        %4488 = vmatprep.subr.bf16.mxu0 0
        %4489 = vmatpush1.bf16.msra.mxu0 0
        %4490 = vmatprep.subr.bf16.mxu0 0
        %4491 = vmatpush1.bf16.msra.mxu0 0
        %4492 = vmatprep.subr.bf16.mxu0 0
        %4493 = vmatpush1.bf16.msra.mxu0 0
        %4494 = vmatprep.subr.bf16.mxu0 0
        %4495 = vmatpush1.bf16.msra.mxu0 0
        %4496 = vmatprep.mubr.bf16.mxu0 0
        %4497 = vmatmul.mubr.bf16.gmra.mrb[0].mxu0 %v4384
        %v4498 = vpop.f32.mrb[0].mxu0
        %v4499 = vadd.f32 0.0, %v4498
        %v4500 = vpop.f32.mrb[0].mxu0
        %v4501 = vpop.f32.mrb[0].mxu0
        %v4502 = vadd.f32 0.0, %v4501
        %v4503 = vpop.f32.mrb[0].mxu0
        %4504 = vmatprep.mubr.bf16.mxu0 0
        %4505 = vmatmul.mubr.bf16.gmra.mrb[0].mxu0 %v4385
        %v4506 = vpop.f32.mrb[0].mxu0
        %v4507 = vadd.f32 0.0, %v4506
        %v4508 = vpop.f32.mrb[0].mxu0
        %v4509 = vpop.f32.mrb[0].mxu0
        %v4510 = vadd.f32 0.0, %v4509
        %v4511 = vpop.f32.mrb[0].mxu0
        %4512 = vmatprep.mubr.bf16.mxu0 0
        %4513 = vmatmul.mubr.bf16.gmra.mrb[0].mxu0 %v4386
        %v4514 = vpop.f32.mrb[0].mxu0
        %v4515 = vadd.f32 0.0, %v4514
        %v4516 = vpop.f32.mrb[0].mxu0
        %v4517 = vpop.f32.mrb[0].mxu0
        %v4518 = vadd.f32 0.0, %v4517
        %v4519 = vpop.f32.mrb[0].mxu0
        %4520 = vmatprep.mubr.bf16.mxu0 0
        %4521 = vmatmul.mubr.bf16.gmra.mrb[0].mxu0 %v4387
        %v4522 = vpop.f32.mrb[0].mxu0
        %v4523 = vadd.f32 0.0, %v4522
        %v4524 = vpop.f32.mrb[0].mxu0
        %v4525 = vpop.f32.mrb[0].mxu0
        %v4526 = vadd.f32 0.0, %v4525
        %v4527 = vpop.f32.mrb[0].mxu0
        %4528 = vmatprep.mubr.bf16.mxu0 0
        %4529 = vmatmul.mubr.bf16.gmra.mrb[0].mxu0 %v4388
        %v4530 = vpop.f32.mrb[0].mxu0
        %v4531 = vadd.f32 0.0, %v4530
        %v4532 = vpop.f32.mrb[0].mxu0
        %v4533 = vpop.f32.mrb[0].mxu0
        %v4534 = vadd.f32 0.0, %v4533
        %v4535 = vpop.f32.mrb[0].mxu0
        %4536 = vmatprep.mubr.bf16.mxu0 0
        %4537 = vmatmul.mubr.bf16.gmra.mrb[0].mxu0 %v4389
        %v4538 = vpop.f32.mrb[0].mxu0
        %v4539 = vadd.f32 0.0, %v4538
        %v4540 = vpop.f32.mrb[0].mxu0
        %v4541 = vpop.f32.mrb[0].mxu0
        %v4542 = vadd.f32 0.0, %v4541
        %v4543 = vpop.f32.mrb[0].mxu0
        %4544 = vmatprep.mubr.bf16.mxu0 0
        %4545 = vmatmul.mubr.bf16.gmra.mrb[0].mxu0 %v4390
        %v4546 = vpop.f32.mrb[0].mxu0
        %v4547 = vadd.f32 0.0, %v4546
        %v4548 = vpop.f32.mrb[0].mxu0
        %v4549 = vpop.f32.mrb[0].mxu0
        %v4550 = vadd.f32 0.0, %v4549
        %v4551 = vpop.f32.mrb[0].mxu0
        %4552 = vmatprep.mubr.bf16.mxu0 0
        %4553 = vmatmul.mubr.bf16.gmra.mrb[0].mxu0 %v4391
        %v4554 = vpop.f32.mrb[0].mxu0
        %v4555 = vadd.f32 0.0, %v4554
        %v4556 = vpop.f32.mrb[0].mxu0
        %v4557 = vpop.f32.mrb[0].mxu0
        %v4558 = vadd.f32 0.0, %v4557
        %v4559 = vpop.f32.mrb[0].mxu0
        %4560 = vmatprep.mubr.bf16.mxu0 0
        %4561 = vmatmul.mubr.bf16.gmra.mrb[0].mxu0 %v4392
        %v4562 = vpop.f32.mrb[0].mxu0
        %v4563 = vadd.f32 0.0, %v4562
        %v4564 = vpop.f32.mrb[0].mxu0
        %v4565 = vpop.f32.mrb[0].mxu0
        %v4566 = vadd.f32 0.0, %v4565
        %v4567 = vpop.f32.mrb[0].mxu0
        %4568 = vmatprep.mubr.bf16.mxu0 0
        %4569 = vmatmul.mubr.bf16.gmra.mrb[0].mxu0 %v4393
        %v4570 = vpop.f32.mrb[0].mxu0
        %v4571 = vadd.f32 0.0, %v4570
        %v4572 = vpop.f32.mrb[0].mxu0
        %v4573 = vpop.f32.mrb[0].mxu0
        %v4574 = vadd.f32 0.0, %v4573
        %v4575 = vpop.f32.mrb[0].mxu0
        %4576 = vmatprep.mubr.bf16.mxu0 0
        %4577 = vmatmul.mubr.bf16.gmra.mrb[0].mxu0 %v4394
        %v4578 = vpop.f32.mrb[0].mxu0
        %v4579 = vadd.f32 0.0, %v4578
        %v4580 = vpop.f32.mrb[0].mxu0
        %v4581 = vpop.f32.mrb[0].mxu0
        %v4582 = vadd.f32 0.0, %v4581
        %v4583 = vpop.f32.mrb[0].mxu0
        %4584 = vmatprep.mubr.bf16.mxu0 0
        %4585 = vmatmul.mubr.bf16.gmra.mrb[0].mxu0 %v4395
        %v4586 = vpop.f32.mrb[0].mxu0
        %v4587 = vadd.f32 0.0, %v4586
        %v4588 = vpop.f32.mrb[0].mxu0
        %v4589 = vpop.f32.mrb[0].mxu0
        %v4590 = vadd.f32 0.0, %v4589
        %v4591 = vpop.f32.mrb[0].mxu0
        %4592 = vmatprep.mubr.bf16.mxu0 0
        %4593 = vmatmul.mubr.bf16.gmra.mrb[0].mxu0 %v4396
        %v4594 = vpop.f32.mrb[0].mxu0
        %v4595 = vadd.f32 0.0, %v4594
        %v4596 = vpop.f32.mrb[0].mxu0
        %v4597 = vpop.f32.mrb[0].mxu0
        %v4598 = vadd.f32 0.0, %v4597
        %v4599 = vpop.f32.mrb[0].mxu0
        %4600 = vmatprep.mubr.bf16.mxu0 0
        %4601 = vmatmul.mubr.bf16.gmra.mrb[0].mxu0 %v4397
        %v4602 = vpop.f32.mrb[0].mxu0
        %v4603 = vadd.f32 0.0, %v4602
        %v4604 = vpop.f32.mrb[0].mxu0
        %v4605 = vpop.f32.mrb[0].mxu0
        %v4606 = vadd.f32 0.0, %v4605
        %v4607 = vpop.f32.mrb[0].mxu0
        %4608 = vmatprep.mubr.bf16.mxu0 0
        %4609 = vmatmul.mubr.bf16.gmra.mrb[0].mxu0 %v4398
        %v4610 = vpop.f32.mrb[0].mxu0
        %v4611 = vadd.f32 0.0, %v4610
        %v4612 = vpop.f32.mrb[0].mxu0
        %v4613 = vpop.f32.mrb[0].mxu0
        %v4614 = vadd.f32 0.0, %v4613
        %v4615 = vpop.f32.mrb[0].mxu0
        %4616 = vmatprep.mubr.bf16.mxu0 0
        %4617 = vmatmul.mubr.bf16.gmra.mrb[0].mxu0 %v4399
        %v4618 = vpop.f32.mrb[0].mxu0
        %v4619 = vadd.f32 0.0, %v4618
        %v4620 = vpop.f32.mrb[0].mxu0
        %v4621 = vpop.f32.mrb[0].mxu0
        %v4622 = vadd.f32 0.0, %v4621
        %v4623 = vpop.f32.mrb[0].mxu0
        %4624 = vdwg.mxu0
        %v4625 = vadd.f32 %v4238, %v4499
        %v4626 = vadd.f32 %v4239, %v4502
        %v4627 = vadd.f32 %v4240, %v4507
        %v4628 = vadd.f32 %v4241, %v4510
        %v4629 = vadd.f32 %v4242, %v4515
        %v4630 = vadd.f32 %v4243, %v4518
        %v4631 = vadd.f32 %v4244, %v4523
        %v4632 = vadd.f32 %v4245, %v4526
        %v4633 = vadd.f32 %v4246, %v4531
        %v4634 = vadd.f32 %v4247, %v4534
        %v4635 = vadd.f32 %v4248, %v4539
        %v4636 = vadd.f32 %v4249, %v4542
        %v4637 = vadd.f32 %v4250, %v4547
        %v4638 = vadd.f32 %v4251, %v4550
        %v4639 = vadd.f32 %v4252, %v4555
        %v4640 = vadd.f32 %v4253, %v4558
        %v4641 = vadd.f32 %v4254, %v4563
        %v4642 = vadd.f32 %v4255, %v4566
        %v4643 = vadd.f32 %v4256, %v4571
        %v4644 = vadd.f32 %v4257, %v4574
        %v4645 = vadd.f32 %v4258, %v4579
        %v4646 = vadd.f32 %v4259, %v4582
        %v4647 = vadd.f32 %v4260, %v4587
        %v4648 = vadd.f32 %v4261, %v4590
        %v4649 = vadd.f32 %v4262, %v4595
        %v4650 = vadd.f32 %v4263, %v4598
        %v4651 = vadd.f32 %v4264, %v4603
        %v4652 = vadd.f32 %v4265, %v4606
        %v4653 = vadd.f32 %v4266, %v4611
        %v4654 = vadd.f32 %v4267, %v4614
        %v4655 = vadd.f32 %v4268, %v4619
        %v4656 = vadd.f32 %v4269, %v4622
        %v4657 = vld [vmem:[%s4270] sm:$0xf]
        %v4658 = vld [vmem:[%s4270 + $0x4] sm:$0xf]
        %v4659 = vld [vmem:[%s4270 + $0x8] sm:$0x1]
        %v4660 = vld [vmem:[%s4270 + $0xc] sm:$0xf]
        %v4661 = vld [vmem:[%s4270 + $0x10] sm:$0xf]
        %v4662 = vld [vmem:[%s4270 + $0x14] sm:$0x1]
        %v4663 = vld [vmem:[%s4270 + $0x18] sm:$0xf]
        %v4664 = vld [vmem:[%s4270 + $0x1c] sm:$0xf]
        %v4665 = vld [vmem:[%s4270 + $0x20] sm:$0x1]
        %v4666 = vld [vmem:[%s4270 + $0x24] sm:$0xf]
        %v4667 = vld [vmem:[%s4270 + $0x28] sm:$0xf]
        %v4668 = vld [vmem:[%s4270 + $0x2c] sm:$0x1]
        %v4669 = vld [vmem:[%s4270 + $0x30] sm:$0xf]
        %v4670 = vld [vmem:[%s4270 + $0x34] sm:$0xf]
        %v4671 = vld [vmem:[%s4270 + $0x38] sm:$0x1]
        %v4672 = vld [vmem:[%s4270 + $0x3c] sm:$0xf]
        %v4673 = vld [vmem:[%s4270 + $0x40] sm:$0xf]
        %v4674 = vld [vmem:[%s4270 + $0x44] sm:$0x1]
        %v4675 = vld [vmem:[%s4270 + $0x48] sm:$0xf]
        %v4676 = vld [vmem:[%s4270 + $0x4c] sm:$0xf]
        %v4677 = vld [vmem:[%s4270 + $0x50] sm:$0x1]
        %v4678 = vld [vmem:[%s4270 + $0x54] sm:$0xf]
        %v4679 = vld [vmem:[%s4270 + $0x58] sm:$0xf]
        %v4680 = vld [vmem:[%s4270 + $0x5c] sm:$0x1]
        %v4681 = vld [vmem:[%s4270 + $0x60] sm:$0xf]
        %v4682 = vld [vmem:[%s4270 + $0x64] sm:$0xf]
        %v4683 = vld [vmem:[%s4270 + $0x68] sm:$0x1]
        %v4684 = vld [vmem:[%s4270 + $0x6c] sm:$0xf]
        %v4685 = vld [vmem:[%s4270 + $0x70] sm:$0xf]
        %v4686 = vld [vmem:[%s4270 + $0x74] sm:$0x1]
        %v4687 = vld [vmem:[%s4270 + $0x78] sm:$0xf]
        %v4688 = vld [vmem:[%s4270 + $0x7c] sm:$0xf]
        %v4689 = vld [vmem:[%s4270 + $0x80] sm:$0x1]
        %v4690 = vld [vmem:[%s4270 + $0x84] sm:$0xf]
        %v4691 = vld [vmem:[%s4270 + $0x88] sm:$0xf]
        %v4692 = vld [vmem:[%s4270 + $0x8c] sm:$0x1]
        %v4693 = vld [vmem:[%s4270 + $0x90] sm:$0xf]
        %v4694 = vld [vmem:[%s4270 + $0x94] sm:$0xf]
        %v4695 = vld [vmem:[%s4270 + $0x98] sm:$0x1]
        %v4696 = vld [vmem:[%s4270 + $0x9c] sm:$0xf]
        %v4697 = vld [vmem:[%s4270 + $0xa0] sm:$0xf]
        %v4698 = vld [vmem:[%s4270 + $0xa4] sm:$0x1]
        %v4699 = vld [vmem:[%s4270 + $0xa8] sm:$0xf]
        %v4700 = vld [vmem:[%s4270 + $0xac] sm:$0xf]
        %v4701 = vld [vmem:[%s4270 + $0xb0] sm:$0x1]
        %v4702 = vld [vmem:[%s4270 + $0xb4] sm:$0xf]
        %v4703 = vld [vmem:[%s4270 + $0xb8] sm:$0xf]
        %v4704 = vld [vmem:[%s4270 + $0xbc] sm:$0x1]
        %v4706 = vshrl.u32 %v4657, 16
        %v4708 = vrot.slane %v4706, 4
        %v4709 = vshll.u32 %v4657, 16
        %v4711 = vrot.slane %v4709, 5
        %v4712 = vor.u32 %v4708, %v4711
        %v4713 = vrot.slane %v4712, 4
        %v4715 = vshll.u32 %v4658, 16
        %v4717 = vrot.slane %v4715, 5
        %v4718 = vsel %vm1167, %v4713, %v4717
        %v4719 = vshrl.u32 %v4658, 16
        %v4721 = vrot.slane %v4719, 4
        %v4722 = vor.u32 %v4721, %v4717
        %v4723 = vrot.slane %v4722, 4
        %v4725 = vshll.u32 %v4659, 16
        %v4727 = vrot.slane %v4725, 5
        %v4728 = vsel %vm1167, %v4723, %v4727
        %v4730 = vshrl.u32 %v4660, 16
        %v4732 = vrot.slane %v4730, 4
        %v4733 = vshll.u32 %v4660, 16
        %v4735 = vrot.slane %v4733, 5
        %v4736 = vor.u32 %v4732, %v4735
        %v4737 = vrot.slane %v4736, 4
        %v4739 = vshll.u32 %v4661, 16
        %v4741 = vrot.slane %v4739, 5
        %v4742 = vsel %vm1167, %v4737, %v4741
        %v4743 = vshrl.u32 %v4661, 16
        %v4745 = vrot.slane %v4743, 4
        %v4746 = vor.u32 %v4745, %v4741
        %v4747 = vrot.slane %v4746, 4
        %v4749 = vshll.u32 %v4662, 16
        %v4751 = vrot.slane %v4749, 5
        %v4752 = vsel %vm1167, %v4747, %v4751
        %v4754 = vshrl.u32 %v4663, 16
        %v4756 = vrot.slane %v4754, 4
        %v4757 = vshll.u32 %v4663, 16
        %v4759 = vrot.slane %v4757, 5
        %v4760 = vor.u32 %v4756, %v4759
        %v4761 = vrot.slane %v4760, 4
        %v4763 = vshll.u32 %v4664, 16
        %v4765 = vrot.slane %v4763, 5
        %v4766 = vsel %vm1167, %v4761, %v4765
        %v4767 = vshrl.u32 %v4664, 16
        %v4769 = vrot.slane %v4767, 4
        %v4770 = vor.u32 %v4769, %v4765
        %v4771 = vrot.slane %v4770, 4
        %v4773 = vshll.u32 %v4665, 16
        %v4775 = vrot.slane %v4773, 5
        %v4776 = vsel %vm1167, %v4771, %v4775
        %v4778 = vshrl.u32 %v4666, 16
        %v4780 = vrot.slane %v4778, 4
        %v4781 = vshll.u32 %v4666, 16
        %v4783 = vrot.slane %v4781, 5
        %v4784 = vor.u32 %v4780, %v4783
        %v4785 = vrot.slane %v4784, 4
        %v4787 = vshll.u32 %v4667, 16
        %v4789 = vrot.slane %v4787, 5
        %v4790 = vsel %vm1167, %v4785, %v4789
        %v4791 = vshrl.u32 %v4667, 16
        %v4793 = vrot.slane %v4791, 4
        %v4794 = vor.u32 %v4793, %v4789
        %v4795 = vrot.slane %v4794, 4
        %v4797 = vshll.u32 %v4668, 16
        %v4799 = vrot.slane %v4797, 5
        %v4800 = vsel %vm1167, %v4795, %v4799
        %v4802 = vshrl.u32 %v4669, 16
        %v4804 = vrot.slane %v4802, 4
        %v4805 = vshll.u32 %v4669, 16
        %v4807 = vrot.slane %v4805, 5
        %v4808 = vor.u32 %v4804, %v4807
        %v4809 = vrot.slane %v4808, 4
        %v4811 = vshll.u32 %v4670, 16
        %v4813 = vrot.slane %v4811, 5
        %v4814 = vsel %vm1167, %v4809, %v4813
        %v4815 = vshrl.u32 %v4670, 16
        %v4817 = vrot.slane %v4815, 4
        %v4818 = vor.u32 %v4817, %v4813
        %v4819 = vrot.slane %v4818, 4
        %v4821 = vshll.u32 %v4671, 16
        %v4823 = vrot.slane %v4821, 5
        %v4824 = vsel %vm1167, %v4819, %v4823
        %v4826 = vshrl.u32 %v4672, 16
        %v4828 = vrot.slane %v4826, 4
        %v4829 = vshll.u32 %v4672, 16
        %v4831 = vrot.slane %v4829, 5
        %v4832 = vor.u32 %v4828, %v4831
        %v4833 = vrot.slane %v4832, 4
        %v4835 = vshll.u32 %v4673, 16
        %v4837 = vrot.slane %v4835, 5
        %v4838 = vsel %vm1167, %v4833, %v4837
        %v4839 = vshrl.u32 %v4673, 16
        %v4841 = vrot.slane %v4839, 4
        %v4842 = vor.u32 %v4841, %v4837
        %v4843 = vrot.slane %v4842, 4
        %v4845 = vshll.u32 %v4674, 16
        %v4847 = vrot.slane %v4845, 5
        %v4848 = vsel %vm1167, %v4843, %v4847
        %v4850 = vshrl.u32 %v4675, 16
        %v4852 = vrot.slane %v4850, 4
        %v4853 = vshll.u32 %v4675, 16
        %v4855 = vrot.slane %v4853, 5
        %v4856 = vor.u32 %v4852, %v4855
        %v4857 = vrot.slane %v4856, 4
        %v4859 = vshll.u32 %v4676, 16
        %v4861 = vrot.slane %v4859, 5
        %v4862 = vsel %vm1167, %v4857, %v4861
        %v4863 = vshrl.u32 %v4676, 16
        %v4865 = vrot.slane %v4863, 4
        %v4866 = vor.u32 %v4865, %v4861
        %v4867 = vrot.slane %v4866, 4
        %v4869 = vshll.u32 %v4677, 16
        %v4871 = vrot.slane %v4869, 5
        %v4872 = vsel %vm1167, %v4867, %v4871
        %v4874 = vshrl.u32 %v4678, 16
        %v4876 = vrot.slane %v4874, 4
        %v4877 = vshll.u32 %v4678, 16
        %v4879 = vrot.slane %v4877, 5
        %v4880 = vor.u32 %v4876, %v4879
        %v4881 = vrot.slane %v4880, 4
        %v4883 = vshll.u32 %v4679, 16
        %v4885 = vrot.slane %v4883, 5
        %v4886 = vsel %vm1167, %v4881, %v4885
        %v4887 = vshrl.u32 %v4679, 16
        %v4889 = vrot.slane %v4887, 4
        %v4890 = vor.u32 %v4889, %v4885
        %v4891 = vrot.slane %v4890, 4
        %v4893 = vshll.u32 %v4680, 16
        %v4895 = vrot.slane %v4893, 5
        %v4896 = vsel %vm1167, %v4891, %v4895
        %v4898 = vshrl.u32 %v4681, 16
        %v4900 = vrot.slane %v4898, 4
        %v4901 = vshll.u32 %v4681, 16
        %v4903 = vrot.slane %v4901, 5
        %v4904 = vor.u32 %v4900, %v4903
        %v4905 = vrot.slane %v4904, 4
        %v4907 = vshll.u32 %v4682, 16
        %v4909 = vrot.slane %v4907, 5
        %v4910 = vsel %vm1167, %v4905, %v4909
        %v4911 = vshrl.u32 %v4682, 16
        %v4913 = vrot.slane %v4911, 4
        %v4914 = vor.u32 %v4913, %v4909
        %v4915 = vrot.slane %v4914, 4
        %v4917 = vshll.u32 %v4683, 16
        %v4919 = vrot.slane %v4917, 5
        %v4920 = vsel %vm1167, %v4915, %v4919
        %v4922 = vshrl.u32 %v4684, 16
        %v4924 = vrot.slane %v4922, 4
        %v4925 = vshll.u32 %v4684, 16
        %v4927 = vrot.slane %v4925, 5
        %v4928 = vor.u32 %v4924, %v4927
        %v4929 = vrot.slane %v4928, 4
        %v4931 = vshll.u32 %v4685, 16
        %v4933 = vrot.slane %v4931, 5
        %v4934 = vsel %vm1167, %v4929, %v4933
        %v4935 = vshrl.u32 %v4685, 16
        %v4937 = vrot.slane %v4935, 4
        %v4938 = vor.u32 %v4937, %v4933
        %v4939 = vrot.slane %v4938, 4
        %v4941 = vshll.u32 %v4686, 16
        %v4943 = vrot.slane %v4941, 5
        %v4944 = vsel %vm1167, %v4939, %v4943
        %v4946 = vshrl.u32 %v4687, 16
        %v4948 = vrot.slane %v4946, 4
        %v4949 = vshll.u32 %v4687, 16
        %v4951 = vrot.slane %v4949, 5
        %v4952 = vor.u32 %v4948, %v4951
        %v4953 = vrot.slane %v4952, 4
        %v4955 = vshll.u32 %v4688, 16
        %v4957 = vrot.slane %v4955, 5
        %v4958 = vsel %vm1167, %v4953, %v4957
        %v4959 = vshrl.u32 %v4688, 16
        %v4961 = vrot.slane %v4959, 4
        %v4962 = vor.u32 %v4961, %v4957
        %v4963 = vrot.slane %v4962, 4
        %v4965 = vshll.u32 %v4689, 16
        %v4967 = vrot.slane %v4965, 5
        %v4968 = vsel %vm1167, %v4963, %v4967
        %v4970 = vshrl.u32 %v4690, 16
        %v4972 = vrot.slane %v4970, 4
        %v4973 = vshll.u32 %v4690, 16
        %v4975 = vrot.slane %v4973, 5
        %v4976 = vor.u32 %v4972, %v4975
        %v4977 = vrot.slane %v4976, 4
        %v4979 = vshll.u32 %v4691, 16
        %v4981 = vrot.slane %v4979, 5
        %v4982 = vsel %vm1167, %v4977, %v4981
        %v4983 = vshrl.u32 %v4691, 16
        %v4985 = vrot.slane %v4983, 4
        %v4986 = vor.u32 %v4985, %v4981
        %v4987 = vrot.slane %v4986, 4
        %v4989 = vshll.u32 %v4692, 16
        %v4991 = vrot.slane %v4989, 5
        %v4992 = vsel %vm1167, %v4987, %v4991
        %v4994 = vshrl.u32 %v4693, 16
        %v4996 = vrot.slane %v4994, 4
        %v4997 = vshll.u32 %v4693, 16
        %v4999 = vrot.slane %v4997, 5
        %v5000 = vor.u32 %v4996, %v4999
        %v5001 = vrot.slane %v5000, 4
        %v5003 = vshll.u32 %v4694, 16
        %v5005 = vrot.slane %v5003, 5
        %v5006 = vsel %vm1167, %v5001, %v5005
        %v5007 = vshrl.u32 %v4694, 16
        %v5009 = vrot.slane %v5007, 4
        %v5010 = vor.u32 %v5009, %v5005
        %v5011 = vrot.slane %v5010, 4
        %v5013 = vshll.u32 %v4695, 16
        %v5015 = vrot.slane %v5013, 5
        %v5016 = vsel %vm1167, %v5011, %v5015
        %v5018 = vshrl.u32 %v4696, 16
        %v5020 = vrot.slane %v5018, 4
        %v5021 = vshll.u32 %v4696, 16
        %v5023 = vrot.slane %v5021, 5
        %v5024 = vor.u32 %v5020, %v5023
        %v5025 = vrot.slane %v5024, 4
        %v5027 = vshll.u32 %v4697, 16
        %v5029 = vrot.slane %v5027, 5
        %v5030 = vsel %vm1167, %v5025, %v5029
        %v5031 = vshrl.u32 %v4697, 16
        %v5033 = vrot.slane %v5031, 4
        %v5034 = vor.u32 %v5033, %v5029
        %v5035 = vrot.slane %v5034, 4
        %v5037 = vshll.u32 %v4698, 16
        %v5039 = vrot.slane %v5037, 5
        %v5040 = vsel %vm1167, %v5035, %v5039
        %v5042 = vshrl.u32 %v4699, 16
        %v5044 = vrot.slane %v5042, 4
        %v5045 = vshll.u32 %v4699, 16
        %v5047 = vrot.slane %v5045, 5
        %v5048 = vor.u32 %v5044, %v5047
        %v5049 = vrot.slane %v5048, 4
        %v5051 = vshll.u32 %v4700, 16
        %v5053 = vrot.slane %v5051, 5
        %v5054 = vsel %vm1167, %v5049, %v5053
        %v5055 = vshrl.u32 %v4700, 16
        %v5057 = vrot.slane %v5055, 4
        %v5058 = vor.u32 %v5057, %v5053
        %v5059 = vrot.slane %v5058, 4
        %v5061 = vshll.u32 %v4701, 16
        %v5063 = vrot.slane %v5061, 5
        %v5064 = vsel %vm1167, %v5059, %v5063
        %v5066 = vshrl.u32 %v4702, 16
        %v5068 = vrot.slane %v5066, 4
        %v5069 = vshll.u32 %v4702, 16
        %v5071 = vrot.slane %v5069, 5
        %v5072 = vor.u32 %v5068, %v5071
        %v5073 = vrot.slane %v5072, 4
        %v5075 = vshll.u32 %v4703, 16
        %v5077 = vrot.slane %v5075, 5
        %v5078 = vsel %vm1167, %v5073, %v5077
        %v5079 = vshrl.u32 %v4703, 16
        %v5081 = vrot.slane %v5079, 4
        %v5082 = vor.u32 %v5081, %v5077
        %v5083 = vrot.slane %v5082, 4
        %v5085 = vshll.u32 %v4704, 16
        %v5087 = vrot.slane %v5085, 5
        %v5088 = vsel %vm1167, %v5083, %v5087
        %s5089 = scalar_lea.vmem [#allocation9], 448
        %v5090 = vld [vmem:[%s5089] sm:$0xf]
        %v5091 = vld [vmem:[%s5089 + $0x4] sm:$0xf]
        %v5092 = vld [vmem:[%s5089 + $0x8] sm:$0xf]
        %v5093 = vld [vmem:[%s5089 + $0xc] sm:$0xf]
        %v5094 = vld [vmem:[%s5089 + $0x10] sm:$0xf]
        %v5095 = vld [vmem:[%s5089 + $0x14] sm:$0xf]
        %v5096 = vld [vmem:[%s5089 + $0x18] sm:$0xf]
        %v5097 = vld [vmem:[%s5089 + $0x1c] sm:$0xf]
        %v5098 = vld [vmem:[%s5089 + $0x20] sm:$0xf]
        %v5099 = vld [vmem:[%s5089 + $0x24] sm:$0xf]
        %v5100 = vld [vmem:[%s5089 + $0x28] sm:$0xf]
        %v5101 = vld [vmem:[%s5089 + $0x2c] sm:$0xf]
        %v5102 = vld [vmem:[%s5089 + $0x30] sm:$0xf]
        %v5103 = vld [vmem:[%s5089 + $0x34] sm:$0xf]
        %v5104 = vld [vmem:[%s5089 + $0x38] sm:$0xf]
        %v5105 = vld [vmem:[%s5089 + $0x3c] sm:$0xf]
        %v5106 = vunpack.c.l.b16 %v4718
        %v5107 = vunpack.c.l.b16 %v4728
        %v5108 = vunpack.c.l.b16 %v4742
        %v5109 = vunpack.c.l.b16 %v4752
        %v5110 = vunpack.c.l.b16 %v4766
        %v5111 = vunpack.c.l.b16 %v4776
        %v5112 = vunpack.c.l.b16 %v4790
        %v5113 = vunpack.c.l.b16 %v4800
        %v5114 = vunpack.c.l.b16 %v4814
        %v5115 = vunpack.c.l.b16 %v4824
        %v5116 = vunpack.c.l.b16 %v4838
        %v5117 = vunpack.c.l.b16 %v4848
        %v5118 = vunpack.c.l.b16 %v4862
        %v5119 = vunpack.c.l.b16 %v4872
        %v5120 = vunpack.c.l.b16 %v4886
        %v5121 = vunpack.c.l.b16 %v4896
        %v5122 = vunpack.c.l.b16 %v4910
        %v5123 = vunpack.c.l.b16 %v4920
        %v5124 = vunpack.c.l.b16 %v4934
        %v5125 = vunpack.c.l.b16 %v4944
        %v5126 = vunpack.c.l.b16 %v4958
        %v5127 = vunpack.c.l.b16 %v4968
        %v5128 = vunpack.c.l.b16 %v4982
        %v5129 = vunpack.c.l.b16 %v4992
        %v5130 = vunpack.c.l.b16 %v5006
        %v5131 = vunpack.c.l.b16 %v5016
        %v5132 = vunpack.c.l.b16 %v5030
        %v5133 = vunpack.c.l.b16 %v5040
        %v5134 = vunpack.c.l.b16 %v5054
        %v5135 = vunpack.c.l.b16 %v5064
        %v5136 = vunpack.c.l.b16 %v5078
        %v5137 = vunpack.c.l.b16 %v5088
        %v5138 = vpack.c.b16 %v5107, %v5106
        %v5139 = vpack.c.b16 %v5109, %v5108
        %v5140 = vpack.c.b16 %v5111, %v5110
        %v5141 = vpack.c.b16 %v5113, %v5112
        %v5142 = vpack.c.b16 %v5115, %v5114
        %v5143 = vpack.c.b16 %v5117, %v5116
        %v5144 = vpack.c.b16 %v5119, %v5118
        %v5145 = vpack.c.b16 %v5121, %v5120
        %v5146 = vpack.c.b16 %v5123, %v5122
        %v5147 = vpack.c.b16 %v5125, %v5124
        %v5148 = vpack.c.b16 %v5127, %v5126
        %v5149 = vpack.c.b16 %v5129, %v5128
        %v5150 = vpack.c.b16 %v5131, %v5130
        %v5151 = vpack.c.b16 %v5133, %v5132
        %v5152 = vpack.c.b16 %v5135, %v5134
        %v5153 = vpack.c.b16 %v5137, %v5136
        %v5186 = vunpack.c.l.b16 %v5090
        %v5187 = vunpack.c.l.b16 %v5091
        %v5188 = vunpack.c.l.b16 %v5092
        %v5189 = vunpack.c.l.b16 %v5093
        %v5190 = vunpack.c.l.b16 %v5094
        %v5191 = vunpack.c.l.b16 %v5095
        %v5192 = vunpack.c.l.b16 %v5096
        %v5193 = vunpack.c.l.b16 %v5097
        %v5194 = vunpack.c.l.b16 %v5098
        %v5195 = vunpack.c.l.b16 %v5099
        %v5196 = vunpack.c.l.b16 %v5100
        %v5197 = vunpack.c.l.b16 %v5101
        %v5198 = vunpack.c.l.b16 %v5102
        %v5199 = vunpack.c.l.b16 %v5103
        %v5200 = vunpack.c.l.b16 %v5104
        %v5201 = vunpack.c.l.b16 %v5105
        %v5202 = vpack.c.b16 %v5187, %v5186
        %v5203 = vpack.c.b16 %v5189, %v5188
        %v5204 = vpack.c.b16 %v5191, %v5190
        %v5205 = vpack.c.b16 %v5193, %v5192
        %v5206 = vpack.c.b16 %v5195, %v5194
        %v5207 = vpack.c.b16 %v5197, %v5196
        %v5208 = vpack.c.b16 %v5199, %v5198
        %v5209 = vpack.c.b16 %v5201, %v5200
        %5218 = vmatprep.subr.bf16.mxu0 0
        %5219 = vmatpush1.bf16.msra.mxu0 %v5202
        %5220 = vmatprep.subr.bf16.mxu0 0
        %5221 = vmatpush1.bf16.msra.mxu0 %v5203
        %5222 = vmatprep.subr.bf16.mxu0 0
        %5223 = vmatpush1.bf16.msra.mxu0 %v5204
        %5224 = vmatprep.subr.bf16.mxu0 0
        %5225 = vmatpush1.bf16.msra.mxu0 %v5205
        %5226 = vmatprep.subr.bf16.mxu0 0
        %5227 = vmatpush1.bf16.msra.mxu0 %v5206
        %5228 = vmatprep.subr.bf16.mxu0 0
        %5229 = vmatpush1.bf16.msra.mxu0 %v5207
        %5230 = vmatprep.subr.bf16.mxu0 0
        %5231 = vmatpush1.bf16.msra.mxu0 %v5208
        %5232 = vmatprep.subr.bf16.mxu0 0
        %5233 = vmatpush1.bf16.msra.mxu0 %v5209
        %5234 = vmatprep.subr.bf16.mxu0 0
        %5235 = vmatpush1.bf16.msra.mxu0 0
        %5236 = vmatprep.subr.bf16.mxu0 0
        %5237 = vmatpush1.bf16.msra.mxu0 0
        %5238 = vmatprep.subr.bf16.mxu0 0
        %5239 = vmatpush1.bf16.msra.mxu0 0
        %5240 = vmatprep.subr.bf16.mxu0 0
        %5241 = vmatpush1.bf16.msra.mxu0 0
        %5242 = vmatprep.subr.bf16.mxu0 0
        %5243 = vmatpush1.bf16.msra.mxu0 0
        %5244 = vmatprep.subr.bf16.mxu0 0
        %5245 = vmatpush1.bf16.msra.mxu0 0
        %5246 = vmatprep.subr.bf16.mxu0 0
        %5247 = vmatpush1.bf16.msra.mxu0 0
        %5248 = vmatprep.subr.bf16.mxu0 0
        %5249 = vmatpush1.bf16.msra.mxu0 0
        %5250 = vmatprep.mubr.bf16.mxu0 0
        %5251 = vmatmul.mubr.bf16.gmra.mrb[0].mxu0 %v5138
        %v5252 = vpop.f32.mrb[0].mxu0
        %v5253 = vadd.f32 0.0, %v5252
        %v5254 = vpop.f32.mrb[0].mxu0
        %v5255 = vpop.f32.mrb[0].mxu0
        %v5256 = vadd.f32 0.0, %v5255
        %v5257 = vpop.f32.mrb[0].mxu0
        %5258 = vmatprep.mubr.bf16.mxu0 0
        %5259 = vmatmul.mubr.bf16.gmra.mrb[0].mxu0 %v5139
        %v5260 = vpop.f32.mrb[0].mxu0
        %v5261 = vadd.f32 0.0, %v5260
        %v5262 = vpop.f32.mrb[0].mxu0
        %v5263 = vpop.f32.mrb[0].mxu0
        %v5264 = vadd.f32 0.0, %v5263
        %v5265 = vpop.f32.mrb[0].mxu0
        %5266 = vmatprep.mubr.bf16.mxu0 0
        %5267 = vmatmul.mubr.bf16.gmra.mrb[0].mxu0 %v5140
        %v5268 = vpop.f32.mrb[0].mxu0
        %v5269 = vadd.f32 0.0, %v5268
        %v5270 = vpop.f32.mrb[0].mxu0
        %v5271 = vpop.f32.mrb[0].mxu0
        %v5272 = vadd.f32 0.0, %v5271
        %v5273 = vpop.f32.mrb[0].mxu0
        %5274 = vmatprep.mubr.bf16.mxu0 0
        %5275 = vmatmul.mubr.bf16.gmra.mrb[0].mxu0 %v5141
        %v5276 = vpop.f32.mrb[0].mxu0
        %v5277 = vadd.f32 0.0, %v5276
        %v5278 = vpop.f32.mrb[0].mxu0
        %v5279 = vpop.f32.mrb[0].mxu0
        %v5280 = vadd.f32 0.0, %v5279
        %v5281 = vpop.f32.mrb[0].mxu0
        %5282 = vmatprep.mubr.bf16.mxu0 0
        %5283 = vmatmul.mubr.bf16.gmra.mrb[0].mxu0 %v5142
        %v5284 = vpop.f32.mrb[0].mxu0
        %v5285 = vadd.f32 0.0, %v5284
        %v5286 = vpop.f32.mrb[0].mxu0
        %v5287 = vpop.f32.mrb[0].mxu0
        %v5288 = vadd.f32 0.0, %v5287
        %v5289 = vpop.f32.mrb[0].mxu0
        %5290 = vmatprep.mubr.bf16.mxu0 0
        %5291 = vmatmul.mubr.bf16.gmra.mrb[0].mxu0 %v5143
        %v5292 = vpop.f32.mrb[0].mxu0
        %v5293 = vadd.f32 0.0, %v5292
        %v5294 = vpop.f32.mrb[0].mxu0
        %v5295 = vpop.f32.mrb[0].mxu0
        %v5296 = vadd.f32 0.0, %v5295
        %v5297 = vpop.f32.mrb[0].mxu0
        %5298 = vmatprep.mubr.bf16.mxu0 0
        %5299 = vmatmul.mubr.bf16.gmra.mrb[0].mxu0 %v5144
        %v5300 = vpop.f32.mrb[0].mxu0
        %v5301 = vadd.f32 0.0, %v5300
        %v5302 = vpop.f32.mrb[0].mxu0
        %v5303 = vpop.f32.mrb[0].mxu0
        %v5304 = vadd.f32 0.0, %v5303
        %v5305 = vpop.f32.mrb[0].mxu0
        %5306 = vmatprep.mubr.bf16.mxu0 0
        %5307 = vmatmul.mubr.bf16.gmra.mrb[0].mxu0 %v5145
        %v5308 = vpop.f32.mrb[0].mxu0
        %v5309 = vadd.f32 0.0, %v5308
        %v5310 = vpop.f32.mrb[0].mxu0
        %v5311 = vpop.f32.mrb[0].mxu0
        %v5312 = vadd.f32 0.0, %v5311
        %v5313 = vpop.f32.mrb[0].mxu0
        %5314 = vmatprep.mubr.bf16.mxu0 0
        %5315 = vmatmul.mubr.bf16.gmra.mrb[0].mxu0 %v5146
        %v5316 = vpop.f32.mrb[0].mxu0
        %v5317 = vadd.f32 0.0, %v5316
        %v5318 = vpop.f32.mrb[0].mxu0
        %v5319 = vpop.f32.mrb[0].mxu0
        %v5320 = vadd.f32 0.0, %v5319
        %v5321 = vpop.f32.mrb[0].mxu0
        %5322 = vmatprep.mubr.bf16.mxu0 0
        %5323 = vmatmul.mubr.bf16.gmra.mrb[0].mxu0 %v5147
        %v5324 = vpop.f32.mrb[0].mxu0
        %v5325 = vadd.f32 0.0, %v5324
        %v5326 = vpop.f32.mrb[0].mxu0
        %v5327 = vpop.f32.mrb[0].mxu0
        %v5328 = vadd.f32 0.0, %v5327
        %v5329 = vpop.f32.mrb[0].mxu0
        %5330 = vmatprep.mubr.bf16.mxu0 0
        %5331 = vmatmul.mubr.bf16.gmra.mrb[0].mxu0 %v5148
        %v5332 = vpop.f32.mrb[0].mxu0
        %v5333 = vadd.f32 0.0, %v5332
        %v5334 = vpop.f32.mrb[0].mxu0
        %v5335 = vpop.f32.mrb[0].mxu0
        %v5336 = vadd.f32 0.0, %v5335
        %v5337 = vpop.f32.mrb[0].mxu0
        %5338 = vmatprep.mubr.bf16.mxu0 0
        %5339 = vmatmul.mubr.bf16.gmra.mrb[0].mxu0 %v5149
        %v5340 = vpop.f32.mrb[0].mxu0
        %v5341 = vadd.f32 0.0, %v5340
        %v5342 = vpop.f32.mrb[0].mxu0
        %v5343 = vpop.f32.mrb[0].mxu0
        %v5344 = vadd.f32 0.0, %v5343
        %v5345 = vpop.f32.mrb[0].mxu0
        %5346 = vmatprep.mubr.bf16.mxu0 0
        %5347 = vmatmul.mubr.bf16.gmra.mrb[0].mxu0 %v5150
        %v5348 = vpop.f32.mrb[0].mxu0
        %v5349 = vadd.f32 0.0, %v5348
        %v5350 = vpop.f32.mrb[0].mxu0
        %v5351 = vpop.f32.mrb[0].mxu0
        %v5352 = vadd.f32 0.0, %v5351
        %v5353 = vpop.f32.mrb[0].mxu0
        %5354 = vmatprep.mubr.bf16.mxu0 0
        %5355 = vmatmul.mubr.bf16.gmra.mrb[0].mxu0 %v5151
        %v5356 = vpop.f32.mrb[0].mxu0
        %v5357 = vadd.f32 0.0, %v5356
        %v5358 = vpop.f32.mrb[0].mxu0
        %v5359 = vpop.f32.mrb[0].mxu0
        %v5360 = vadd.f32 0.0, %v5359
        %v5361 = vpop.f32.mrb[0].mxu0
        %5362 = vmatprep.mubr.bf16.mxu0 0
        %5363 = vmatmul.mubr.bf16.gmra.mrb[0].mxu0 %v5152
        %v5364 = vpop.f32.mrb[0].mxu0
        %v5365 = vadd.f32 0.0, %v5364
        %v5366 = vpop.f32.mrb[0].mxu0
        %v5367 = vpop.f32.mrb[0].mxu0
        %v5368 = vadd.f32 0.0, %v5367
        %v5369 = vpop.f32.mrb[0].mxu0
        %5370 = vmatprep.mubr.bf16.mxu0 0
        %5371 = vmatmul.mubr.bf16.gmra.mrb[0].mxu0 %v5153
        %v5372 = vpop.f32.mrb[0].mxu0
        %v5373 = vadd.f32 0.0, %v5372
        %v5374 = vpop.f32.mrb[0].mxu0
        %v5375 = vpop.f32.mrb[0].mxu0
        %v5376 = vadd.f32 0.0, %v5375
        %v5377 = vpop.f32.mrb[0].mxu0
        %5378 = vdwg.mxu0
        %v5379 = vadd.f32 %v4625, %v5253
        %v5380 = vadd.f32 %v4626, %v5256
        %v5381 = vadd.f32 %v4627, %v5261
        %v5382 = vadd.f32 %v4628, %v5264
        %v5383 = vadd.f32 %v4629, %v5269
        %v5384 = vadd.f32 %v4630, %v5272
        %v5385 = vadd.f32 %v4631, %v5277
        %v5386 = vadd.f32 %v4632, %v5280
        %v5387 = vadd.f32 %v4633, %v5285
        %v5388 = vadd.f32 %v4634, %v5288
        %v5389 = vadd.f32 %v4635, %v5293
        %v5390 = vadd.f32 %v4636, %v5296
        %v5391 = vadd.f32 %v4637, %v5301
        %v5392 = vadd.f32 %v4638, %v5304
        %v5393 = vadd.f32 %v4639, %v5309
        %v5394 = vadd.f32 %v4640, %v5312
        %v5395 = vadd.f32 %v4641, %v5317
        %v5396 = vadd.f32 %v4642, %v5320
        %v5397 = vadd.f32 %v4643, %v5325
        %v5398 = vadd.f32 %v4644, %v5328
        %v5399 = vadd.f32 %v4645, %v5333
        %v5400 = vadd.f32 %v4646, %v5336
        %v5401 = vadd.f32 %v4647, %v5341
        %v5402 = vadd.f32 %v4648, %v5344
        %v5403 = vadd.f32 %v4649, %v5349
        %v5404 = vadd.f32 %v4650, %v5352
        %v5405 = vadd.f32 %v4651, %v5357
        %v5406 = vadd.f32 %v4652, %v5360
        %v5407 = vadd.f32 %v4653, %v5365
        %v5408 = vadd.f32 %v4654, %v5368
        %v5409 = vadd.f32 %v4655, %v5373
        %v5410 = vadd.f32 %v4656, %v5376
        %v5411 = vld [vmem:[%s4270] sm:$0xe]
        %v5412 = vld [vmem:[%s4270 + $0xc] sm:$0xe]
        %v5413 = vld [vmem:[%s4270 + $0x18] sm:$0xe]
        %v5414 = vld [vmem:[%s4270 + $0x24] sm:$0xe]
        %v5415 = vld [vmem:[%s4270 + $0x30] sm:$0xe]
        %v5416 = vld [vmem:[%s4270 + $0x3c] sm:$0xe]
        %v5417 = vld [vmem:[%s4270 + $0x48] sm:$0xe]
        %v5418 = vld [vmem:[%s4270 + $0x54] sm:$0xe]
        %v5419 = vld [vmem:[%s4270 + $0x60] sm:$0xe]
        %v5420 = vld [vmem:[%s4270 + $0x6c] sm:$0xe]
        %v5421 = vld [vmem:[%s4270 + $0x78] sm:$0xe]
        %v5422 = vld [vmem:[%s4270 + $0x84] sm:$0xe]
        %v5423 = vld [vmem:[%s4270 + $0x90] sm:$0xe]
        %v5424 = vld [vmem:[%s4270 + $0x9c] sm:$0xe]
        %v5425 = vld [vmem:[%s4270 + $0xa8] sm:$0xe]
        %v5426 = vld [vmem:[%s4270 + $0xb4] sm:$0xe]
        %v5475 = vrot.slane %v5411, 5
        %v5476 = vrot.slane %v5475, 4
        %v5477 = vrot.slane %v4658, 5
        %v5478 = vsel %vm2197, %v5476, %v5477
        %v5479 = vrot.slane %v5477, 4
        %v5480 = vrot.slane %v4659, 5
        %v5481 = vsel %vm2197, %v5479, %v5480
        %v5482 = vrot.slane %v5412, 5
        %v5483 = vrot.slane %v5482, 4
        %v5484 = vrot.slane %v4661, 5
        %v5485 = vsel %vm2197, %v5483, %v5484
        %v5486 = vrot.slane %v5484, 4
        %v5487 = vrot.slane %v4662, 5
        %v5488 = vsel %vm2197, %v5486, %v5487
        %v5489 = vrot.slane %v5413, 5
        %v5490 = vrot.slane %v5489, 4
        %v5491 = vrot.slane %v4664, 5
        %v5492 = vsel %vm2197, %v5490, %v5491
        %v5493 = vrot.slane %v5491, 4
        %v5494 = vrot.slane %v4665, 5
        %v5495 = vsel %vm2197, %v5493, %v5494
        %v5496 = vrot.slane %v5414, 5
        %v5497 = vrot.slane %v5496, 4
        %v5498 = vrot.slane %v4667, 5
        %v5499 = vsel %vm2197, %v5497, %v5498
        %v5500 = vrot.slane %v5498, 4
        %v5501 = vrot.slane %v4668, 5
        %v5502 = vsel %vm2197, %v5500, %v5501
        %v5503 = vrot.slane %v5415, 5
        %v5504 = vrot.slane %v5503, 4
        %v5505 = vrot.slane %v4670, 5
        %v5506 = vsel %vm2197, %v5504, %v5505
        %v5507 = vrot.slane %v5505, 4
        %v5508 = vrot.slane %v4671, 5
        %v5509 = vsel %vm2197, %v5507, %v5508
        %v5510 = vrot.slane %v5416, 5
        %v5511 = vrot.slane %v5510, 4
        %v5512 = vrot.slane %v4673, 5
        %v5513 = vsel %vm2197, %v5511, %v5512
        %v5514 = vrot.slane %v5512, 4
        %v5515 = vrot.slane %v4674, 5
        %v5516 = vsel %vm2197, %v5514, %v5515
        %v5517 = vrot.slane %v5417, 5
        %v5518 = vrot.slane %v5517, 4
        %v5519 = vrot.slane %v4676, 5
        %v5520 = vsel %vm2197, %v5518, %v5519
        %v5521 = vrot.slane %v5519, 4
        %v5522 = vrot.slane %v4677, 5
        %v5523 = vsel %vm2197, %v5521, %v5522
        %v5524 = vrot.slane %v5418, 5
        %v5525 = vrot.slane %v5524, 4
        %v5526 = vrot.slane %v4679, 5
        %v5527 = vsel %vm2197, %v5525, %v5526
        %v5528 = vrot.slane %v5526, 4
        %v5529 = vrot.slane %v4680, 5
        %v5530 = vsel %vm2197, %v5528, %v5529
        %v5531 = vrot.slane %v5419, 5
        %v5532 = vrot.slane %v5531, 4
        %v5533 = vrot.slane %v4682, 5
        %v5534 = vsel %vm2197, %v5532, %v5533
        %v5535 = vrot.slane %v5533, 4
        %v5536 = vrot.slane %v4683, 5
        %v5537 = vsel %vm2197, %v5535, %v5536
        %v5538 = vrot.slane %v5420, 5
        %v5539 = vrot.slane %v5538, 4
        %v5540 = vrot.slane %v4685, 5
        %v5541 = vsel %vm2197, %v5539, %v5540
        %v5542 = vrot.slane %v5540, 4
        %v5543 = vrot.slane %v4686, 5
        %v5544 = vsel %vm2197, %v5542, %v5543
        %v5545 = vrot.slane %v5421, 5
        %v5546 = vrot.slane %v5545, 4
        %v5547 = vrot.slane %v4688, 5
        %v5548 = vsel %vm2197, %v5546, %v5547
        %v5549 = vrot.slane %v5547, 4
        %v5550 = vrot.slane %v4689, 5
        %v5551 = vsel %vm2197, %v5549, %v5550
        %v5552 = vrot.slane %v5422, 5
        %v5553 = vrot.slane %v5552, 4
        %v5554 = vrot.slane %v4691, 5
        %v5555 = vsel %vm2197, %v5553, %v5554
        %v5556 = vrot.slane %v5554, 4
        %v5557 = vrot.slane %v4692, 5
        %v5558 = vsel %vm2197, %v5556, %v5557
        %v5559 = vrot.slane %v5423, 5
        %v5560 = vrot.slane %v5559, 4
        %v5561 = vrot.slane %v4694, 5
        %v5562 = vsel %vm2197, %v5560, %v5561
        %v5563 = vrot.slane %v5561, 4
        %v5564 = vrot.slane %v4695, 5
        %v5565 = vsel %vm2197, %v5563, %v5564
        %v5566 = vrot.slane %v5424, 5
        %v5567 = vrot.slane %v5566, 4
        %v5568 = vrot.slane %v4697, 5
        %v5569 = vsel %vm2197, %v5567, %v5568
        %v5570 = vrot.slane %v5568, 4
        %v5571 = vrot.slane %v4698, 5
        %v5572 = vsel %vm2197, %v5570, %v5571
        %v5573 = vrot.slane %v5425, 5
        %v5574 = vrot.slane %v5573, 4
        %v5575 = vrot.slane %v4700, 5
        %v5576 = vsel %vm2197, %v5574, %v5575
        %v5577 = vrot.slane %v5575, 4
        %v5578 = vrot.slane %v4701, 5
        %v5579 = vsel %vm2197, %v5577, %v5578
        %v5580 = vrot.slane %v5426, 5
        %v5581 = vrot.slane %v5580, 4
        %v5582 = vrot.slane %v4703, 5
        %v5583 = vsel %vm2197, %v5581, %v5582
        %v5584 = vrot.slane %v5582, 4
        %v5585 = vrot.slane %v4704, 5
        %v5586 = vsel %vm2197, %v5584, %v5585
        %s5587 = scalar_lea.vmem [#allocation9], 512
        %v5588 = vld [vmem:[%s5587] sm:$0xf]
        %v5589 = vld [vmem:[%s5587 + $0x4] sm:$0xf]
        %v5590 = vld [vmem:[%s5587 + $0x8] sm:$0xf]
        %v5591 = vld [vmem:[%s5587 + $0xc] sm:$0xf]
        %v5592 = vld [vmem:[%s5587 + $0x10] sm:$0xf]
        %v5593 = vld [vmem:[%s5587 + $0x14] sm:$0xf]
        %v5594 = vld [vmem:[%s5587 + $0x18] sm:$0xf]
        %v5595 = vld [vmem:[%s5587 + $0x1c] sm:$0xf]
        %v5596 = vld [vmem:[%s5587 + $0x20] sm:$0xf]
        %v5597 = vld [vmem:[%s5587 + $0x24] sm:$0xf]
        %v5598 = vld [vmem:[%s5587 + $0x28] sm:$0xf]
        %v5599 = vld [vmem:[%s5587 + $0x2c] sm:$0xf]
        %v5600 = vld [vmem:[%s5587 + $0x30] sm:$0xf]
        %v5601 = vld [vmem:[%s5587 + $0x34] sm:$0xf]
        %v5602 = vld [vmem:[%s5587 + $0x38] sm:$0xf]
        %v5603 = vld [vmem:[%s5587 + $0x3c] sm:$0xf]
        %v5604 = vunpack.c.l.b16 %v5478
        %v5605 = vunpack.c.l.b16 %v5481
        %v5606 = vunpack.c.l.b16 %v5485
        %v5607 = vunpack.c.l.b16 %v5488
        %v5608 = vunpack.c.l.b16 %v5492
        %v5609 = vunpack.c.l.b16 %v5495
        %v5610 = vunpack.c.l.b16 %v5499
        %v5611 = vunpack.c.l.b16 %v5502
        %v5612 = vunpack.c.l.b16 %v5506
        %v5613 = vunpack.c.l.b16 %v5509
        %v5614 = vunpack.c.l.b16 %v5513
        %v5615 = vunpack.c.l.b16 %v5516
        %v5616 = vunpack.c.l.b16 %v5520
        %v5617 = vunpack.c.l.b16 %v5523
        %v5618 = vunpack.c.l.b16 %v5527
        %v5619 = vunpack.c.l.b16 %v5530
        %v5620 = vunpack.c.l.b16 %v5534
        %v5621 = vunpack.c.l.b16 %v5537
        %v5622 = vunpack.c.l.b16 %v5541
        %v5623 = vunpack.c.l.b16 %v5544
        %v5624 = vunpack.c.l.b16 %v5548
        %v5625 = vunpack.c.l.b16 %v5551
        %v5626 = vunpack.c.l.b16 %v5555
        %v5627 = vunpack.c.l.b16 %v5558
        %v5628 = vunpack.c.l.b16 %v5562
        %v5629 = vunpack.c.l.b16 %v5565
        %v5630 = vunpack.c.l.b16 %v5569
        %v5631 = vunpack.c.l.b16 %v5572
        %v5632 = vunpack.c.l.b16 %v5576
        %v5633 = vunpack.c.l.b16 %v5579
        %v5634 = vunpack.c.l.b16 %v5583
        %v5635 = vunpack.c.l.b16 %v5586
        %v5636 = vpack.c.b16 %v5605, %v5604
        %v5637 = vpack.c.b16 %v5607, %v5606
        %v5638 = vpack.c.b16 %v5609, %v5608
        %v5639 = vpack.c.b16 %v5611, %v5610
        %v5640 = vpack.c.b16 %v5613, %v5612
        %v5641 = vpack.c.b16 %v5615, %v5614
        %v5642 = vpack.c.b16 %v5617, %v5616
        %v5643 = vpack.c.b16 %v5619, %v5618
        %v5644 = vpack.c.b16 %v5621, %v5620
        %v5645 = vpack.c.b16 %v5623, %v5622
        %v5646 = vpack.c.b16 %v5625, %v5624
        %v5647 = vpack.c.b16 %v5627, %v5626
        %v5648 = vpack.c.b16 %v5629, %v5628
        %v5649 = vpack.c.b16 %v5631, %v5630
        %v5650 = vpack.c.b16 %v5633, %v5632
        %v5651 = vpack.c.b16 %v5635, %v5634
        %v5684 = vunpack.c.l.b16 %v5588
        %v5685 = vunpack.c.l.b16 %v5589
        %v5686 = vunpack.c.l.b16 %v5590
        %v5687 = vunpack.c.l.b16 %v5591
        %v5688 = vunpack.c.l.b16 %v5592
        %v5689 = vunpack.c.l.b16 %v5593
        %v5690 = vunpack.c.l.b16 %v5594
        %v5691 = vunpack.c.l.b16 %v5595
        %v5692 = vunpack.c.l.b16 %v5596
        %v5693 = vunpack.c.l.b16 %v5597
        %v5694 = vunpack.c.l.b16 %v5598
        %v5695 = vunpack.c.l.b16 %v5599
        %v5696 = vunpack.c.l.b16 %v5600
        %v5697 = vunpack.c.l.b16 %v5601
        %v5698 = vunpack.c.l.b16 %v5602
        %v5699 = vunpack.c.l.b16 %v5603
        %v5700 = vpack.c.b16 %v5685, %v5684
        %v5701 = vpack.c.b16 %v5687, %v5686
        %v5702 = vpack.c.b16 %v5689, %v5688
        %v5703 = vpack.c.b16 %v5691, %v5690
        %v5704 = vpack.c.b16 %v5693, %v5692
        %v5705 = vpack.c.b16 %v5695, %v5694
        %v5706 = vpack.c.b16 %v5697, %v5696
        %v5707 = vpack.c.b16 %v5699, %v5698
        %5716 = vmatprep.subr.bf16.mxu0 0
        %5717 = vmatpush1.bf16.msra.mxu0 %v5700
        %5718 = vmatprep.subr.bf16.mxu0 0
        %5719 = vmatpush1.bf16.msra.mxu0 %v5701
        %5720 = vmatprep.subr.bf16.mxu0 0
        %5721 = vmatpush1.bf16.msra.mxu0 %v5702
        %5722 = vmatprep.subr.bf16.mxu0 0
        %5723 = vmatpush1.bf16.msra.mxu0 %v5703
        %5724 = vmatprep.subr.bf16.mxu0 0
        %5725 = vmatpush1.bf16.msra.mxu0 %v5704
        %5726 = vmatprep.subr.bf16.mxu0 0
        %5727 = vmatpush1.bf16.msra.mxu0 %v5705
        %5728 = vmatprep.subr.bf16.mxu0 0
        %5729 = vmatpush1.bf16.msra.mxu0 %v5706
        %5730 = vmatprep.subr.bf16.mxu0 0
        %5731 = vmatpush1.bf16.msra.mxu0 %v5707
        %5732 = vmatprep.subr.bf16.mxu0 0
        %5733 = vmatpush1.bf16.msra.mxu0 0
        %5734 = vmatprep.subr.bf16.mxu0 0
        %5735 = vmatpush1.bf16.msra.mxu0 0
        %5736 = vmatprep.subr.bf16.mxu0 0
        %5737 = vmatpush1.bf16.msra.mxu0 0
        %5738 = vmatprep.subr.bf16.mxu0 0
        %5739 = vmatpush1.bf16.msra.mxu0 0
        %5740 = vmatprep.subr.bf16.mxu0 0
        %5741 = vmatpush1.bf16.msra.mxu0 0
        %5742 = vmatprep.subr.bf16.mxu0 0
        %5743 = vmatpush1.bf16.msra.mxu0 0
        %5744 = vmatprep.subr.bf16.mxu0 0
        %5745 = vmatpush1.bf16.msra.mxu0 0
        %5746 = vmatprep.subr.bf16.mxu0 0
        %5747 = vmatpush1.bf16.msra.mxu0 0
        %5748 = vmatprep.mubr.bf16.mxu0 0
        %5749 = vmatmul.mubr.bf16.gmra.mrb[0].mxu0 %v5636
        %v5750 = vpop.f32.mrb[0].mxu0
        %v5751 = vadd.f32 0.0, %v5750
        %v5752 = vpop.f32.mrb[0].mxu0
        %v5753 = vpop.f32.mrb[0].mxu0
        %v5754 = vadd.f32 0.0, %v5753
        %v5755 = vpop.f32.mrb[0].mxu0
        %5756 = vmatprep.mubr.bf16.mxu0 0
        %5757 = vmatmul.mubr.bf16.gmra.mrb[0].mxu0 %v5637
        %v5758 = vpop.f32.mrb[0].mxu0
        %v5759 = vadd.f32 0.0, %v5758
        %v5760 = vpop.f32.mrb[0].mxu0
        %v5761 = vpop.f32.mrb[0].mxu0
        %v5762 = vadd.f32 0.0, %v5761
        %v5763 = vpop.f32.mrb[0].mxu0
        %5764 = vmatprep.mubr.bf16.mxu0 0
        %5765 = vmatmul.mubr.bf16.gmra.mrb[0].mxu0 %v5638
        %v5766 = vpop.f32.mrb[0].mxu0
        %v5767 = vadd.f32 0.0, %v5766
        %v5768 = vpop.f32.mrb[0].mxu0
        %v5769 = vpop.f32.mrb[0].mxu0
        %v5770 = vadd.f32 0.0, %v5769
        %v5771 = vpop.f32.mrb[0].mxu0
        %5772 = vmatprep.mubr.bf16.mxu0 0
        %5773 = vmatmul.mubr.bf16.gmra.mrb[0].mxu0 %v5639
        %v5774 = vpop.f32.mrb[0].mxu0
        %v5775 = vadd.f32 0.0, %v5774
        %v5776 = vpop.f32.mrb[0].mxu0
        %v5777 = vpop.f32.mrb[0].mxu0
        %v5778 = vadd.f32 0.0, %v5777
        %v5779 = vpop.f32.mrb[0].mxu0
        %5780 = vmatprep.mubr.bf16.mxu0 0
        %5781 = vmatmul.mubr.bf16.gmra.mrb[0].mxu0 %v5640
        %v5782 = vpop.f32.mrb[0].mxu0
        %v5783 = vadd.f32 0.0, %v5782
        %v5784 = vpop.f32.mrb[0].mxu0
        %v5785 = vpop.f32.mrb[0].mxu0
        %v5786 = vadd.f32 0.0, %v5785
        %v5787 = vpop.f32.mrb[0].mxu0
        %5788 = vmatprep.mubr.bf16.mxu0 0
        %5789 = vmatmul.mubr.bf16.gmra.mrb[0].mxu0 %v5641
        %v5790 = vpop.f32.mrb[0].mxu0
        %v5791 = vadd.f32 0.0, %v5790
        %v5792 = vpop.f32.mrb[0].mxu0
        %v5793 = vpop.f32.mrb[0].mxu0
        %v5794 = vadd.f32 0.0, %v5793
        %v5795 = vpop.f32.mrb[0].mxu0
        %5796 = vmatprep.mubr.bf16.mxu0 0
        %5797 = vmatmul.mubr.bf16.gmra.mrb[0].mxu0 %v5642
        %v5798 = vpop.f32.mrb[0].mxu0
        %v5799 = vadd.f32 0.0, %v5798
        %v5800 = vpop.f32.mrb[0].mxu0
        %v5801 = vpop.f32.mrb[0].mxu0
        %v5802 = vadd.f32 0.0, %v5801
        %v5803 = vpop.f32.mrb[0].mxu0
        %5804 = vmatprep.mubr.bf16.mxu0 0
        %5805 = vmatmul.mubr.bf16.gmra.mrb[0].mxu0 %v5643
        %v5806 = vpop.f32.mrb[0].mxu0
        %v5807 = vadd.f32 0.0, %v5806
        %v5808 = vpop.f32.mrb[0].mxu0
        %v5809 = vpop.f32.mrb[0].mxu0
        %v5810 = vadd.f32 0.0, %v5809
        %v5811 = vpop.f32.mrb[0].mxu0
        %5812 = vmatprep.mubr.bf16.mxu0 0
        %5813 = vmatmul.mubr.bf16.gmra.mrb[0].mxu0 %v5644
        %v5814 = vpop.f32.mrb[0].mxu0
        %v5815 = vadd.f32 0.0, %v5814
        %v5816 = vpop.f32.mrb[0].mxu0
        %v5817 = vpop.f32.mrb[0].mxu0
        %v5818 = vadd.f32 0.0, %v5817
        %v5819 = vpop.f32.mrb[0].mxu0
        %5820 = vmatprep.mubr.bf16.mxu0 0
        %5821 = vmatmul.mubr.bf16.gmra.mrb[0].mxu0 %v5645
        %v5822 = vpop.f32.mrb[0].mxu0
        %v5823 = vadd.f32 0.0, %v5822
        %v5824 = vpop.f32.mrb[0].mxu0
        %v5825 = vpop.f32.mrb[0].mxu0
        %v5826 = vadd.f32 0.0, %v5825
        %v5827 = vpop.f32.mrb[0].mxu0
        %5828 = vmatprep.mubr.bf16.mxu0 0
        %5829 = vmatmul.mubr.bf16.gmra.mrb[0].mxu0 %v5646
        %v5830 = vpop.f32.mrb[0].mxu0
        %v5831 = vadd.f32 0.0, %v5830
        %v5832 = vpop.f32.mrb[0].mxu0
        %v5833 = vpop.f32.mrb[0].mxu0
        %v5834 = vadd.f32 0.0, %v5833
        %v5835 = vpop.f32.mrb[0].mxu0
        %5836 = vmatprep.mubr.bf16.mxu0 0
        %5837 = vmatmul.mubr.bf16.gmra.mrb[0].mxu0 %v5647
        %v5838 = vpop.f32.mrb[0].mxu0
        %v5839 = vadd.f32 0.0, %v5838
        %v5840 = vpop.f32.mrb[0].mxu0
        %v5841 = vpop.f32.mrb[0].mxu0
        %v5842 = vadd.f32 0.0, %v5841
        %v5843 = vpop.f32.mrb[0].mxu0
        %5844 = vmatprep.mubr.bf16.mxu0 0
        %5845 = vmatmul.mubr.bf16.gmra.mrb[0].mxu0 %v5648
        %v5846 = vpop.f32.mrb[0].mxu0
        %v5847 = vadd.f32 0.0, %v5846
        %v5848 = vpop.f32.mrb[0].mxu0
        %v5849 = vpop.f32.mrb[0].mxu0
        %v5850 = vadd.f32 0.0, %v5849
        %v5851 = vpop.f32.mrb[0].mxu0
        %5852 = vmatprep.mubr.bf16.mxu0 0
        %5853 = vmatmul.mubr.bf16.gmra.mrb[0].mxu0 %v5649
        %v5854 = vpop.f32.mrb[0].mxu0
        %v5855 = vadd.f32 0.0, %v5854
        %v5856 = vpop.f32.mrb[0].mxu0
        %v5857 = vpop.f32.mrb[0].mxu0
        %v5858 = vadd.f32 0.0, %v5857
        %v5859 = vpop.f32.mrb[0].mxu0
        %5860 = vmatprep.mubr.bf16.mxu0 0
        %5861 = vmatmul.mubr.bf16.gmra.mrb[0].mxu0 %v5650
        %v5862 = vpop.f32.mrb[0].mxu0
        %v5863 = vadd.f32 0.0, %v5862
        %v5864 = vpop.f32.mrb[0].mxu0
        %v5865 = vpop.f32.mrb[0].mxu0
        %v5866 = vadd.f32 0.0, %v5865
        %v5867 = vpop.f32.mrb[0].mxu0
        %5868 = vmatprep.mubr.bf16.mxu0 0
        %5869 = vmatmul.mubr.bf16.gmra.mrb[0].mxu0 %v5651
        %v5870 = vpop.f32.mrb[0].mxu0
        %v5871 = vadd.f32 0.0, %v5870
        %v5872 = vpop.f32.mrb[0].mxu0
        %v5873 = vpop.f32.mrb[0].mxu0
        %v5874 = vadd.f32 0.0, %v5873
        %v5875 = vpop.f32.mrb[0].mxu0
        %5876 = vdwg.mxu0
        %v5877 = vadd.f32 %v5379, %v5751
        %v5878 = vadd.f32 %v5380, %v5754
        %v5879 = vadd.f32 %v5381, %v5759
        %v5880 = vadd.f32 %v5382, %v5762
        %v5881 = vadd.f32 %v5383, %v5767
        %v5882 = vadd.f32 %v5384, %v5770
        %v5883 = vadd.f32 %v5385, %v5775
        %v5884 = vadd.f32 %v5386, %v5778
        %v5885 = vadd.f32 %v5387, %v5783
        %v5886 = vadd.f32 %v5388, %v5786
        %v5887 = vadd.f32 %v5389, %v5791
        %v5888 = vadd.f32 %v5390, %v5794
        %v5889 = vadd.f32 %v5391, %v5799
        %v5890 = vadd.f32 %v5392, %v5802
        %v5891 = vadd.f32 %v5393, %v5807
        %v5892 = vadd.f32 %v5394, %v5810
        %v5893 = vadd.f32 %v5395, %v5815
        %v5894 = vadd.f32 %v5396, %v5818
        %v5895 = vadd.f32 %v5397, %v5823
        %v5896 = vadd.f32 %v5398, %v5826
        %v5897 = vadd.f32 %v5399, %v5831
        %v5898 = vadd.f32 %v5400, %v5834
        %v5899 = vadd.f32 %v5401, %v5839
        %v5900 = vadd.f32 %v5402, %v5842
        %v5901 = vadd.f32 %v5403, %v5847
        %v5902 = vadd.f32 %v5404, %v5850
        %v5903 = vadd.f32 %v5405, %v5855
        %v5904 = vadd.f32 %v5406, %v5858
        %v5905 = vadd.f32 %v5407, %v5863
        %v5906 = vadd.f32 %v5408, %v5866
        %v5907 = vadd.f32 %v5409, %v5871
        %v5908 = vadd.f32 %v5410, %v5874
        %v5909 = vld [vmem:[%s4] sm:$0x1]
        %v5911 = vlaneseq
        %v5912 = vshrl.u32 %v5911, 7
        %v5913 = vsub.s32 0, %v5912
        %v5914 = vrot.slane %v5909, %v5913
        %v5916 = vmul.f32 %v5877, %v5914
        %v5917 = vmul.f32 %v5878, %v5914
        %v5918 = vmul.f32 %v5879, %v5914
        %v5919 = vmul.f32 %v5880, %v5914
        %v5920 = vmul.f32 %v5881, %v5914
        %v5921 = vmul.f32 %v5882, %v5914
        %v5922 = vmul.f32 %v5883, %v5914
        %v5923 = vmul.f32 %v5884, %v5914
        %v5924 = vmul.f32 %v5885, %v5914
        %v5925 = vmul.f32 %v5886, %v5914
        %v5926 = vmul.f32 %v5887, %v5914
        %v5927 = vmul.f32 %v5888, %v5914
        %v5928 = vmul.f32 %v5889, %v5914
        %v5929 = vmul.f32 %v5890, %v5914
        %v5930 = vmul.f32 %v5891, %v5914
        %v5931 = vmul.f32 %v5892, %v5914
        %v5932 = vmul.f32 %v5893, %v5914
        %v5933 = vmul.f32 %v5894, %v5914
        %v5934 = vmul.f32 %v5895, %v5914
        %v5935 = vmul.f32 %v5896, %v5914
        %v5936 = vmul.f32 %v5897, %v5914
        %v5937 = vmul.f32 %v5898, %v5914
        %v5938 = vmul.f32 %v5899, %v5914
        %v5939 = vmul.f32 %v5900, %v5914
        %v5940 = vmul.f32 %v5901, %v5914
        %v5941 = vmul.f32 %v5902, %v5914
        %v5942 = vmul.f32 %v5903, %v5914
        %v5943 = vmul.f32 %v5904, %v5914
        %v5944 = vmul.f32 %v5905, %v5914
        %v5945 = vmul.f32 %v5906, %v5914
        %v5946 = vmul.f32 %v5907, %v5914
        %v5947 = vmul.f32 %v5908, %v5914
        %v5948 = vld [vmem:[%s5] sm:$0x1]
        %v5950 = vlaneseq
        %v5951 = vshrl.u32 %v5950, 7
        %v5952 = vsub.s32 0, %v5951
        %v5953 = vrot.slane %v5948, %v5952
        %v5955 = vadd.f32 %v5916, %v5953
        %v5956 = vadd.f32 %v5917, %v5953
        %v5957 = vadd.f32 %v5918, %v5953
        %v5958 = vadd.f32 %v5919, %v5953
        %v5959 = vadd.f32 %v5920, %v5953
        %v5960 = vadd.f32 %v5921, %v5953
        %v5961 = vadd.f32 %v5922, %v5953
        %v5962 = vadd.f32 %v5923, %v5953
        %v5963 = vadd.f32 %v5924, %v5953
        %v5964 = vadd.f32 %v5925, %v5953
        %v5965 = vadd.f32 %v5926, %v5953
        %v5966 = vadd.f32 %v5927, %v5953
        %v5967 = vadd.f32 %v5928, %v5953
        %v5968 = vadd.f32 %v5929, %v5953
        %v5969 = vadd.f32 %v5930, %v5953
        %v5970 = vadd.f32 %v5931, %v5953
        %v5971 = vadd.f32 %v5932, %v5953
        %v5972 = vadd.f32 %v5933, %v5953
        %v5973 = vadd.f32 %v5934, %v5953
        %v5974 = vadd.f32 %v5935, %v5953
        %v5975 = vadd.f32 %v5936, %v5953
        %v5976 = vadd.f32 %v5937, %v5953
        %v5977 = vadd.f32 %v5938, %v5953
        %v5978 = vadd.f32 %v5939, %v5953
        %v5979 = vadd.f32 %v5940, %v5953
        %v5980 = vadd.f32 %v5941, %v5953
        %v5981 = vadd.f32 %v5942, %v5953
        %v5982 = vadd.f32 %v5943, %v5953
        %v5983 = vadd.f32 %v5944, %v5953
        %v5984 = vadd.f32 %v5945, %v5953
        %v5985 = vadd.f32 %v5946, %v5953
        %v5986 = vadd.f32 %v5947, %v5953
        %v5987 = vmax.f32 %v5955, 0.0
        %v5988 = vmax.f32 %v5956, 0.0
        %v5989 = vmax.f32 %v5957, 0.0
        %v5990 = vmax.f32 %v5958, 0.0
        %v5991 = vmax.f32 %v5959, 0.0
        %v5992 = vmax.f32 %v5960, 0.0
        %v5993 = vmax.f32 %v5961, 0.0
        %v5994 = vmax.f32 %v5962, 0.0
        %v5995 = vmax.f32 %v5963, 0.0
        %v5996 = vmax.f32 %v5964, 0.0
        %v5997 = vmax.f32 %v5965, 0.0
        %v5998 = vmax.f32 %v5966, 0.0
        %v5999 = vmax.f32 %v5967, 0.0
        %v6000 = vmax.f32 %v5968, 0.0
        %v6001 = vmax.f32 %v5969, 0.0
        %v6002 = vmax.f32 %v5970, 0.0
        %v6003 = vmax.f32 %v5971, 0.0
        %v6004 = vmax.f32 %v5972, 0.0
        %v6005 = vmax.f32 %v5973, 0.0
        %v6006 = vmax.f32 %v5974, 0.0
        %v6007 = vmax.f32 %v5975, 0.0
        %v6008 = vmax.f32 %v5976, 0.0
        %v6009 = vmax.f32 %v5977, 0.0
        %v6010 = vmax.f32 %v5978, 0.0
        %v6011 = vmax.f32 %v5979, 0.0
        %v6012 = vmax.f32 %v5980, 0.0
        %v6013 = vmax.f32 %v5981, 0.0
        %v6014 = vmax.f32 %v5982, 0.0
        %v6015 = vmax.f32 %v5983, 0.0
        %v6016 = vmax.f32 %v5984, 0.0
        %v6017 = vmax.f32 %v5985, 0.0
        %v6018 = vmax.f32 %v5986, 0.0
        %v6019 = vmax.f32 %v5987, %v5989
        %v6020 = vmax.f32 %v5988, %v5990
        %v6021 = vmax.f32 %v5991, %v5993
        %v6022 = vmax.f32 %v5992, %v5994
        %v6023 = vmax.f32 %v5995, %v5997
        %v6024 = vmax.f32 %v5996, %v5998
        %v6025 = vmax.f32 %v5999, %v6001
        %v6026 = vmax.f32 %v6000, %v6002
        %v6027 = vmax.f32 %v6003, %v6005
        %v6028 = vmax.f32 %v6004, %v6006
        %v6029 = vmax.f32 %v6007, %v6009
        %v6030 = vmax.f32 %v6008, %v6010
        %v6031 = vmax.f32 %v6011, %v6013
        %v6032 = vmax.f32 %v6012, %v6014
        %v6033 = vmax.f32 %v6015, %v6017
        %v6034 = vmax.f32 %v6016, %v6018
        %v6036 = vunpack.c.l.s4 1966171168
        %v6037 = vunpack.c.0.s8 %v6036
        %v6038 = vlaneseq
        %v6039 = vshrl.u32 %v6038, 7
        %v6040 = vsub.s32 %v6037, %v6039
        %v6041 = vrot.slane %v6019, %v6040
        %v6043 = vunpack.c.l.s4 1966171168
        %v6044 = vunpack.c.0.s8 %v6043
        %v6045 = vlaneseq
        %v6046 = vshrl.u32 %v6045, 7
        %v6047 = vsub.s32 %v6044, %v6046
        %v6048 = vrot.slane %v6020, %v6047
        %v6050 = vunpack.c.l.s4 1966171168
        %v6051 = vunpack.c.0.s8 %v6050
        %v6052 = vlaneseq
        %v6053 = vshrl.u32 %v6052, 7
        %v6054 = vsub.s32 %v6051, %v6053
        %v6055 = vrot.slane %v6021, %v6054
        %v6057 = vunpack.c.l.s4 1966171168
        %v6058 = vunpack.c.0.s8 %v6057
        %v6059 = vlaneseq
        %v6060 = vshrl.u32 %v6059, 7
        %v6061 = vsub.s32 %v6058, %v6060
        %v6062 = vrot.slane %v6022, %v6061
        %v6064 = vunpack.c.l.s4 1966171168
        %v6065 = vunpack.c.0.s8 %v6064
        %v6066 = vlaneseq
        %v6067 = vshrl.u32 %v6066, 7
        %v6068 = vsub.s32 %v6065, %v6067
        %v6069 = vrot.slane %v6023, %v6068
        %v6071 = vunpack.c.l.s4 1966171168
        %v6072 = vunpack.c.0.s8 %v6071
        %v6073 = vlaneseq
        %v6074 = vshrl.u32 %v6073, 7
        %v6075 = vsub.s32 %v6072, %v6074
        %v6076 = vrot.slane %v6024, %v6075
        %v6078 = vunpack.c.l.s4 1966171168
        %v6079 = vunpack.c.0.s8 %v6078
        %v6080 = vlaneseq
        %v6081 = vshrl.u32 %v6080, 7
        %v6082 = vsub.s32 %v6079, %v6081
        %v6083 = vrot.slane %v6025, %v6082
        %v6085 = vunpack.c.l.s4 1966171168
        %v6086 = vunpack.c.0.s8 %v6085
        %v6087 = vlaneseq
        %v6088 = vshrl.u32 %v6087, 7
        %v6089 = vsub.s32 %v6086, %v6088
        %v6090 = vrot.slane %v6026, %v6089
        %v6092 = vunpack.c.l.s4 1966171168
        %v6093 = vunpack.c.0.s8 %v6092
        %v6094 = vlaneseq
        %v6095 = vshrl.u32 %v6094, 7
        %v6096 = vsub.s32 %v6093, %v6095
        %v6097 = vrot.slane %v6027, %v6096
        %v6099 = vunpack.c.l.s4 1966171168
        %v6100 = vunpack.c.0.s8 %v6099
        %v6101 = vlaneseq
        %v6102 = vshrl.u32 %v6101, 7
        %v6103 = vsub.s32 %v6100, %v6102
        %v6104 = vrot.slane %v6028, %v6103
        %v6106 = vunpack.c.l.s4 1966171168
        %v6107 = vunpack.c.0.s8 %v6106
        %v6108 = vlaneseq
        %v6109 = vshrl.u32 %v6108, 7
        %v6110 = vsub.s32 %v6107, %v6109
        %v6111 = vrot.slane %v6029, %v6110
        %v6113 = vunpack.c.l.s4 1966171168
        %v6114 = vunpack.c.0.s8 %v6113
        %v6115 = vlaneseq
        %v6116 = vshrl.u32 %v6115, 7
        %v6117 = vsub.s32 %v6114, %v6116
        %v6118 = vrot.slane %v6030, %v6117
        %v6120 = vunpack.c.l.s4 1966171168
        %v6121 = vunpack.c.0.s8 %v6120
        %v6122 = vlaneseq
        %v6123 = vshrl.u32 %v6122, 7
        %v6124 = vsub.s32 %v6121, %v6123
        %v6125 = vrot.slane %v6031, %v6124
        %v6127 = vunpack.c.l.s4 1966171168
        %v6128 = vunpack.c.0.s8 %v6127
        %v6129 = vlaneseq
        %v6130 = vshrl.u32 %v6129, 7
        %v6131 = vsub.s32 %v6128, %v6130
        %v6132 = vrot.slane %v6032, %v6131
        %v6134 = vunpack.c.l.s4 1966171168
        %v6135 = vunpack.c.0.s8 %v6134
        %v6136 = vlaneseq
        %v6137 = vshrl.u32 %v6136, 7
        %v6138 = vsub.s32 %v6135, %v6137
        %v6139 = vrot.slane %v6033, %v6138
        %v6141 = vunpack.c.l.s4 1966171168
        %v6142 = vunpack.c.0.s8 %v6141
        %v6143 = vlaneseq
        %v6144 = vshrl.u32 %v6143, 7
        %v6145 = vsub.s32 %v6142, %v6144
        %v6146 = vrot.slane %v6034, %v6145
        %v6163 = vrot.slane %v6041, 4
        %v6164 = vrot.slane %v6048, 4
        %v6165 = vrot.slane %v6055, 4
        %v6166 = vrot.slane %v6062, 4
        %v6167 = vrot.slane %v6069, 4
        %v6168 = vrot.slane %v6076, 4
        %v6169 = vrot.slane %v6083, 4
        %v6170 = vrot.slane %v6090, 4
        %v6171 = vrot.slane %v6097, 4
        %v6172 = vrot.slane %v6104, 4
        %v6173 = vrot.slane %v6111, 4
        %v6174 = vrot.slane %v6118, 4
        %v6175 = vrot.slane %v6125, 4
        %v6176 = vrot.slane %v6132, 4
        %v6177 = vrot.slane %v6139, 4
        %v6178 = vrot.slane %v6146, 4
        %v6195 = vmax.f32 %v6041, %v6163
        %v6196 = vmax.f32 %v6048, %v6164
        %v6197 = vmax.f32 %v6055, %v6165
        %v6198 = vmax.f32 %v6062, %v6166
        %v6199 = vmax.f32 %v6069, %v6167
        %v6200 = vmax.f32 %v6076, %v6168
        %v6201 = vmax.f32 %v6083, %v6169
        %v6202 = vmax.f32 %v6090, %v6170
        %v6203 = vmax.f32 %v6097, %v6171
        %v6204 = vmax.f32 %v6104, %v6172
        %v6205 = vmax.f32 %v6111, %v6173
        %v6206 = vmax.f32 %v6118, %v6174
        %v6207 = vmax.f32 %v6125, %v6175
        %v6208 = vmax.f32 %v6132, %v6176
        %v6209 = vmax.f32 %v6139, %v6177
        %v6210 = vmax.f32 %v6146, %v6178
        %v6227 = vcombine.low %v6195, %v6196
        %v6228 = vcombine.low %v6197, %v6198
        %v6229 = vcombine.low %v6199, %v6200
        %v6230 = vcombine.low %v6201, %v6202
        %v6231 = vcombine.low %v6203, %v6204
        %v6232 = vcombine.low %v6205, %v6206
        %v6233 = vcombine.low %v6207, %v6208
        %v6234 = vcombine.low %v6209, %v6210
        %v6243 = vpack.c.bf16 %v6227, %v6227
        %v6244 = vpack.c.bf16 %v6228, %v6228
        %v6245 = vpack.c.bf16 %v6229, %v6229
        %v6246 = vpack.c.bf16 %v6230, %v6230
        %v6247 = vpack.c.bf16 %v6231, %v6231
        %v6248 = vpack.c.bf16 %v6232, %v6232
        %v6249 = vpack.c.bf16 %v6233, %v6233
        %v6250 = vpack.c.bf16 %v6234, %v6234
        %6251 = vst [vmem:[%s412] sm:$0xf] %v6243
        %6252 = vst [vmem:[%s412 + $0x4] sm:$0xf] %v6244
        %6253 = vst [vmem:[%s412 + $0x8] sm:$0xf] %v6245
        %6254 = vst [vmem:[%s412 + $0xc] sm:$0xf] %v6246
        %6255 = vst [vmem:[%s412 + $0x10] sm:$0xf] %v6247
        %6256 = vst [vmem:[%s412 + $0x14] sm:$0xf] %v6248
        %6257 = vst [vmem:[%s412 + $0x18] sm:$0xf] %v6249
        %6258 = vst [vmem:[%s412 + $0x1c] sm:$0xf] %v6250
        %s6259 = sand.u32 %s212, 1
        %s6260 = scalar_lea.sflag [#allocation5], %s6259
        %s6261 = sand.u32 %s212, 1
        %s6262 = smul.addr %s6261, 32
        %s6263 = scalar_lea.vmem [#allocation11], %s6262
        // Predicated region
        $region61: #{tpu_custom_call.1} parent=43 // pred_check
          %p6264 = pneg %p222
        $region62: #{tpu_custom_call.1} parent=43 // pred_check_branch
          %6266 = sbr.rel (%p6264) target = $region64
        $region63: #{tpu_custom_call.1} parent=43 // pred_region
          %s6267 = smul.u32 8, %s32
          %s6269 = ssub.s32 512, 512
          %6270 = vsyncadd %s6260, %s6269
          %s6271 = smul.addr %s31, 8
          %s6272 = sadd.s32 %s6267, %s6271
          %s6273 = smul.addr %s6272, 64
          %s6274 = scalar_lea.hbm %s6, %s6273
          %s6275 = sshll.u32 %s6263, 4
          %s6276 = int_to_ptr.vmem [resolvable:$true] %s6275
          %6281 = dma.vmem_to_hbm [thread:$0]  %s6276, 512, %s6274, %s6260, 64, 64, 4
        $region64: #{tpu_custom_call.1} parent=43 // pred_fallthru
          _
      $region44: #{tpu_custom_call.1} parent=5 // pred_fallthru
        _
      %p6282 = scmp.le.s32.totalorder 2, %s22
      // Predicated region
      $region65: #{tpu_custom_call.1} parent=5 // pred_check
        %p6283 = pneg %p6282
      $region66: #{tpu_custom_call.1} parent=5 // pred_check_branch
        %6285 = sbr.rel (%p6283) target = $region68
      $region67: #{tpu_custom_call.1} parent=5 // pred_region
        %s6286 = ssub.s32 %s22, 2
        // Predicated region
        $region69: #{tpu_custom_call.1} parent=67 // pred_check
          %p6287 = pneg %p228
        $region70: #{tpu_custom_call.1} parent=67 // pred_check_branch
          %6289 = sbr.rel (%p6287) target = $region72
        $region71: #{tpu_custom_call.1} parent=67 // pred_region
          %s6290 = sand.u32 %s213, 1
          %s6291 = scalar_lea.sflag [#allocation5], %s6290
          %s6292 = sand.u32 %s213, 1
          %s6293 = smul.addr %s6292, 32
          %s6294 = scalar_lea.vmem [#allocation11], %s6293
          %6295 = dma.done %s6291, 512
        $region72: #{tpu_custom_call.1} parent=67 // pred_fallthru
          _
      $region68: #{tpu_custom_call.1} parent=5 // pred_fallthru
        _
    $region6: #{tpu_custom_call.1} parent=1 // loop_footer
      %s26 = sadd.s32 1, %s22
    $region7: #{tpu_custom_call.1} parent=1 // loop_footer_branch
      %21 = sbr.rel target = $region3
    $region8: #{tpu_custom_call.1} parent=1 // loop_exit
      _
    %6296 = vsyncpa [#allocation4], 1
    %s6297 = scalar_lea.sflag [#allocation4], 1
    %6298 = vsyncpa %s6297, 1
    %6299 = vsyncpa [#allocation7], 1
    %s6300 = scalar_lea.sflag [#allocation7], 1
    %6301 = vsyncpa %s6300, 1
    %6302 = vsyncpa [#allocation10], 1
    %6303 = vsyncpa [#allocation5], 1
    %s6304 = scalar_lea.sflag [#allocation5], 1
    %6305 = vsyncpa %s6304, 1

</llo_original>
